<compile_context>
chip_gen: v5e
topology: v5e:2x2
jax: 0.10.0
libtpu: 0.0.40
codegen_flags: <defaults>
</compile_context>

<pallas_src>
import jax
import jax.numpy as jnp
from jax.experimental import pallas as pl
from jax.experimental.pallas import tpu as pltpu

# Module hyper-parameters (from the PyTorch spec)
D1_dim = 512
D2_dim = 128
D3_dim = 1
data_dim = 2000
label_dim = 2
noise_dim = 100

LAT_PAD = 128            # noise_dim padded to the 128-lane boundary
VALID_COL = noise_dim    # lane of the packed output that carries `validity`
PACK_ROWS = 5            # rows of the packed small-parameter tile


def _leaky(z):
    # LeakyReLU(negative_slope=0.2)
    return jnp.where(z >= 0, z, 0.2 * z)


def discriminator_kernel(inp_ref, lab_ref,
                         w1a_ref, w2_ref, w3_ref, w4_ref,
                         pk_ref, out_ref):
    """One batch tile of the whole forward pass.

    inp_ref: [TB, 2000]   lab_ref: [TB, 2]
    pk_ref : [5, 512]     packed small parameters (see layout below)
    out_ref: [TB, 128]    cols 0..99 = latent, col 100 = validity
    """
    x = inp_ref[...].astype(jnp.bfloat16)      # no-op if caller passed bf16
    lab = lab_ref[...].astype(jnp.float32)

    # Packed small-parameter layout (f32, resident):
    #   rows 0-1 : W1b  (label part of layer-1 weight, [2, 512])
    #   row  2   : b1   [512]
    #   row  3   : [ b2(128) | b3(128) | b4_pad(128) | w5_row_pad(128) ]
    #   row  4   : b5 at lane 0
    w1b0 = pk_ref[0:1, :]
    w1b1 = pk_ref[1:2, :]
    b1 = pk_ref[2:3, :]
    b2 = pk_ref[3:4, 0:128]
    b3 = pk_ref[3:4, 128:256]
    b4 = pk_ref[3:4, 256:384]
    w5 = pk_ref[3:4, 384:512]
    b5 = pk_ref[4:5, 0:1]

    # block 1: Linear(2002 -> 512) = x @ W1a (MXU)  +  label part as two VPU
    # broadcast-FMAs (a K=2 matmul would be an almost-empty MXU pass).
    h = jnp.dot(x, w1a_ref[...], preferred_element_type=jnp.float32)
    h = h + lab[:, 0:1] * w1b0 + lab[:, 1:2] * w1b1 + b1
    h = _leaky(h).astype(jnp.bfloat16)

    # block 2: Linear(512 -> 128) + LeakyReLU
    h = _leaky(jnp.dot(h, w2_ref[...], preferred_element_type=jnp.float32)
               + b2).astype(jnp.bfloat16)
    # block 3: Linear(128 -> 128) + LeakyReLU
    h = _leaky(jnp.dot(h, w3_ref[...], preferred_element_type=jnp.float32)
               + b3).astype(jnp.bfloat16)
    # block 4: Linear(128 -> 100, padded to 128) + LeakyReLU -> latent
    # (padded weight columns / bias entries are zero, so padded lanes are 0)
    latent = _leaky(jnp.dot(h, w4_ref[...], preferred_element_type=jnp.float32)
                    + b4)                                   # (TB, 128) f32

    # fc head: LeakyReLU then Linear(100 -> 1).  Note the second LeakyReLU is
    # intentional — the PyTorch module applies LeakyReLU at the end of
    # `model` (-> latent) AND again at the start of `fc` before the Linear.
    # Done as a VPU multiply + lane reduce (no 1-column MXU pass, no (B,1)
    # masked store).
    v = jnp.sum(_leaky(latent) * w5, axis=-1, keepdims=True) + b5   # (TB, 1)

    # Pack validity into lane `noise_dim` of the padded latent -> a single
    # lane-dense (TB, 128) store.
    lane = jax.lax.broadcasted_iota(jnp.int32, latent.shape, 1)
    out_ref[...] = jnp.where(lane == VALID_COL, v, latent)


def make_discriminator_params(key):
    """Init matching initialize_weights: W ~ N(0, 0.02), b = 0.

    Weights stored as [in, out] (torch weight transposed).  Large weights are
    bf16 for the MXU; the small parameters (W1b + all biases + the (1,100)
    final row) are packed into one (5, 512) f32 resident tile."""
    keys = jax.random.split(key, 5)

    def w(k, din, dout):
        return 0.02 * jax.random.normal(k, (din, dout), dtype=jnp.float32)

    w1 = w(keys[0], data_dim + label_dim, D1_dim)
    w2 = w(keys[1], D1_dim, D2_dim)
    w3 = w(keys[2], D2_dim, D2_dim)
    w4 = w(keys[3], D2_dim, noise_dim)
    w5 = w(keys[4], noise_dim, D3_dim)

    pad = LAT_PAD - noise_dim

    # Biases are zero per initialize_weights; kept explicit so the packed
    # layout generalizes to trained parameters.
    b1 = jnp.zeros((D1_dim,), jnp.float32)
    b2 = jnp.zeros((D2_dim,), jnp.float32)
    b3 = jnp.zeros((D2_dim,), jnp.float32)
    b4p = jnp.pad(jnp.zeros((noise_dim,), jnp.float32), (0, pad))
    b5 = jnp.zeros((D3_dim,), jnp.float32)
    w5row = jnp.pad(w5[:, 0], (0, pad))                      # (128,)

    packed = jnp.zeros((PACK_ROWS, D1_dim), jnp.float32)
    packed = packed.at[0:2, :].set(w1[data_dim:])            # W1b (2, 512)
    packed = packed.at[2, :].set(b1)
    packed = packed.at[3, 0:128].set(b2)
    packed = packed.at[3, 128:256].set(b3)
    packed = packed.at[3, 256:384].set(b4p)
    packed = packed.at[3, 384:512].set(w5row)
    packed = packed.at[4, 0].set(b5[0])

    return dict(
        w1a=w1[:data_dim].astype(jnp.bfloat16),               # (2000, 512)
        w2=w2.astype(jnp.bfloat16),                            # (512, 128)
        w3=w3.astype(jnp.bfloat16),                            # (128, 128)
        w4p=jnp.pad(w4, ((0, 0), (0, pad))).astype(jnp.bfloat16),  # (128, 128)
        packed=packed,                                         # (5, 512) f32
    )


def _choose_batch_tile(B):
    """Pick the batch tile.

    Prefer an EVEN number of batch tiles (>= 2): on v7x the "parallel" batch
    axis is sharded across the 2 TensorCores, and >= 2 steps per core lets the
    next x-tile DMA overlap compute.  Fall back to >=2 tiles, then full batch
    (tiny B only)."""
    candidates = [tb for tb in (256, 128, 64, 32, 16, 8) if B % tb == 0]
    for tb in candidates:
        n = B // tb
        if n >= 2 and n % 2 == 0:
            return tb
    for tb in candidates:
        if B // tb >= 2:
            return tb
    return candidates[0] if candidates else B


def _resident_spec(shape):
    """BlockSpec for a VMEM-resident (never re-fetched) parameter tile.

    Constant index_map -> fetched once; request single buffering when the
    installed JAX exposes pipeline_mode (saves the pointless double buffer,
    ~2.3 MB across the weights)."""
    index_map = lambda i: (0,) * len(shape)
    if hasattr(pl, "Buffered"):
        try:
            return pl.BlockSpec(shape, index_map, pipeline_mode=pl.Buffered(1))
        except (TypeError, ValueError):
            pass
    return pl.BlockSpec(shape, index_map)


def discriminator_forward(inp, label, params):
    """Returns (latent [B,100], validity [B,1]).

    `inp` / `label` are passed to pallas_call in their incoming dtype (f32 or
    bf16) — no wrapper-side cast (that would be an extra HBM pass); the kernel
    casts to bf16 for the MXU."""
    B = inp.shape[0]
    TB = _choose_batch_tile(B)
    grid = (B // TB,)

    weights = [params['w1a'], params['w2'], params['w3'],
               params['w4p'], params['packed']]

    def tile_map(i):        # batch-tiled inputs / output
        return (i, 0)

    in_specs = [pl.BlockSpec((TB, data_dim), tile_map),
                pl.BlockSpec((TB, label_dim), tile_map)]
    in_specs += [_resident_spec(w.shape) for w in weights]
    out_specs = pl.BlockSpec((TB, LAT_PAD), tile_map)

    flops = 2 * B * (data_dim * D1_dim + D1_dim * D2_dim
                     + D2_dim * D2_dim + D2_dim * LAT_PAD
                     + label_dim * D1_dim + LAT_PAD)
    param_bytes = sum(int(a.size) * a.dtype.itemsize for a in weights)
    bytes_accessed = (param_bytes
                      + B * data_dim * inp.dtype.itemsize
                      + B * label_dim * label.dtype.itemsize
                      + B * LAT_PAD * 4)                 # packed output
    cost = pl.CostEstimate(flops=flops, transcendentals=0,
                           bytes_accessed=bytes_accessed)

    out = pl.pallas_call(
        discriminator_kernel,
        out_shape=jax.ShapeDtypeStruct((B, LAT_PAD), jnp.float32),
        grid=grid,
        in_specs=in_specs,
        out_specs=out_specs,
        compiler_params=pltpu.CompilerParams(
            dimension_semantics=("parallel",),
            vmem_limit_bytes=32 << 20),
        cost_estimate=cost,
    )(inp, label, *weights)

    latent = out[:, :noise_dim]
    validity = out[:, VALID_COL:VALID_COL + 1]
    return latent, validity


def discriminator_reference(inp, label, params):
    """Pure-JAX reference with identical numerics (bf16 dots, f32 accum)."""
    pk = params['packed']
    w1b = pk[0:2, :]
    b1 = pk[2, :]
    b2 = pk[3, 0:128]
    b3 = pk[3, 128:256]
    b4 = pk[3, 256:384]
    w5 = pk[3, 384:512]
    b5 = pk[4, 0]

    x = inp.astype(jnp.bfloat16)
    lab = label.astype(jnp.float32)

    def lin(h, w, b):
        return jnp.dot(h.astype(jnp.bfloat16), w,
                       preferred_element_type=jnp.float32) + b

    h = jnp.dot(x, params['w1a'], preferred_element_type=jnp.float32)
    h = _leaky(h + lab @ w1b + b1)
    h = _leaky(lin(h, params['w2'], b2))
    h = _leaky(lin(h, params['w3'], b3))
    latent_p = _leaky(lin(h, params['w4p'], b4))
    latent = latent_p[:, :noise_dim]
    validity = (jnp.sum(_leaky(latent_p) * w5, axis=-1, keepdims=True) + b5)
    return latent, validity


if __name__ == "__main__":
    key = jax.random.PRNGKey(0)
    k_param, k_in, k_lab = jax.random.split(key, 3)

    params = make_discriminator_params(k_param)

    B = 64   # -> TB = 32, grid = (2,): exercises batch tiling, weight
             #    residency and the even-tile (megacore) split.
    inp = jax.random.normal(k_in, (B, data_dim), dtype=jnp.float32)
    label = jax.random.normal(k_lab, (B, label_dim), dtype=jnp.float32)

    latent, validity = discriminator_forward(inp, label, params)
    jax.block_until_ready((latent, validity))

    lat_ref, val_ref = discriminator_reference(inp, label, params)
    assert latent.shape == (B, noise_dim)
    assert validity.shape == (B, D3_dim)
    assert jnp.allclose(latent, lat_ref, atol=1e-2, rtol=1e-2)
    assert jnp.allclose(validity, val_ref, atol=1e-2, rtol=1e-2)

    print("KERNEL_OK")
</pallas_src>

<mosaic_0001>
module attributes {stable_mosaic.version = 11 : i64} {
  func.func @discriminator_kernel(%arg0: i32, %arg1: memref<32x2000xf32, #tpu.memory_space<vmem>>, %arg2: memref<32x2xf32, #tpu.memory_space<vmem>>, %arg3: memref<2000x512xbf16, #tpu.memory_space<vmem>>, %arg4: memref<512x128xbf16, #tpu.memory_space<vmem>>, %arg5: memref<128x128xbf16, #tpu.memory_space<vmem>>, %arg6: memref<128x128xbf16, #tpu.memory_space<vmem>>, %arg7: memref<5x512xf32, #tpu.memory_space<vmem>>, %arg8: memref<32x128xf32, #tpu.memory_space<vmem>>) attributes {dimension_semantics = [#tpu.dimension_semantics<parallel>], iteration_bounds = array<i64: 2>, scalar_prefetch = 0 : i64, scratch_operands = 0 : i64, tpu.core_type = #tpu.core_type<tc>, window_params = [{transform_indices = @transform_0, window_bounds = array<i64: 32, 2000>}, {transform_indices = @transform_1, window_bounds = array<i64: 32, 2>}, {pipeline_mode = #tpu.pipeline_mode<synchronous>, transform_indices = @transform_2, window_bounds = array<i64: 2000, 512>}, {pipeline_mode = #tpu.pipeline_mode<synchronous>, transform_indices = @transform_3, window_bounds = array<i64: 512, 128>}, {pipeline_mode = #tpu.pipeline_mode<synchronous>, transform_indices = @transform_4, window_bounds = array<i64: 128, 128>}, {pipeline_mode = #tpu.pipeline_mode<synchronous>, transform_indices = @transform_5, window_bounds = array<i64: 128, 128>}, {pipeline_mode = #tpu.pipeline_mode<synchronous>, transform_indices = @transform_6, window_bounds = array<i64: 5, 512>}, {transform_indices = @transform_7, window_bounds = array<i64: 32, 128>}]} {
    %c0 = arith.constant 0 : index
    %c0_0 = arith.constant 0 : index
    %0 = vector.load %arg1[%c0, %c0_0] : memref<32x2000xf32, #tpu.memory_space<vmem>>, vector<32x2000xf32>
    %1 = arith.truncf %0 : vector<32x2000xf32> to vector<32x2000xbf16>
    %c0_1 = arith.constant 0 : index
    %c0_2 = arith.constant 0 : index
    %2 = vector.load %arg2[%c0_1, %c0_2] : memref<32x2xf32, #tpu.memory_space<vmem>>, vector<32x2xf32>
    %c0_3 = arith.constant 0 : index
    %c0_4 = arith.constant 0 : index
    %3 = vector.load %arg7[%c0_3, %c0_4] : memref<5x512xf32, #tpu.memory_space<vmem>>, vector<1x512xf32>
    %c1 = arith.constant 1 : index
    %c0_5 = arith.constant 0 : index
    %4 = vector.load %arg7[%c1, %c0_5] : memref<5x512xf32, #tpu.memory_space<vmem>>, vector<1x512xf32>
    %c2 = arith.constant 2 : index
    %c0_6 = arith.constant 0 : index
    %5 = vector.load %arg7[%c2, %c0_6] : memref<5x512xf32, #tpu.memory_space<vmem>>, vector<1x512xf32>
    %c3 = arith.constant 3 : index
    %c0_7 = arith.constant 0 : index
    %6 = vector.load %arg7[%c3, %c0_7] : memref<5x512xf32, #tpu.memory_space<vmem>>, vector<1x128xf32>
    %c3_8 = arith.constant 3 : index
    %c128 = arith.constant 128 : index
    %7 = vector.load %arg7[%c3_8, %c128] : memref<5x512xf32, #tpu.memory_space<vmem>>, vector<1x128xf32>
    %c3_9 = arith.constant 3 : index
    %c256 = arith.constant 256 : index
    %8 = vector.load %arg7[%c3_9, %c256] : memref<5x512xf32, #tpu.memory_space<vmem>>, vector<1x128xf32>
    %c3_10 = arith.constant 3 : index
    %c384 = arith.constant 384 : index
    %9 = vector.load %arg7[%c3_10, %c384] : memref<5x512xf32, #tpu.memory_space<vmem>>, vector<1x128xf32>
    %c4 = arith.constant 4 : index
    %c0_11 = arith.constant 0 : index
    %10 = vector.load %arg7[%c4, %c0_11] : memref<5x512xf32, #tpu.memory_space<vmem>>, vector<1x1xf32>
    %c0_12 = arith.constant 0 : index
    %c0_13 = arith.constant 0 : index
    %11 = vector.load %arg3[%c0_12, %c0_13] : memref<2000x512xbf16, #tpu.memory_space<vmem>>, vector<2000x512xbf16>
    %cst = arith.constant dense<0.000000e+00> : vector<32x512xf32>
    %12 = tpu.matmul %1, %11, %cst {dimension_numbers = #tpu.dot_dimension_numbers<[1], [0], [0], [1], [0, 0, 1, 1], [], []>} : vector<32x2000xbf16>, vector<2000x512xbf16>, vector<32x512xf32> -> vector<32x512xf32>
    %13 = vector.extract_strided_slice %2 {offsets = [0, 0], sizes = [32, 1], strides = [1, 1]} : vector<32x2xf32> to vector<32x1xf32>
    %14 = vector.broadcast %13 : vector<32x1xf32> to vector<32x512xf32>
    %15 = vector.broadcast %3 : vector<1x512xf32> to vector<32x512xf32>
    %16 = arith.mulf %14, %15 : vector<32x512xf32>
    %17 = arith.addf %12, %16 : vector<32x512xf32>
    %18 = vector.extract_strided_slice %2 {offsets = [0, 1], sizes = [32, 1], strides = [1, 1]} : vector<32x2xf32> to vector<32x1xf32>
    %19 = vector.broadcast %18 : vector<32x1xf32> to vector<32x512xf32>
    %20 = vector.broadcast %4 : vector<1x512xf32> to vector<32x512xf32>
    %21 = arith.mulf %19, %20 : vector<32x512xf32>
    %22 = arith.addf %17, %21 : vector<32x512xf32>
    %23 = vector.broadcast %5 : vector<1x512xf32> to vector<32x512xf32>
    %24 = arith.addf %22, %23 : vector<32x512xf32>
    %cst_14 = arith.constant 0.000000e+00 : f32
    %25 = vector.broadcast %cst_14 : f32 to vector<32x512xf32>
    %26 = arith.cmpf oge, %24, %25 : vector<32x512xf32>
    %cst_15 = arith.constant 2.000000e-01 : f32
    %27 = vector.broadcast %cst_15 : f32 to vector<32x512xf32>
    %28 = arith.mulf %27, %24 : vector<32x512xf32>
    %29 = arith.select %26, %24, %28 : vector<32x512xi1>, vector<32x512xf32>
    %30 = arith.truncf %29 : vector<32x512xf32> to vector<32x512xbf16>
    %c0_16 = arith.constant 0 : index
    %c0_17 = arith.constant 0 : index
    %31 = vector.load %arg4[%c0_16, %c0_17] : memref<512x128xbf16, #tpu.memory_space<vmem>>, vector<512x128xbf16>
    %cst_18 = arith.constant dense<0.000000e+00> : vector<32x128xf32>
    %32 = tpu.matmul %30, %31, %cst_18 {dimension_numbers = #tpu.dot_dimension_numbers<[1], [0], [0], [1], [0, 0, 1, 1], [], []>} : vector<32x512xbf16>, vector<512x128xbf16>, vector<32x128xf32> -> vector<32x128xf32>
    %33 = vector.broadcast %6 : vector<1x128xf32> to vector<32x128xf32>
    %34 = arith.addf %32, %33 : vector<32x128xf32>
    %cst_19 = arith.constant 0.000000e+00 : f32
    %35 = vector.broadcast %cst_19 : f32 to vector<32x128xf32>
    %36 = arith.cmpf oge, %34, %35 : vector<32x128xf32>
    %cst_20 = arith.constant 2.000000e-01 : f32
    %37 = vector.broadcast %cst_20 : f32 to vector<32x128xf32>
    %38 = arith.mulf %37, %34 : vector<32x128xf32>
    %39 = arith.select %36, %34, %38 : vector<32x128xi1>, vector<32x128xf32>
    %40 = arith.truncf %39 : vector<32x128xf32> to vector<32x128xbf16>
    %c0_21 = arith.constant 0 : index
    %c0_22 = arith.constant 0 : index
    %41 = vector.load %arg5[%c0_21, %c0_22] : memref<128x128xbf16, #tpu.memory_space<vmem>>, vector<128x128xbf16>
    %cst_23 = arith.constant dense<0.000000e+00> : vector<32x128xf32>
    %42 = tpu.matmul %40, %41, %cst_23 {dimension_numbers = #tpu.dot_dimension_numbers<[1], [0], [0], [1], [0, 0, 1, 1], [], []>} : vector<32x128xbf16>, vector<128x128xbf16>, vector<32x128xf32> -> vector<32x128xf32>
    %43 = vector.broadcast %7 : vector<1x128xf32> to vector<32x128xf32>
    %44 = arith.addf %42, %43 : vector<32x128xf32>
    %cst_24 = arith.constant 0.000000e+00 : f32
    %45 = vector.broadcast %cst_24 : f32 to vector<32x128xf32>
    %46 = arith.cmpf oge, %44, %45 : vector<32x128xf32>
    %cst_25 = arith.constant 2.000000e-01 : f32
    %47 = vector.broadcast %cst_25 : f32 to vector<32x128xf32>
    %48 = arith.mulf %47, %44 : vector<32x128xf32>
    %49 = arith.select %46, %44, %48 : vector<32x128xi1>, vector<32x128xf32>
    %50 = arith.truncf %49 : vector<32x128xf32> to vector<32x128xbf16>
    %c0_26 = arith.constant 0 : index
    %c0_27 = arith.constant 0 : index
    %51 = vector.load %arg6[%c0_26, %c0_27] : memref<128x128xbf16, #tpu.memory_space<vmem>>, vector<128x128xbf16>
    %cst_28 = arith.constant dense<0.000000e+00> : vector<32x128xf32>
    %52 = tpu.matmul %50, %51, %cst_28 {dimension_numbers = #tpu.dot_dimension_numbers<[1], [0], [0], [1], [0, 0, 1, 1], [], []>} : vector<32x128xbf16>, vector<128x128xbf16>, vector<32x128xf32> -> vector<32x128xf32>
    %53 = vector.broadcast %8 : vector<1x128xf32> to vector<32x128xf32>
    %54 = arith.addf %52, %53 : vector<32x128xf32>
    %cst_29 = arith.constant 0.000000e+00 : f32
    %55 = vector.broadcast %cst_29 : f32 to vector<32x128xf32>
    %56 = arith.cmpf oge, %54, %55 : vector<32x128xf32>
    %cst_30 = arith.constant 2.000000e-01 : f32
    %57 = vector.broadcast %cst_30 : f32 to vector<32x128xf32>
    %58 = arith.mulf %57, %54 : vector<32x128xf32>
    %59 = arith.select %56, %54, %58 : vector<32x128xi1>, vector<32x128xf32>
    %cst_31 = arith.constant 0.000000e+00 : f32
    %60 = vector.broadcast %cst_31 : f32 to vector<32x128xf32>
    %61 = arith.cmpf oge, %59, %60 : vector<32x128xf32>
    %cst_32 = arith.constant 2.000000e-01 : f32
    %62 = vector.broadcast %cst_32 : f32 to vector<32x128xf32>
    %63 = arith.mulf %62, %59 : vector<32x128xf32>
    %64 = arith.select %61, %59, %63 : vector<32x128xi1>, vector<32x128xf32>
    %65 = vector.broadcast %9 : vector<1x128xf32> to vector<32x128xf32>
    %66 = arith.mulf %64, %65 : vector<32x128xf32>
    %cst_33 = arith.constant dense<0.000000e+00> : vector<32xf32>
    %67 = vector.multi_reduction <add>, %66, %cst_33 [1] : vector<32x128xf32> to vector<32xf32>
    %68 = vector.shape_cast %67 : vector<32xf32> to vector<32x1xf32>
    %69 = vector.broadcast %10 : vector<1x1xf32> to vector<32x1xf32>
    %70 = arith.addf %68, %69 : vector<32x1xf32>
    %71 = tpu.iota {dimensions = array<i32: 1>} : vector<32x128xi32>
    %c100_i32 = arith.constant 100 : i32
    %72 = vector.broadcast %c100_i32 : i32 to vector<32x128xi32>
    %73 = arith.cmpi eq, %71, %72 : vector<32x128xi32>
    %74 = vector.shape_cast %70 : vector<32x1xf32> to vector<32x1xf32>
    %75 = vector.broadcast %74 : vector<32x1xf32> to vector<32x128xf32>
    %76 = arith.select %73, %75, %59 : vector<32x128xi1>, vector<32x128xf32>
    %c0_34 = arith.constant 0 : index
    %c0_35 = arith.constant 0 : index
    %77 = vector.load %arg8[%c0_34, %c0_35] : memref<32x128xf32, #tpu.memory_space<vmem>>, vector<32x128xf32>
    tpu.vector_store %arg8[%c0_34, %c0_35], %76 {strides = array<i32>} : memref<32x128xf32, #tpu.memory_space<vmem>>, vector<32x128xf32>,
    return
  }
  func.func @transform_0(%arg0: i32) -> (i32, i32) {
    %c0_i32 = arith.constant 0 : i32
    %c0_i32_0 = arith.constant 0 : i32
    return %arg0, %c0_i32 : i32, i32
  }
  func.func @transform_1(%arg0: i32) -> (i32, i32) {
    %c0_i32 = arith.constant 0 : i32
    %c0_i32_0 = arith.constant 0 : i32
    return %arg0, %c0_i32 : i32, i32
  }
  func.func @transform_2(%arg0: i32) -> (i32, i32) {
    %c0_i32 = arith.constant 0 : i32
    %c0_i32_0 = arith.constant 0 : i32
    %c0_i32_1 = arith.constant 0 : i32
    return %c0_i32, %c0_i32_0 : i32, i32
  }
  func.func @transform_3(%arg0: i32) -> (i32, i32) {
    %c0_i32 = arith.constant 0 : i32
    %c0_i32_0 = arith.constant 0 : i32
    %c0_i32_1 = arith.constant 0 : i32
    return %c0_i32, %c0_i32_0 : i32, i32
  }
  func.func @transform_4(%arg0: i32) -> (i32, i32) {
    %c0_i32 = arith.constant 0 : i32
    %c0_i32_0 = arith.constant 0 : i32
    %c0_i32_1 = arith.constant 0 : i32
    return %c0_i32, %c0_i32_0 : i32, i32
  }
  func.func @transform_5(%arg0: i32) -> (i32, i32) {
    %c0_i32 = arith.constant 0 : i32
    %c0_i32_0 = arith.constant 0 : i32
    %c0_i32_1 = arith.constant 0 : i32
    return %c0_i32, %c0_i32_0 : i32, i32
  }
  func.func @transform_6(%arg0: i32) -> (i32, i32) {
    %c0_i32 = arith.constant 0 : i32
    %c0_i32_0 = arith.constant 0 : i32
    %c0_i32_1 = arith.constant 0 : i32
    return %c0_i32, %c0_i32_0 : i32, i32
  }
  func.func @transform_7(%arg0: i32) -> (i32, i32) {
    %c0_i32 = arith.constant 0 : i32
    %c0_i32_0 = arith.constant 0 : i32
    return %arg0, %c0_i32 : i32, i32
  }
}

</mosaic_0001>

<llo_original>
// kernel: tpu_custom_call.1
$region0: #{tpu_custom_call.1}
  #allocation0 [shape = 'u32[]', space=smem, size = 0x4, offset = 0x4, fixed_abs, tag = 'smem constant byte address 0x4 - core index']
  #allocation1 [shape = 'u32[72,128]{1,0:T(1,128)}', space=vmem, size = 0x9000, scoped, tag = 'internal scratch']
  %s0 = inlined_call_operand.hbm [shape: f32[64,2000], index: 0, kind: input, shape index: {}]
  %s1 = inlined_call_operand.vmem [shape: f32[64,2], index: 1, kind: input, shape index: {}]
  %s2 = inlined_call_operand.hbm [shape: bf16[2000,512], index: 2, kind: input, shape index: {}]
  %s3 = inlined_call_operand.hbm [shape: bf16[512,128], index: 3, kind: input, shape index: {}]
  %s4 = inlined_call_operand.hbm [shape: bf16[128,128], index: 4, kind: input, shape index: {}]
  %s5 = inlined_call_operand.hbm [shape: bf16[128,128], index: 5, kind: input, shape index: {}]
  %s6 = inlined_call_operand.hbm [shape: f32[5,512], index: 6, kind: input, shape index: {}]
  %s7 = inlined_call_operand.hbm [shape: f32[64,128], index: 7, kind: output, shape index: {}]
  %s8 = sld [smem:[#allocation0]]
  $region85: #{tpu_custom_call.1} parent=0
    _
  %s10 = ssub.s32 1, %s8
  %s11 = scalar_select 0, %s10, %s8
  $region1: #{tpu_custom_call.1} parent=0
    #allocation2 [shape = 'u8[524288]{0}', space=vmem, size = 0x80000, scoped, tag = 'input window, operand 0']
    #allocation3 [shape = 's32[2]{0}', space=sflag, size = 0x8, scoped, tag = 'scoped memory for tpu_custom_call.1']
    #allocation4 [shape = 's32[2]{0}', space=sflag, size = 0x8, scoped, tag = 'scoped memory for tpu_custom_call.1']
    #allocation5 [shape = 'u8[2048000]{0}', space=vmem, size = 0x1f4000, scoped, tag = 'input window, operand 2, single buffered']
    #allocation6 [shape = 's32[1]{0}', space=sflag, size = 0x4, scoped, tag = 'scoped memory for tpu_custom_call.1']
    #allocation7 [shape = 'u8[131072]{0}', space=vmem, size = 0x20000, scoped, tag = 'input window, operand 3, single buffered']
    #allocation8 [shape = 'u8[32768]{0}', space=vmem, size = 0x8000, scoped, tag = 'input window, operand 4, single buffered']
    #allocation9 [shape = 's32[1]{0}', space=sflag, size = 0x4, scoped, tag = 'scoped memory for tpu_custom_call.1']
    #allocation10 [shape = 'u8[32768]{0}', space=vmem, size = 0x8000, scoped, tag = 'input window, operand 5, single buffered']
    #allocation11 [shape = 'u8[16384]{0}', space=vmem, size = 0x4000, scoped, tag = 'input window, operand 6, single buffered']
    #allocation12 [shape = 's32[1]{0}', space=sflag, size = 0x4, scoped, tag = 'scoped memory for tpu_custom_call.1']
    #allocation13 [shape = 'u8[32768]{0}', space=vmem, size = 0x8000, scoped, tag = 'output window, operand 0']
    %12 = vsyncpa [#allocation3], 0
    %s13 = scalar_lea.sflag [#allocation3], 1
    %14 = vsyncpa %s13, 0
    %15 = vsyncpa [#allocation6], 0
    %16 = vsyncpa [#allocation9], 0
    %17 = vsyncpa [#allocation12], 0
    %18 = vsyncpa [#allocation4], 0
    %s19 = scalar_lea.sflag [#allocation4], 1
    %20 = vsyncpa %s19, 0
    loop: start=0, step=1, limit=4
    $region2: #{tpu_custom_call.1} parent=1 // loop_pre_header
      _
    $region3: #{tpu_custom_call.1} parent=1 // loop_header
      %s22 = sphi 0, %s26
      %p23 = scmp.ge.s32.totalorder %s22, 4
      %s32 = sphi 0, %s34
      %s35 = sphi 0, %s32
      %s36 = sphi 0, %s35
      %s52 = sphi 0, %s36
      %s58 = sphi 0, %s60
      %s61 = sphi 0, %s58
      %s62 = sphi 0, %s61
      %s78 = sphi 0, %s62
      %s82 = sphi 0, %s82
      %s84 = sphi 0, %s82
      %s85 = sphi 0, %s84
      %s99 = sphi 0, %s85
      %s103 = sphi 0, %s103
      %s105 = sphi 0, %s103
      %s106 = sphi 0, %s105
      %s120 = sphi 0, %s106
      %s124 = sphi 0, %s124
      %s126 = sphi 0, %s124
      %s127 = sphi 0, %s126
      %s141 = sphi 0, %s127
      %s145 = sphi 0, %s145
      %s147 = sphi 0, %s145
      %s148 = sphi 0, %s147
      %s162 = sphi 0, %s148
      %s166 = sphi 0, %s166
      %s168 = sphi 0, %s166
      %s169 = sphi 0, %s168
      %s183 = sphi 0, %s169
      %s189 = sphi 0, %s191
      %s192 = sphi 0, %s189
      %s193 = sphi 0, %s192
      %s209 = sphi 0, %s193
    $region4: #{tpu_custom_call.1} parent=1 // loop_header_branch
      %25 = sbr.rel (%p23) target = $region8
    $region5: #{tpu_custom_call.1} parent=1 // loop_body
      %s27 = ssub.s32 %s22, 1
      %s28 = ssub.s32 %s22, 2
      %s29 = sadd.s32 %s22, 1
      %s30 = ssub.s32 %s22, %s29
      %p31 = scmp.eq.s32.totalorder %s30, 0
      %s33 = sadd.s32 %s32, 1
      %s34 = scalar_select %p31, %s32, %s33
      %p37 = pneg %p31
      %p38 = scmp.eq.s32.totalorder %s22, 1
      %p39 = por %p37, %p38
      %p40 = scmp.ne.s32.totalorder %s32, %s35
      %p41 = scmp.eq.s32.totalorder %s22, 0
      %p42 = por %p40, %p41
      %p43 = scmp.ne.s32.totalorder %s32, %s35
      %p44 = scmp.eq.s32.totalorder %s27, 1
      %p45 = por %p43, %p44
      %p46 = scmp.ne.s32.totalorder %s35, %s36
      %p47 = scmp.eq.s32.totalorder %s27, 0
      %p48 = por %p46, %p47
      %p49 = scmp.ne.s32.totalorder %s35, %s36
      %p50 = scmp.eq.s32.totalorder %s28, 1
      %p51 = por %p49, %p50
      %p53 = scmp.ne.s32.totalorder %s36, %s52
      %p54 = scmp.eq.s32.totalorder %s28, 0
      %p55 = por %p53, %p54
      %s56 = ssub.s32 %s22, %s29
      %p57 = scmp.eq.s32.totalorder %s56, 0
      %s59 = sadd.s32 %s58, 1
      %s60 = scalar_select %p57, %s58, %s59
      %p63 = pneg %p57
      %p64 = scmp.eq.s32.totalorder %s22, 1
      %p65 = por %p63, %p64
      %p66 = scmp.ne.s32.totalorder %s58, %s61
      %p67 = scmp.eq.s32.totalorder %s22, 0
      %p68 = por %p66, %p67
      %p69 = scmp.ne.s32.totalorder %s58, %s61
      %p70 = scmp.eq.s32.totalorder %s27, 1
      %p71 = por %p69, %p70
      %p72 = scmp.ne.s32.totalorder %s61, %s62
      %p73 = scmp.eq.s32.totalorder %s27, 0
      %p74 = por %p72, %p73
      %p75 = scmp.ne.s32.totalorder %s61, %s62
      %p76 = scmp.eq.s32.totalorder %s28, 1
      %p77 = por %p75, %p76
      %p79 = scmp.ne.s32.totalorder %s62, %s78
      %p80 = scmp.eq.s32.totalorder %s28, 0
      %p81 = por %p79, %p80
      %s83 = sadd.s32 %s82, 1
      %p86 = scmp.eq.s32.totalorder %s22, 1
      %p87 = scmp.ne.s32.totalorder %s82, %s84
      %p88 = scmp.eq.s32.totalorder %s22, 0
      %p89 = por %p87, %p88
      %p90 = scmp.ne.s32.totalorder %s82, %s84
      %p91 = scmp.eq.s32.totalorder %s27, 1
      %p92 = por %p90, %p91
      %p93 = scmp.ne.s32.totalorder %s84, %s85
      %p94 = scmp.eq.s32.totalorder %s27, 0
      %p95 = por %p93, %p94
      %p96 = scmp.ne.s32.totalorder %s84, %s85
      %p97 = scmp.eq.s32.totalorder %s28, 1
      %p98 = por %p96, %p97
      %p100 = scmp.ne.s32.totalorder %s85, %s99
      %p101 = scmp.eq.s32.totalorder %s28, 0
      %p102 = por %p100, %p101
      %s104 = sadd.s32 %s103, 1
      %p107 = scmp.eq.s32.totalorder %s22, 1
      %p108 = scmp.ne.s32.totalorder %s103, %s105
      %p109 = scmp.eq.s32.totalorder %s22, 0
      %p110 = por %p108, %p109
      %p111 = scmp.ne.s32.totalorder %s103, %s105
      %p112 = scmp.eq.s32.totalorder %s27, 1
      %p113 = por %p111, %p112
      %p114 = scmp.ne.s32.totalorder %s105, %s106
      %p115 = scmp.eq.s32.totalorder %s27, 0
      %p116 = por %p114, %p115
      %p117 = scmp.ne.s32.totalorder %s105, %s106
      %p118 = scmp.eq.s32.totalorder %s28, 1
      %p119 = por %p117, %p118
      %p121 = scmp.ne.s32.totalorder %s106, %s120
      %p122 = scmp.eq.s32.totalorder %s28, 0
      %p123 = por %p121, %p122
      %s125 = sadd.s32 %s124, 1
      %p128 = scmp.eq.s32.totalorder %s22, 1
      %p129 = scmp.ne.s32.totalorder %s124, %s126
      %p130 = scmp.eq.s32.totalorder %s22, 0
      %p131 = por %p129, %p130
      %p132 = scmp.ne.s32.totalorder %s124, %s126
      %p133 = scmp.eq.s32.totalorder %s27, 1
      %p134 = por %p132, %p133
      %p135 = scmp.ne.s32.totalorder %s126, %s127
      %p136 = scmp.eq.s32.totalorder %s27, 0
      %p137 = por %p135, %p136
      %p138 = scmp.ne.s32.totalorder %s126, %s127
      %p139 = scmp.eq.s32.totalorder %s28, 1
      %p140 = por %p138, %p139
      %p142 = scmp.ne.s32.totalorder %s127, %s141
      %p143 = scmp.eq.s32.totalorder %s28, 0
      %p144 = por %p142, %p143
      %s146 = sadd.s32 %s145, 1
      %p149 = scmp.eq.s32.totalorder %s22, 1
      %p150 = scmp.ne.s32.totalorder %s145, %s147
      %p151 = scmp.eq.s32.totalorder %s22, 0
      %p152 = por %p150, %p151
      %p153 = scmp.ne.s32.totalorder %s145, %s147
      %p154 = scmp.eq.s32.totalorder %s27, 1
      %p155 = por %p153, %p154
      %p156 = scmp.ne.s32.totalorder %s147, %s148
      %p157 = scmp.eq.s32.totalorder %s27, 0
      %p158 = por %p156, %p157
      %p159 = scmp.ne.s32.totalorder %s147, %s148
      %p160 = scmp.eq.s32.totalorder %s28, 1
      %p161 = por %p159, %p160
      %p163 = scmp.ne.s32.totalorder %s148, %s162
      %p164 = scmp.eq.s32.totalorder %s28, 0
      %p165 = por %p163, %p164
      %s167 = sadd.s32 %s166, 1
      %p170 = scmp.eq.s32.totalorder %s22, 1
      %p171 = scmp.ne.s32.totalorder %s166, %s168
      %p172 = scmp.eq.s32.totalorder %s22, 0
      %p173 = por %p171, %p172
      %p174 = scmp.ne.s32.totalorder %s166, %s168
      %p175 = scmp.eq.s32.totalorder %s27, 1
      %p176 = por %p174, %p175
      %p177 = scmp.ne.s32.totalorder %s168, %s169
      %p178 = scmp.eq.s32.totalorder %s27, 0
      %p179 = por %p177, %p178
      %p180 = scmp.ne.s32.totalorder %s168, %s169
      %p181 = scmp.eq.s32.totalorder %s28, 1
      %p182 = por %p180, %p181
      %p184 = scmp.ne.s32.totalorder %s169, %s183
      %p185 = scmp.eq.s32.totalorder %s28, 0
      %p186 = por %p184, %p185
      %s187 = ssub.s32 %s22, %s29
      %p188 = scmp.eq.s32.totalorder %s187, 0
      %s190 = sadd.s32 %s189, 1
      %s191 = scalar_select %p188, %s189, %s190
      %p194 = pneg %p188
      %p195 = scmp.eq.s32.totalorder %s22, 1
      %p196 = por %p194, %p195
      %p197 = scmp.ne.s32.totalorder %s189, %s192
      %p198 = scmp.eq.s32.totalorder %s22, 0
      %p199 = por %p197, %p198
      %p200 = scmp.ne.s32.totalorder %s189, %s192
      %p201 = scmp.eq.s32.totalorder %s27, 1
      %p202 = por %p200, %p201
      %p203 = scmp.ne.s32.totalorder %s192, %s193
      %p204 = scmp.eq.s32.totalorder %s27, 0
      %p205 = por %p203, %p204
      %p206 = scmp.ne.s32.totalorder %s192, %s193
      %p207 = scmp.eq.s32.totalorder %s28, 1
      %p208 = por %p206, %p207
      %p210 = scmp.ne.s32.totalorder %s193, %s209
      %p211 = scmp.eq.s32.totalorder %s28, 0
      %p212 = por %p210, %p211
      %p213 = scmp.le.s32.totalorder 1, %s22
      %p214 = scmp.lt.s32.totalorder %s22, 3
      %p215 = pnand %p213, %p214
      %p216 = pneg %p215
      // Predicated region
      $region9: #{tpu_custom_call.1} parent=5 // pred_check
        _
      $region10: #{tpu_custom_call.1} parent=5 // pred_check_branch
        %218 = sbr.rel (%p215) target = $region12
      $region11: #{tpu_custom_call.1} parent=5 // pred_region
        %s219 = ssub.s32 %s22, 1
        // Predicated region
        $region13: #{tpu_custom_call.1} parent=11 // pred_check
          %p220 = pneg %p95
        $region14: #{tpu_custom_call.1} parent=11 // pred_check_branch
          %222 = sbr.rel (%p220) target = $region16
        $region15: #{tpu_custom_call.1} parent=11 // pred_region
          %224 = vsyncadd [#allocation6], 0
          %s225 = sshll.u32 %s2, 4
          %s226 = int_to_ptr.hbm [resolvable:$true] %s225
          %s227 = sshll.u32 [#allocation5], 4
          %s228 = int_to_ptr.vmem [resolvable:$true] %s227
          %233 = dma.hbm_to_vmem [thread:$0]  %s226, 64000, %s228, [#allocation6], 256, 256, 16
        $region16: #{tpu_custom_call.1} parent=11 // pred_fallthru
          _
        // Predicated region
        $region17: #{tpu_custom_call.1} parent=11 // pred_check
          %p234 = pneg %p116
        $region18: #{tpu_custom_call.1} parent=11 // pred_check_branch
          %236 = sbr.rel (%p234) target = $region20
        $region19: #{tpu_custom_call.1} parent=11 // pred_region
          %238 = vsyncadd [#allocation6], 0
          %s239 = sshll.u32 %s3, 4
          %s240 = int_to_ptr.hbm [resolvable:$true] %s239
          %s241 = sshll.u32 [#allocation7], 4
          %s242 = int_to_ptr.vmem [resolvable:$true] %s241
          %247 = dma.hbm_to_vmem [thread:$0]  %s240, 4096, %s242, [#allocation6], 64, 64, 4
        $region20: #{tpu_custom_call.1} parent=11 // pred_fallthru
          _
        // Predicated region
        $region21: #{tpu_custom_call.1} parent=11 // pred_check
          %p248 = pneg %p137
        $region22: #{tpu_custom_call.1} parent=11 // pred_check_branch
          %250 = sbr.rel (%p248) target = $region24
        $region23: #{tpu_custom_call.1} parent=11 // pred_region
          %252 = vsyncadd [#allocation9], 0
          %s253 = sshll.u32 %s4, 4
          %s254 = int_to_ptr.hbm [resolvable:$true] %s253
          %s255 = sshll.u32 [#allocation8], 4
          %s256 = int_to_ptr.vmem [resolvable:$true] %s255
          %261 = dma.hbm_to_vmem [thread:$0]  %s254, 1024, %s256, [#allocation9], 64, 64, 4
        $region24: #{tpu_custom_call.1} parent=11 // pred_fallthru
          _
        // Predicated region
        $region25: #{tpu_custom_call.1} parent=11 // pred_check
          %p262 = pneg %p158
        $region26: #{tpu_custom_call.1} parent=11 // pred_check_branch
          %264 = sbr.rel (%p262) target = $region28
        $region27: #{tpu_custom_call.1} parent=11 // pred_region
          %266 = vsyncadd [#allocation9], 0
          %s267 = sshll.u32 %s5, 4
          %s268 = int_to_ptr.hbm [resolvable:$true] %s267
          %s269 = sshll.u32 [#allocation10], 4
          %s270 = int_to_ptr.vmem [resolvable:$true] %s269
          %275 = dma.hbm_to_vmem [thread:$0]  %s268, 1024, %s270, [#allocation9], 64, 64, 4
        $region28: #{tpu_custom_call.1} parent=11 // pred_fallthru
          _
        // Predicated region
        $region29: #{tpu_custom_call.1} parent=11 // pred_check
          %p276 = pneg %p179
        $region30: #{tpu_custom_call.1} parent=11 // pred_check_branch
          %278 = sbr.rel (%p276) target = $region32
        $region31: #{tpu_custom_call.1} parent=11 // pred_region
          %280 = vsyncadd [#allocation12], 0
          %s282 = sshll.u32 %s6, 4
          %s283 = int_to_ptr.hbm [resolvable:$true] %s282
          %s284 = sshll.u32 [#allocation11], 4
          %s285 = int_to_ptr.vmem [resolvable:$true] %s284
          %287 = dma.hbm_to_vmem [thread:$0]  %s283, 512, %s285, [#allocation12]
        $region32: #{tpu_custom_call.1} parent=11 // pred_fallthru
          _
      $region12: #{tpu_custom_call.1} parent=5 // pred_fallthru
        _
      %p288 = scmp.lt.s32.totalorder %s22, 2
      // Predicated region
      $region33: #{tpu_custom_call.1} parent=5 // pred_check
        %p289 = pneg %p288
      $region34: #{tpu_custom_call.1} parent=5 // pred_check_branch
        %291 = sbr.rel (%p289) target = $region36
      $region35: #{tpu_custom_call.1} parent=5 // pred_region
        // Predicated region
        $region37: #{tpu_custom_call.1} parent=35 // pred_check
          %p292 = pneg %p42
        $region38: #{tpu_custom_call.1} parent=35 // pred_check_branch
          %294 = sbr.rel (%p292) target = $region40
        $region39: #{tpu_custom_call.1} parent=35 // pred_region
          %s295 = sand.u32 %s32, 1
          %s296 = scalar_lea.sflag [#allocation3], %s295
          %s297 = sand.u32 %s32, 1
          %s298 = smul.addr %s297, 512
          %s299 = scalar_lea.vmem [#allocation2], %s298
          %s300 = smul.u32 4, %s22
          %302 = vsyncadd %s296, 0
          %s303 = smul.addr %s300, 16
          %s304 = smul.addr %s303, 8
          %s305 = scalar_lea.hbm %s0, %s304
          %s306 = sshll.u32 %s305, 4
          %s307 = int_to_ptr.hbm [resolvable:$true] %s306
          %s308 = sshll.u32 %s299, 4
          %s309 = int_to_ptr.vmem [resolvable:$true] %s308
          %314 = dma.hbm_to_vmem [thread:$0]  %s307, 8192, %s309, %s296, 2048, 2048, 128
        $region40: #{tpu_custom_call.1} parent=35 // pred_fallthru
          _
        // Predicated region
        $region41: #{tpu_custom_call.1} parent=35 // pred_check
          %p315 = pneg %p68
        $region42: #{tpu_custom_call.1} parent=35 // pred_check_branch
          %317 = sbr.rel (%p315) target = $region44
        $region43: #{tpu_custom_call.1} parent=35 // pred_region
          %s318 = smul.u32 4, %s22
          %p319 = scmp.lt.s32.totalorder %s318, 7
          %s320 = scalar_select %p319, %s318, 7
          %s321 = smul.addr %s320, 8
          %s322 = scalar_lea.vmem %s1, %s321
          %s323 = smul.u32 4, %s22
        $region44: #{tpu_custom_call.1} parent=35 // pred_fallthru
          _
      $region36: #{tpu_custom_call.1} parent=5 // pred_fallthru
        _
      %p324 = scmp.le.s32.totalorder 1, %s22
      %p325 = scmp.lt.s32.totalorder %s22, 3
      %p326 = pnand %p324, %p325
      %p327 = pneg %p326
      // Predicated region
      $region45: #{tpu_custom_call.1} parent=5 // pred_check
        _
      $region46: #{tpu_custom_call.1} parent=5 // pred_check_branch
        %329 = sbr.rel (%p326) target = $region48
      $region47: #{tpu_custom_call.1} parent=5 // pred_region
        %s330 = ssub.s32 %s22, 1
        %s331 = sand.u32 %s35, 1
        %s332 = scalar_lea.sflag [#allocation3], %s331
        %s333 = sand.u32 %s35, 1
        %s334 = smul.addr %s333, 512
        %s335 = scalar_lea.vmem [#allocation2], %s334
        // Predicated region
        $region49: #{tpu_custom_call.1} parent=47 // pred_check
          %p336 = pneg %p48
        $region50: #{tpu_custom_call.1} parent=47 // pred_check_branch
          %338 = sbr.rel (%p336) target = $region52
        $region51: #{tpu_custom_call.1} parent=47 // pred_region
          %340 = dma.done %s332, 8192
        $region52: #{tpu_custom_call.1} parent=47 // pred_fallthru
          _
        // Predicated region
        $region53: #{tpu_custom_call.1} parent=47 // pred_check
          %p341 = pneg %p95
        $region54: #{tpu_custom_call.1} parent=47 // pred_check_branch
          %343 = sbr.rel (%p341) target = $region56
        $region55: #{tpu_custom_call.1} parent=47 // pred_region
          %345 = dma.done [#allocation6], 64000
        $region56: #{tpu_custom_call.1} parent=47 // pred_fallthru
          _
        // Predicated region
        $region57: #{tpu_custom_call.1} parent=47 // pred_check
          %p346 = pneg %p116
        $region58: #{tpu_custom_call.1} parent=47 // pred_check_branch
          %348 = sbr.rel (%p346) target = $region60
        $region59: #{tpu_custom_call.1} parent=47 // pred_region
          %350 = dma.done [#allocation6], 4096
        $region60: #{tpu_custom_call.1} parent=47 // pred_fallthru
          _
        // Predicated region
        $region61: #{tpu_custom_call.1} parent=47 // pred_check
          %p351 = pneg %p137
        $region62: #{tpu_custom_call.1} parent=47 // pred_check_branch
          %353 = sbr.rel (%p351) target = $region64
        $region63: #{tpu_custom_call.1} parent=47 // pred_region
          %355 = dma.done [#allocation9], 1024
        $region64: #{tpu_custom_call.1} parent=47 // pred_fallthru
          _
        // Predicated region
        $region65: #{tpu_custom_call.1} parent=47 // pred_check
          %p356 = pneg %p158
        $region66: #{tpu_custom_call.1} parent=47 // pred_check_branch
          %358 = sbr.rel (%p356) target = $region68
        $region67: #{tpu_custom_call.1} parent=47 // pred_region
          %360 = dma.done [#allocation9], 1024
        $region68: #{tpu_custom_call.1} parent=47 // pred_fallthru
          _
        // Predicated region
        $region69: #{tpu_custom_call.1} parent=47 // pred_check
          %p361 = pneg %p179
        $region70: #{tpu_custom_call.1} parent=47 // pred_check_branch
          %363 = sbr.rel (%p361) target = $region72
        $region71: #{tpu_custom_call.1} parent=47 // pred_region
          %365 = dma.done [#allocation12], 512
        $region72: #{tpu_custom_call.1} parent=47 // pred_fallthru
          _
        %s366 = sand.u32 %s35, 1
        %s367 = scalar_lea.sflag [#allocation3], %s366
        %s368 = sand.u32 %s35, 1
        %s369 = smul.addr %s368, 512
        %s370 = scalar_lea.vmem [#allocation2], %s369
        %p371 = pneg %p48
        %p372 = pneg %p45
        %s373 = smul.u32 4, %s27
        %p374 = scmp.lt.s32.totalorder %s373, 7
        %s375 = scalar_select %p374, %s373, 7
        %s376 = smul.addr %s375, 8
        %s377 = scalar_lea.vmem %s1, %s376
        %p378 = pneg %p74
        %p379 = pneg %p71
        %p380 = pneg %p95
        %p381 = pneg %p92
        %p382 = pneg %p116
        %p383 = pneg %p113
        %p384 = pneg %p137
        %p385 = pneg %p134
        %p386 = pneg %p158
        %p387 = pneg %p155
        %p388 = pneg %p179
        %p389 = pneg %p176
        %p390 = pneg %p205
        %p391 = pneg %p202
        %s392 = sand.u32 %s192, 1
        %s393 = scalar_lea.sflag [#allocation4], %s392
        %s394 = sand.u32 %s192, 1
        %s395 = smul.addr %s394, 32
        %s396 = scalar_lea.vmem [#allocation13], %s395
        %s397 = smul.u32 4, %s27
        %s398 = smul.u32 4, %s27
        %p399 = scmp.lt.s32.totalorder %s398, 7
        %s400 = scalar_select %p399, %s398, 7
        %s401 = smul.addr %s400, 8
        %s402 = scalar_lea.vmem %s1, %s401
        %s403 = smul.u32 4, %s27
        %s404 = smul.u32 4, %s27
        %v406 = vld [vmem:[%s335] sm:$0xff]
        %v407 = vld [vmem:[%s335 + $0x8] sm:$0xff]
        %v408 = vld [vmem:[%s335 + $0x10] sm:$0xff]
        %v409 = vld [vmem:[%s335 + $0x18] sm:$0xff]
        %v410 = vld [vmem:[%s335 + $0x20] sm:$0xff]
        %v411 = vld [vmem:[%s335 + $0x28] sm:$0xff]
        %v412 = vld [vmem:[%s335 + $0x30] sm:$0xff]
        %v413 = vld [vmem:[%s335 + $0x38] sm:$0xff]
        %v414 = vld [vmem:[%s335 + $0x40] sm:$0xff]
        %v415 = vld [vmem:[%s335 + $0x48] sm:$0xff]
        %v416 = vld [vmem:[%s335 + $0x50] sm:$0xff]
        %v417 = vld [vmem:[%s335 + $0x58] sm:$0xff]
        %v418 = vld [vmem:[%s335 + $0x60] sm:$0xff]
        %v419 = vld [vmem:[%s335 + $0x68] sm:$0xff]
        %v420 = vld [vmem:[%s335 + $0x70] sm:$0xff]
        %v421 = vld [vmem:[%s335 + $0x78] sm:$0xff]
        %v422 = vld [vmem:[%s335 + $0x80] sm:$0xff]
        %v423 = vld [vmem:[%s335 + $0x88] sm:$0xff]
        %v424 = vld [vmem:[%s335 + $0x90] sm:$0xff]
        %v425 = vld [vmem:[%s335 + $0x98] sm:$0xff]
        %v426 = vld [vmem:[%s335 + $0xa0] sm:$0xff]
        %v427 = vld [vmem:[%s335 + $0xa8] sm:$0xff]
        %v428 = vld [vmem:[%s335 + $0xb0] sm:$0xff]
        %v429 = vld [vmem:[%s335 + $0xb8] sm:$0xff]
        %v430 = vld [vmem:[%s335 + $0xc0] sm:$0xff]
        %v431 = vld [vmem:[%s335 + $0xc8] sm:$0xff]
        %v432 = vld [vmem:[%s335 + $0xd0] sm:$0xff]
        %v433 = vld [vmem:[%s335 + $0xd8] sm:$0xff]
        %v434 = vld [vmem:[%s335 + $0xe0] sm:$0xff]
        %v435 = vld [vmem:[%s335 + $0xe8] sm:$0xff]
        %v436 = vld [vmem:[%s335 + $0xf0] sm:$0xff]
        %v437 = vld [vmem:[%s335 + $0xf8] sm:$0xff]
        %v438 = vld [vmem:[%s335 + $0x100] sm:$0xff]
        %v439 = vld [vmem:[%s335 + $0x108] sm:$0xff]
        %v440 = vld [vmem:[%s335 + $0x110] sm:$0xff]
        %v441 = vld [vmem:[%s335 + $0x118] sm:$0xff]
        %v442 = vld [vmem:[%s335 + $0x120] sm:$0xff]
        %v443 = vld [vmem:[%s335 + $0x128] sm:$0xff]
        %v444 = vld [vmem:[%s335 + $0x130] sm:$0xff]
        %v445 = vld [vmem:[%s335 + $0x138] sm:$0xff]
        %v446 = vld [vmem:[%s335 + $0x140] sm:$0xff]
        %v447 = vld [vmem:[%s335 + $0x148] sm:$0xff]
        %v448 = vld [vmem:[%s335 + $0x150] sm:$0xff]
        %v449 = vld [vmem:[%s335 + $0x158] sm:$0xff]
        %v450 = vld [vmem:[%s335 + $0x160] sm:$0xff]
        %v451 = vld [vmem:[%s335 + $0x168] sm:$0xff]
        %v452 = vld [vmem:[%s335 + $0x170] sm:$0xff]
        %v453 = vld [vmem:[%s335 + $0x178] sm:$0xff]
        %v454 = vld [vmem:[%s335 + $0x180] sm:$0xff]
        %v455 = vld [vmem:[%s335 + $0x188] sm:$0xff]
        %v456 = vld [vmem:[%s335 + $0x190] sm:$0xff]
        %v457 = vld [vmem:[%s335 + $0x198] sm:$0xff]
        %v458 = vld [vmem:[%s335 + $0x1a0] sm:$0xff]
        %v459 = vld [vmem:[%s335 + $0x1a8] sm:$0xff]
        %v460 = vld [vmem:[%s335 + $0x1b0] sm:$0xff]
        %v461 = vld [vmem:[%s335 + $0x1b8] sm:$0xff]
        %v462 = vld [vmem:[%s335 + $0x1c0] sm:$0xff]
        %v463 = vld [vmem:[%s335 + $0x1c8] sm:$0xff]
        %v464 = vld [vmem:[%s335 + $0x1d0] sm:$0xff]
        %v465 = vld [vmem:[%s335 + $0x1d8] sm:$0xff]
        %v466 = vld [vmem:[%s335 + $0x1e0] sm:$0xff]
        %v467 = vld [vmem:[%s335 + $0x1e8] sm:$0xff]
        %v468 = vld [vmem:[%s335 + $0x1f0] sm:$0xff]
        %v469 = vld [vmem:[%s335 + $0x1f8] sm:$0xff]
        %v470 = vpack.c.bf16 %v422, %v406
        %v471 = vpack.c.bf16 %v423, %v407
        %v472 = vpack.c.bf16 %v424, %v408
        %v473 = vpack.c.bf16 %v425, %v409
        %v474 = vpack.c.bf16 %v426, %v410
        %v475 = vpack.c.bf16 %v427, %v411
        %v476 = vpack.c.bf16 %v428, %v412
        %v477 = vpack.c.bf16 %v429, %v413
        %v478 = vpack.c.bf16 %v430, %v414
        %v479 = vpack.c.bf16 %v431, %v415
        %v480 = vpack.c.bf16 %v432, %v416
        %v481 = vpack.c.bf16 %v433, %v417
        %v482 = vpack.c.bf16 %v434, %v418
        %v483 = vpack.c.bf16 %v435, %v419
        %v484 = vpack.c.bf16 %v436, %v420
        %v485 = vpack.c.bf16 %v437, %v421
        %v486 = vpack.c.bf16 %v454, %v438
        %v487 = vpack.c.bf16 %v455, %v439
        %v488 = vpack.c.bf16 %v456, %v440
        %v489 = vpack.c.bf16 %v457, %v441
        %v490 = vpack.c.bf16 %v458, %v442
        %v491 = vpack.c.bf16 %v459, %v443
        %v492 = vpack.c.bf16 %v460, %v444
        %v493 = vpack.c.bf16 %v461, %v445
        %v494 = vpack.c.bf16 %v462, %v446
        %v495 = vpack.c.bf16 %v463, %v447
        %v496 = vpack.c.bf16 %v464, %v448
        %v497 = vpack.c.bf16 %v465, %v449
        %v498 = vpack.c.bf16 %v466, %v450
        %v499 = vpack.c.bf16 %v467, %v451
        %v500 = vpack.c.bf16 %v468, %v452
        %v501 = vpack.c.bf16 %v469, %v453
        %v502 = vld [vmem:[%s402] sm:$0xff]
        %v503 = vld [vmem:[%s402 + $0x8] sm:$0xff]
        %v504 = vld [vmem:[%s402 + $0x10] sm:$0xff]
        %v505 = vld [vmem:[%s402 + $0x18] sm:$0xff]
        %v506 = vld [vmem:[#allocation11] ss:$8 sm:$0xf]
        %s507 = scalar_lea.vmem [#allocation11], 1
        %v508 = vld [vmem:[%s507] ss:$8 sm:$0xf]
        %s509 = scalar_lea.vmem [#allocation11], 2
        %v510 = vld [vmem:[%s509] ss:$8 sm:$0xf]
        %v511 = vld [vmem:[#allocation11 + $0x3] ss:$0 sm:$0xff]
        %v512 = vld [vmem:[#allocation11 + $0xb] ss:$0 sm:$0xff]
        %v513 = vld [vmem:[#allocation11 + $0x13] ss:$0 sm:$0xff]
        %v514 = vld [vmem:[#allocation11 + $0x1b] ss:$0 sm:$0xff]
        %v515 = vld [vmem:[#allocation11 + $0x4] ss:$0 sm:$0xff]
        %v516 = vld [vmem:[#allocation5] sm:$0xff]
        %v517 = vld [vmem:[#allocation5 + $0x8] sm:$0xff]
        %v518 = vld [vmem:[#allocation5 + $0x10] sm:$0xff]
        %v519 = vld [vmem:[#allocation5 + $0x18] sm:$0xff]
        %v520 = vld [vmem:[#allocation5 + $0x20] sm:$0xff]
        %v521 = vld [vmem:[#allocation5 + $0x28] sm:$0xff]
        %v522 = vld [vmem:[#allocation5 + $0x30] sm:$0xff]
        %v523 = vld [vmem:[#allocation5 + $0x38] sm:$0xff]
        %v524 = vld [vmem:[#allocation5 + $0x40] sm:$0xff]
        %v525 = vld [vmem:[#allocation5 + $0x48] sm:$0xff]
        %v526 = vld [vmem:[#allocation5 + $0x50] sm:$0xff]
        %v527 = vld [vmem:[#allocation5 + $0x58] sm:$0xff]
        %v528 = vld [vmem:[#allocation5 + $0x60] sm:$0xff]
        %v529 = vld [vmem:[#allocation5 + $0x68] sm:$0xff]
        %v530 = vld [vmem:[#allocation5 + $0x70] sm:$0xff]
        %v531 = vld [vmem:[#allocation5 + $0x78] sm:$0xff]
        %v532 = vld [vmem:[#allocation5 + $0x80] sm:$0xff]
        %v533 = vld [vmem:[#allocation5 + $0x88] sm:$0xff]
        %v534 = vld [vmem:[#allocation5 + $0x90] sm:$0xff]
        %v535 = vld [vmem:[#allocation5 + $0x98] sm:$0xff]
        %v536 = vld [vmem:[#allocation5 + $0xa0] sm:$0xff]
        %v537 = vld [vmem:[#allocation5 + $0xa8] sm:$0xff]
        %v538 = vld [vmem:[#allocation5 + $0xb0] sm:$0xff]
        %v539 = vld [vmem:[#allocation5 + $0xb8] sm:$0xff]
        %v540 = vld [vmem:[#allocation5 + $0xc0] sm:$0xff]
        %v541 = vld [vmem:[#allocation5 + $0xc8] sm:$0xff]
        %v542 = vld [vmem:[#allocation5 + $0xd0] sm:$0xff]
        %v543 = vld [vmem:[#allocation5 + $0xd8] sm:$0xff]
        %v544 = vld [vmem:[#allocation5 + $0xe0] sm:$0xff]
        %v545 = vld [vmem:[#allocation5 + $0xe8] sm:$0xff]
        %v546 = vld [vmem:[#allocation5 + $0xf0] sm:$0xff]
        %v547 = vld [vmem:[#allocation5 + $0xf8] sm:$0xff]
        %v548 = vld [vmem:[#allocation5 + $0x100] sm:$0xff]
        %v549 = vld [vmem:[#allocation5 + $0x108] sm:$0xff]
        %v550 = vld [vmem:[#allocation5 + $0x110] sm:$0xff]
        %v551 = vld [vmem:[#allocation5 + $0x118] sm:$0xff]
        %v552 = vld [vmem:[#allocation5 + $0x120] sm:$0xff]
        %v553 = vld [vmem:[#allocation5 + $0x128] sm:$0xff]
        %v554 = vld [vmem:[#allocation5 + $0x130] sm:$0xff]
        %v555 = vld [vmem:[#allocation5 + $0x138] sm:$0xff]
        %v556 = vld [vmem:[#allocation5 + $0x140] sm:$0xff]
        %v557 = vld [vmem:[#allocation5 + $0x148] sm:$0xff]
        %v558 = vld [vmem:[#allocation5 + $0x150] sm:$0xff]
        %v559 = vld [vmem:[#allocation5 + $0x158] sm:$0xff]
        %v560 = vld [vmem:[#allocation5 + $0x160] sm:$0xff]
        %v561 = vld [vmem:[#allocation5 + $0x168] sm:$0xff]
        %v562 = vld [vmem:[#allocation5 + $0x170] sm:$0xff]
        %v563 = vld [vmem:[#allocation5 + $0x178] sm:$0xff]
        %v564 = vld [vmem:[#allocation5 + $0x180] sm:$0xff]
        %v565 = vld [vmem:[#allocation5 + $0x188] sm:$0xff]
        %v566 = vld [vmem:[#allocation5 + $0x190] sm:$0xff]
        %v567 = vld [vmem:[#allocation5 + $0x198] sm:$0xff]
        %v568 = vld [vmem:[#allocation5 + $0x1a0] sm:$0xff]
        %v569 = vld [vmem:[#allocation5 + $0x1a8] sm:$0xff]
        %v570 = vld [vmem:[#allocation5 + $0x1b0] sm:$0xff]
        %v571 = vld [vmem:[#allocation5 + $0x1b8] sm:$0xff]
        %v572 = vld [vmem:[#allocation5 + $0x1c0] sm:$0xff]
        %v573 = vld [vmem:[#allocation5 + $0x1c8] sm:$0xff]
        %v574 = vld [vmem:[#allocation5 + $0x1d0] sm:$0xff]
        %v575 = vld [vmem:[#allocation5 + $0x1d8] sm:$0xff]
        %v576 = vld [vmem:[#allocation5 + $0x1e0] sm:$0xff]
        %v577 = vld [vmem:[#allocation5 + $0x1e8] sm:$0xff]
        %v578 = vld [vmem:[#allocation5 + $0x1f0] sm:$0xff]
        %v579 = vld [vmem:[#allocation5 + $0x1f8] sm:$0xff]
        %v580 = vld [vmem:[#allocation5 + $0x200] sm:$0xff]
        %v581 = vld [vmem:[#allocation5 + $0x208] sm:$0xff]
        %v582 = vld [vmem:[#allocation5 + $0x210] sm:$0xff]
        %v583 = vld [vmem:[#allocation5 + $0x218] sm:$0xff]
        %v584 = vld [vmem:[#allocation5 + $0x220] sm:$0xff]
        %v585 = vld [vmem:[#allocation5 + $0x228] sm:$0xff]
        %v586 = vld [vmem:[#allocation5 + $0x230] sm:$0xff]
        %v587 = vld [vmem:[#allocation5 + $0x238] sm:$0xff]
        %v588 = vld [vmem:[#allocation5 + $0x240] sm:$0xff]
        %v589 = vld [vmem:[#allocation5 + $0x248] sm:$0xff]
        %v590 = vld [vmem:[#allocation5 + $0x250] sm:$0xff]
        %v591 = vld [vmem:[#allocation5 + $0x258] sm:$0xff]
        %v592 = vld [vmem:[#allocation5 + $0x260] sm:$0xff]
        %v593 = vld [vmem:[#allocation5 + $0x268] sm:$0xff]
        %v594 = vld [vmem:[#allocation5 + $0x270] sm:$0xff]
        %v595 = vld [vmem:[#allocation5 + $0x278] sm:$0xff]
        %v596 = vld [vmem:[#allocation5 + $0x280] sm:$0xff]
        %v597 = vld [vmem:[#allocation5 + $0x288] sm:$0xff]
        %v598 = vld [vmem:[#allocation5 + $0x290] sm:$0xff]
        %v599 = vld [vmem:[#allocation5 + $0x298] sm:$0xff]
        %v600 = vld [vmem:[#allocation5 + $0x2a0] sm:$0xff]
        %v601 = vld [vmem:[#allocation5 + $0x2a8] sm:$0xff]
        %v602 = vld [vmem:[#allocation5 + $0x2b0] sm:$0xff]
        %v603 = vld [vmem:[#allocation5 + $0x2b8] sm:$0xff]
        %v604 = vld [vmem:[#allocation5 + $0x2c0] sm:$0xff]
        %v605 = vld [vmem:[#allocation5 + $0x2c8] sm:$0xff]
        %v606 = vld [vmem:[#allocation5 + $0x2d0] sm:$0xff]
        %v607 = vld [vmem:[#allocation5 + $0x2d8] sm:$0xff]
        %v608 = vld [vmem:[#allocation5 + $0x2e0] sm:$0xff]
        %v609 = vld [vmem:[#allocation5 + $0x2e8] sm:$0xff]
        %v610 = vld [vmem:[#allocation5 + $0x2f0] sm:$0xff]
        %v611 = vld [vmem:[#allocation5 + $0x2f8] sm:$0xff]
        %v612 = vld [vmem:[#allocation5 + $0x300] sm:$0xff]
        %v613 = vld [vmem:[#allocation5 + $0x308] sm:$0xff]
        %v614 = vld [vmem:[#allocation5 + $0x310] sm:$0xff]
        %v615 = vld [vmem:[#allocation5 + $0x318] sm:$0xff]
        %v616 = vld [vmem:[#allocation5 + $0x320] sm:$0xff]
        %v617 = vld [vmem:[#allocation5 + $0x328] sm:$0xff]
        %v618 = vld [vmem:[#allocation5 + $0x330] sm:$0xff]
        %v619 = vld [vmem:[#allocation5 + $0x338] sm:$0xff]
        %v620 = vld [vmem:[#allocation5 + $0x340] sm:$0xff]
        %v621 = vld [vmem:[#allocation5 + $0x348] sm:$0xff]
        %v622 = vld [vmem:[#allocation5 + $0x350] sm:$0xff]
        %v623 = vld [vmem:[#allocation5 + $0x358] sm:$0xff]
        %v624 = vld [vmem:[#allocation5 + $0x360] sm:$0xff]
        %v625 = vld [vmem:[#allocation5 + $0x368] sm:$0xff]
        %v626 = vld [vmem:[#allocation5 + $0x370] sm:$0xff]
        %v627 = vld [vmem:[#allocation5 + $0x378] sm:$0xff]
        %v628 = vld [vmem:[#allocation5 + $0x380] sm:$0xff]
        %v629 = vld [vmem:[#allocation5 + $0x388] sm:$0xff]
        %v630 = vld [vmem:[#allocation5 + $0x390] sm:$0xff]
        %v631 = vld [vmem:[#allocation5 + $0x398] sm:$0xff]
        %v632 = vld [vmem:[#allocation5 + $0x3a0] sm:$0xff]
        %v633 = vld [vmem:[#allocation5 + $0x3a8] sm:$0xff]
        %v634 = vld [vmem:[#allocation5 + $0x3b0] sm:$0xff]
        %v635 = vld [vmem:[#allocation5 + $0x3b8] sm:$0xff]
        %v636 = vld [vmem:[#allocation5 + $0x3c0] sm:$0xff]
        %v637 = vld [vmem:[#allocation5 + $0x3c8] sm:$0xff]
        %v638 = vld [vmem:[#allocation5 + $0x3d0] sm:$0xff]
        %v639 = vld [vmem:[#allocation5 + $0x3d8] sm:$0xff]
        %v640 = vld [vmem:[#allocation5 + $0x3e0] sm:$0xff]
        %v641 = vld [vmem:[#allocation5 + $0x3e8] sm:$0xff]
        %v642 = vld [vmem:[#allocation5 + $0x3f0] sm:$0xff]
        %v643 = vld [vmem:[#allocation5 + $0x3f8] sm:$0xff]
        %v644 = vld [vmem:[#allocation5 + $0x400] sm:$0xff]
        %v645 = vld [vmem:[#allocation5 + $0x408] sm:$0xff]
        %v646 = vld [vmem:[#allocation5 + $0x410] sm:$0xff]
        %v647 = vld [vmem:[#allocation5 + $0x418] sm:$0xff]
        %v648 = vld [vmem:[#allocation5 + $0x420] sm:$0xff]
        %v649 = vld [vmem:[#allocation5 + $0x428] sm:$0xff]
        %v650 = vld [vmem:[#allocation5 + $0x430] sm:$0xff]
        %v651 = vld [vmem:[#allocation5 + $0x438] sm:$0xff]
        %v652 = vld [vmem:[#allocation5 + $0x440] sm:$0xff]
        %v653 = vld [vmem:[#allocation5 + $0x448] sm:$0xff]
        %v654 = vld [vmem:[#allocation5 + $0x450] sm:$0xff]
        %v655 = vld [vmem:[#allocation5 + $0x458] sm:$0xff]
        %v656 = vld [vmem:[#allocation5 + $0x460] sm:$0xff]
        %v657 = vld [vmem:[#allocation5 + $0x468] sm:$0xff]
        %v658 = vld [vmem:[#allocation5 + $0x470] sm:$0xff]
        %v659 = vld [vmem:[#allocation5 + $0x478] sm:$0xff]
        %v660 = vld [vmem:[#allocation5 + $0x480] sm:$0xff]
        %v661 = vld [vmem:[#allocation5 + $0x488] sm:$0xff]
        %v662 = vld [vmem:[#allocation5 + $0x490] sm:$0xff]
        %v663 = vld [vmem:[#allocation5 + $0x498] sm:$0xff]
        %v664 = vld [vmem:[#allocation5 + $0x4a0] sm:$0xff]
        %v665 = vld [vmem:[#allocation5 + $0x4a8] sm:$0xff]
        %v666 = vld [vmem:[#allocation5 + $0x4b0] sm:$0xff]
        %v667 = vld [vmem:[#allocation5 + $0x4b8] sm:$0xff]
        %v668 = vld [vmem:[#allocation5 + $0x4c0] sm:$0xff]
        %v669 = vld [vmem:[#allocation5 + $0x4c8] sm:$0xff]
        %v670 = vld [vmem:[#allocation5 + $0x4d0] sm:$0xff]
        %v671 = vld [vmem:[#allocation5 + $0x4d8] sm:$0xff]
        %v672 = vld [vmem:[#allocation5 + $0x4e0] sm:$0xff]
        %v673 = vld [vmem:[#allocation5 + $0x4e8] sm:$0xff]
        %v674 = vld [vmem:[#allocation5 + $0x4f0] sm:$0xff]
        %v675 = vld [vmem:[#allocation5 + $0x4f8] sm:$0xff]
        %v676 = vld [vmem:[#allocation5 + $0x500] sm:$0xff]
        %v677 = vld [vmem:[#allocation5 + $0x508] sm:$0xff]
        %v678 = vld [vmem:[#allocation5 + $0x510] sm:$0xff]
        %v679 = vld [vmem:[#allocation5 + $0x518] sm:$0xff]
        %v680 = vld [vmem:[#allocation5 + $0x520] sm:$0xff]
        %v681 = vld [vmem:[#allocation5 + $0x528] sm:$0xff]
        %v682 = vld [vmem:[#allocation5 + $0x530] sm:$0xff]
        %v683 = vld [vmem:[#allocation5 + $0x538] sm:$0xff]
        %v684 = vld [vmem:[#allocation5 + $0x540] sm:$0xff]
        %v685 = vld [vmem:[#allocation5 + $0x548] sm:$0xff]
        %v686 = vld [vmem:[#allocation5 + $0x550] sm:$0xff]
        %v687 = vld [vmem:[#allocation5 + $0x558] sm:$0xff]
        %v688 = vld [vmem:[#allocation5 + $0x560] sm:$0xff]
        %v689 = vld [vmem:[#allocation5 + $0x568] sm:$0xff]
        %v690 = vld [vmem:[#allocation5 + $0x570] sm:$0xff]
        %v691 = vld [vmem:[#allocation5 + $0x578] sm:$0xff]
        %v692 = vld [vmem:[#allocation5 + $0x580] sm:$0xff]
        %v693 = vld [vmem:[#allocation5 + $0x588] sm:$0xff]
        %v694 = vld [vmem:[#allocation5 + $0x590] sm:$0xff]
        %v695 = vld [vmem:[#allocation5 + $0x598] sm:$0xff]
        %v696 = vld [vmem:[#allocation5 + $0x5a0] sm:$0xff]
        %v697 = vld [vmem:[#allocation5 + $0x5a8] sm:$0xff]
        %v698 = vld [vmem:[#allocation5 + $0x5b0] sm:$0xff]
        %v699 = vld [vmem:[#allocation5 + $0x5b8] sm:$0xff]
        %v700 = vld [vmem:[#allocation5 + $0x5c0] sm:$0xff]
        %v701 = vld [vmem:[#allocation5 + $0x5c8] sm:$0xff]
        %v702 = vld [vmem:[#allocation5 + $0x5d0] sm:$0xff]
        %v703 = vld [vmem:[#allocation5 + $0x5d8] sm:$0xff]
        %v704 = vld [vmem:[#allocation5 + $0x5e0] sm:$0xff]
        %v705 = vld [vmem:[#allocation5 + $0x5e8] sm:$0xff]
        %v706 = vld [vmem:[#allocation5 + $0x5f0] sm:$0xff]
        %v707 = vld [vmem:[#allocation5 + $0x5f8] sm:$0xff]
        %v708 = vld [vmem:[#allocation5 + $0x600] sm:$0xff]
        %v709 = vld [vmem:[#allocation5 + $0x608] sm:$0xff]
        %v710 = vld [vmem:[#allocation5 + $0x610] sm:$0xff]
        %v711 = vld [vmem:[#allocation5 + $0x618] sm:$0xff]
        %v712 = vld [vmem:[#allocation5 + $0x620] sm:$0xff]
        %v713 = vld [vmem:[#allocation5 + $0x628] sm:$0xff]
        %v714 = vld [vmem:[#allocation5 + $0x630] sm:$0xff]
        %v715 = vld [vmem:[#allocation5 + $0x638] sm:$0xff]
        %v716 = vld [vmem:[#allocation5 + $0x640] sm:$0xff]
        %v717 = vld [vmem:[#allocation5 + $0x648] sm:$0xff]
        %v718 = vld [vmem:[#allocation5 + $0x650] sm:$0xff]
        %v719 = vld [vmem:[#allocation5 + $0x658] sm:$0xff]
        %v720 = vld [vmem:[#allocation5 + $0x660] sm:$0xff]
        %v721 = vld [vmem:[#allocation5 + $0x668] sm:$0xff]
        %v722 = vld [vmem:[#allocation5 + $0x670] sm:$0xff]
        %v723 = vld [vmem:[#allocation5 + $0x678] sm:$0xff]
        %v724 = vld [vmem:[#allocation5 + $0x680] sm:$0xff]
        %v725 = vld [vmem:[#allocation5 + $0x688] sm:$0xff]
        %v726 = vld [vmem:[#allocation5 + $0x690] sm:$0xff]
        %v727 = vld [vmem:[#allocation5 + $0x698] sm:$0xff]
        %v728 = vld [vmem:[#allocation5 + $0x6a0] sm:$0xff]
        %v729 = vld [vmem:[#allocation5 + $0x6a8] sm:$0xff]
        %v730 = vld [vmem:[#allocation5 + $0x6b0] sm:$0xff]
        %v731 = vld [vmem:[#allocation5 + $0x6b8] sm:$0xff]
        %v732 = vld [vmem:[#allocation5 + $0x6c0] sm:$0xff]
        %v733 = vld [vmem:[#allocation5 + $0x6c8] sm:$0xff]
        %v734 = vld [vmem:[#allocation5 + $0x6d0] sm:$0xff]
        %v735 = vld [vmem:[#allocation5 + $0x6d8] sm:$0xff]
        %v736 = vld [vmem:[#allocation5 + $0x6e0] sm:$0xff]
        %v737 = vld [vmem:[#allocation5 + $0x6e8] sm:$0xff]
        %v738 = vld [vmem:[#allocation5 + $0x6f0] sm:$0xff]
        %v739 = vld [vmem:[#allocation5 + $0x6f8] sm:$0xff]
        %v740 = vld [vmem:[#allocation5 + $0x700] sm:$0xff]
        %v741 = vld [vmem:[#allocation5 + $0x708] sm:$0xff]
        %v742 = vld [vmem:[#allocation5 + $0x710] sm:$0xff]
        %v743 = vld [vmem:[#allocation5 + $0x718] sm:$0xff]
        %v744 = vld [vmem:[#allocation5 + $0x720] sm:$0xff]
        %v745 = vld [vmem:[#allocation5 + $0x728] sm:$0xff]
        %v746 = vld [vmem:[#allocation5 + $0x730] sm:$0xff]
        %v747 = vld [vmem:[#allocation5 + $0x738] sm:$0xff]
        %v748 = vld [vmem:[#allocation5 + $0x740] sm:$0xff]
        %v749 = vld [vmem:[#allocation5 + $0x748] sm:$0xff]
        %v750 = vld [vmem:[#allocation5 + $0x750] sm:$0xff]
        %v751 = vld [vmem:[#allocation5 + $0x758] sm:$0xff]
        %v752 = vld [vmem:[#allocation5 + $0x760] sm:$0xff]
        %v753 = vld [vmem:[#allocation5 + $0x768] sm:$0xff]
        %v754 = vld [vmem:[#allocation5 + $0x770] sm:$0xff]
        %v755 = vld [vmem:[#allocation5 + $0x778] sm:$0xff]
        %v756 = vld [vmem:[#allocation5 + $0x780] sm:$0xff]
        %v757 = vld [vmem:[#allocation5 + $0x788] sm:$0xff]
        %v758 = vld [vmem:[#allocation5 + $0x790] sm:$0xff]
        %v759 = vld [vmem:[#allocation5 + $0x798] sm:$0xff]
        %v760 = vld [vmem:[#allocation5 + $0x7a0] sm:$0xff]
        %v761 = vld [vmem:[#allocation5 + $0x7a8] sm:$0xff]
        %v762 = vld [vmem:[#allocation5 + $0x7b0] sm:$0xff]
        %v763 = vld [vmem:[#allocation5 + $0x7b8] sm:$0xff]
        %v764 = vld [vmem:[#allocation5 + $0x7c0] sm:$0xff]
        %v765 = vld [vmem:[#allocation5 + $0x7c8] sm:$0xff]
        %v766 = vld [vmem:[#allocation5 + $0x7d0] sm:$0xff]
        %v767 = vld [vmem:[#allocation5 + $0x7d8] sm:$0xff]
        %v768 = vld [vmem:[#allocation5 + $0x7e0] sm:$0xff]
        %v769 = vld [vmem:[#allocation5 + $0x7e8] sm:$0xff]
        %v770 = vld [vmem:[#allocation5 + $0x7f0] sm:$0xff]
        %v771 = vld [vmem:[#allocation5 + $0x7f8] sm:$0xff]
        %v772 = vld [vmem:[#allocation5 + $0x800] sm:$0xff]
        %v773 = vld [vmem:[#allocation5 + $0x808] sm:$0xff]
        %v774 = vld [vmem:[#allocation5 + $0x810] sm:$0xff]
        %v775 = vld [vmem:[#allocation5 + $0x818] sm:$0xff]
        %v776 = vld [vmem:[#allocation5 + $0x820] sm:$0xff]
        %v777 = vld [vmem:[#allocation5 + $0x828] sm:$0xff]
        %v778 = vld [vmem:[#allocation5 + $0x830] sm:$0xff]
        %v779 = vld [vmem:[#allocation5 + $0x838] sm:$0xff]
        %v780 = vld [vmem:[#allocation5 + $0x840] sm:$0xff]
        %v781 = vld [vmem:[#allocation5 + $0x848] sm:$0xff]
        %v782 = vld [vmem:[#allocation5 + $0x850] sm:$0xff]
        %v783 = vld [vmem:[#allocation5 + $0x858] sm:$0xff]
        %v784 = vld [vmem:[#allocation5 + $0x860] sm:$0xff]
        %v785 = vld [vmem:[#allocation5 + $0x868] sm:$0xff]
        %v786 = vld [vmem:[#allocation5 + $0x870] sm:$0xff]
        %v787 = vld [vmem:[#allocation5 + $0x878] sm:$0xff]
        %v788 = vld [vmem:[#allocation5 + $0x880] sm:$0xff]
        %v789 = vld [vmem:[#allocation5 + $0x888] sm:$0xff]
        %v790 = vld [vmem:[#allocation5 + $0x890] sm:$0xff]
        %v791 = vld [vmem:[#allocation5 + $0x898] sm:$0xff]
        %v792 = vld [vmem:[#allocation5 + $0x8a0] sm:$0xff]
        %v793 = vld [vmem:[#allocation5 + $0x8a8] sm:$0xff]
        %v794 = vld [vmem:[#allocation5 + $0x8b0] sm:$0xff]
        %v795 = vld [vmem:[#allocation5 + $0x8b8] sm:$0xff]
        %v796 = vld [vmem:[#allocation5 + $0x8c0] sm:$0xff]
        %v797 = vld [vmem:[#allocation5 + $0x8c8] sm:$0xff]
        %v798 = vld [vmem:[#allocation5 + $0x8d0] sm:$0xff]
        %v799 = vld [vmem:[#allocation5 + $0x8d8] sm:$0xff]
        %v800 = vld [vmem:[#allocation5 + $0x8e0] sm:$0xff]
        %v801 = vld [vmem:[#allocation5 + $0x8e8] sm:$0xff]
        %v802 = vld [vmem:[#allocation5 + $0x8f0] sm:$0xff]
        %v803 = vld [vmem:[#allocation5 + $0x8f8] sm:$0xff]
        %v804 = vld [vmem:[#allocation5 + $0x900] sm:$0xff]
        %v805 = vld [vmem:[#allocation5 + $0x908] sm:$0xff]
        %v806 = vld [vmem:[#allocation5 + $0x910] sm:$0xff]
        %v807 = vld [vmem:[#allocation5 + $0x918] sm:$0xff]
        %v808 = vld [vmem:[#allocation5 + $0x920] sm:$0xff]
        %v809 = vld [vmem:[#allocation5 + $0x928] sm:$0xff]
        %v810 = vld [vmem:[#allocation5 + $0x930] sm:$0xff]
        %v811 = vld [vmem:[#allocation5 + $0x938] sm:$0xff]
        %v812 = vld [vmem:[#allocation5 + $0x940] sm:$0xff]
        %v813 = vld [vmem:[#allocation5 + $0x948] sm:$0xff]
        %v814 = vld [vmem:[#allocation5 + $0x950] sm:$0xff]
        %v815 = vld [vmem:[#allocation5 + $0x958] sm:$0xff]
        %v816 = vld [vmem:[#allocation5 + $0x960] sm:$0xff]
        %v817 = vld [vmem:[#allocation5 + $0x968] sm:$0xff]
        %v818 = vld [vmem:[#allocation5 + $0x970] sm:$0xff]
        %v819 = vld [vmem:[#allocation5 + $0x978] sm:$0xff]
        %v820 = vld [vmem:[#allocation5 + $0x980] sm:$0xff]
        %v821 = vld [vmem:[#allocation5 + $0x988] sm:$0xff]
        %v822 = vld [vmem:[#allocation5 + $0x990] sm:$0xff]
        %v823 = vld [vmem:[#allocation5 + $0x998] sm:$0xff]
        %v824 = vld [vmem:[#allocation5 + $0x9a0] sm:$0xff]
        %v825 = vld [vmem:[#allocation5 + $0x9a8] sm:$0xff]
        %v826 = vld [vmem:[#allocation5 + $0x9b0] sm:$0xff]
        %v827 = vld [vmem:[#allocation5 + $0x9b8] sm:$0xff]
        %v828 = vld [vmem:[#allocation5 + $0x9c0] sm:$0xff]
        %v829 = vld [vmem:[#allocation5 + $0x9c8] sm:$0xff]
        %v830 = vld [vmem:[#allocation5 + $0x9d0] sm:$0xff]
        %v831 = vld [vmem:[#allocation5 + $0x9d8] sm:$0xff]
        %v832 = vld [vmem:[#allocation5 + $0x9e0] sm:$0xff]
        %v833 = vld [vmem:[#allocation5 + $0x9e8] sm:$0xff]
        %v834 = vld [vmem:[#allocation5 + $0x9f0] sm:$0xff]
        %v835 = vld [vmem:[#allocation5 + $0x9f8] sm:$0xff]
        %v836 = vld [vmem:[#allocation5 + $0xa00] sm:$0xff]
        %v837 = vld [vmem:[#allocation5 + $0xa08] sm:$0xff]
        %v838 = vld [vmem:[#allocation5 + $0xa10] sm:$0xff]
        %v839 = vld [vmem:[#allocation5 + $0xa18] sm:$0xff]
        %v840 = vld [vmem:[#allocation5 + $0xa20] sm:$0xff]
        %v841 = vld [vmem:[#allocation5 + $0xa28] sm:$0xff]
        %v842 = vld [vmem:[#allocation5 + $0xa30] sm:$0xff]
        %v843 = vld [vmem:[#allocation5 + $0xa38] sm:$0xff]
        %v844 = vld [vmem:[#allocation5 + $0xa40] sm:$0xff]
        %v845 = vld [vmem:[#allocation5 + $0xa48] sm:$0xff]
        %v846 = vld [vmem:[#allocation5 + $0xa50] sm:$0xff]
        %v847 = vld [vmem:[#allocation5 + $0xa58] sm:$0xff]
        %v848 = vld [vmem:[#allocation5 + $0xa60] sm:$0xff]
        %v849 = vld [vmem:[#allocation5 + $0xa68] sm:$0xff]
        %v850 = vld [vmem:[#allocation5 + $0xa70] sm:$0xff]
        %v851 = vld [vmem:[#allocation5 + $0xa78] sm:$0xff]
        %v852 = vld [vmem:[#allocation5 + $0xa80] sm:$0xff]
        %v853 = vld [vmem:[#allocation5 + $0xa88] sm:$0xff]
        %v854 = vld [vmem:[#allocation5 + $0xa90] sm:$0xff]
        %v855 = vld [vmem:[#allocation5 + $0xa98] sm:$0xff]
        %v856 = vld [vmem:[#allocation5 + $0xaa0] sm:$0xff]
        %v857 = vld [vmem:[#allocation5 + $0xaa8] sm:$0xff]
        %v858 = vld [vmem:[#allocation5 + $0xab0] sm:$0xff]
        %v859 = vld [vmem:[#allocation5 + $0xab8] sm:$0xff]
        %v860 = vld [vmem:[#allocation5 + $0xac0] sm:$0xff]
        %v861 = vld [vmem:[#allocation5 + $0xac8] sm:$0xff]
        %v862 = vld [vmem:[#allocation5 + $0xad0] sm:$0xff]
        %v863 = vld [vmem:[#allocation5 + $0xad8] sm:$0xff]
        %v864 = vld [vmem:[#allocation5 + $0xae0] sm:$0xff]
        %v865 = vld [vmem:[#allocation5 + $0xae8] sm:$0xff]
        %v866 = vld [vmem:[#allocation5 + $0xaf0] sm:$0xff]
        %v867 = vld [vmem:[#allocation5 + $0xaf8] sm:$0xff]
        %v868 = vld [vmem:[#allocation5 + $0xb00] sm:$0xff]
        %v869 = vld [vmem:[#allocation5 + $0xb08] sm:$0xff]
        %v870 = vld [vmem:[#allocation5 + $0xb10] sm:$0xff]
        %v871 = vld [vmem:[#allocation5 + $0xb18] sm:$0xff]
        %v872 = vld [vmem:[#allocation5 + $0xb20] sm:$0xff]
        %v873 = vld [vmem:[#allocation5 + $0xb28] sm:$0xff]
        %v874 = vld [vmem:[#allocation5 + $0xb30] sm:$0xff]
        %v875 = vld [vmem:[#allocation5 + $0xb38] sm:$0xff]
        %v876 = vld [vmem:[#allocation5 + $0xb40] sm:$0xff]
        %v877 = vld [vmem:[#allocation5 + $0xb48] sm:$0xff]
        %v878 = vld [vmem:[#allocation5 + $0xb50] sm:$0xff]
        %v879 = vld [vmem:[#allocation5 + $0xb58] sm:$0xff]
        %v880 = vld [vmem:[#allocation5 + $0xb60] sm:$0xff]
        %v881 = vld [vmem:[#allocation5 + $0xb68] sm:$0xff]
        %v882 = vld [vmem:[#allocation5 + $0xb70] sm:$0xff]
        %v883 = vld [vmem:[#allocation5 + $0xb78] sm:$0xff]
        %v884 = vld [vmem:[#allocation5 + $0xb80] sm:$0xff]
        %v885 = vld [vmem:[#allocation5 + $0xb88] sm:$0xff]
        %v886 = vld [vmem:[#allocation5 + $0xb90] sm:$0xff]
        %v887 = vld [vmem:[#allocation5 + $0xb98] sm:$0xff]
        %v888 = vld [vmem:[#allocation5 + $0xba0] sm:$0xff]
        %v889 = vld [vmem:[#allocation5 + $0xba8] sm:$0xff]
        %v890 = vld [vmem:[#allocation5 + $0xbb0] sm:$0xff]
        %v891 = vld [vmem:[#allocation5 + $0xbb8] sm:$0xff]
        %v892 = vld [vmem:[#allocation5 + $0xbc0] sm:$0xff]
        %v893 = vld [vmem:[#allocation5 + $0xbc8] sm:$0xff]
        %v894 = vld [vmem:[#allocation5 + $0xbd0] sm:$0xff]
        %v895 = vld [vmem:[#allocation5 + $0xbd8] sm:$0xff]
        %v896 = vld [vmem:[#allocation5 + $0xbe0] sm:$0xff]
        %v897 = vld [vmem:[#allocation5 + $0xbe8] sm:$0xff]
        %v898 = vld [vmem:[#allocation5 + $0xbf0] sm:$0xff]
        %v899 = vld [vmem:[#allocation5 + $0xbf8] sm:$0xff]
        %v900 = vld [vmem:[#allocation5 + $0xc00] sm:$0xff]
        %v901 = vld [vmem:[#allocation5 + $0xc08] sm:$0xff]
        %v902 = vld [vmem:[#allocation5 + $0xc10] sm:$0xff]
        %v903 = vld [vmem:[#allocation5 + $0xc18] sm:$0xff]
        %v904 = vld [vmem:[#allocation5 + $0xc20] sm:$0xff]
        %v905 = vld [vmem:[#allocation5 + $0xc28] sm:$0xff]
        %v906 = vld [vmem:[#allocation5 + $0xc30] sm:$0xff]
        %v907 = vld [vmem:[#allocation5 + $0xc38] sm:$0xff]
        %v908 = vld [vmem:[#allocation5 + $0xc40] sm:$0xff]
        %v909 = vld [vmem:[#allocation5 + $0xc48] sm:$0xff]
        %v910 = vld [vmem:[#allocation5 + $0xc50] sm:$0xff]
        %v911 = vld [vmem:[#allocation5 + $0xc58] sm:$0xff]
        %v912 = vld [vmem:[#allocation5 + $0xc60] sm:$0xff]
        %v913 = vld [vmem:[#allocation5 + $0xc68] sm:$0xff]
        %v914 = vld [vmem:[#allocation5 + $0xc70] sm:$0xff]
        %v915 = vld [vmem:[#allocation5 + $0xc78] sm:$0xff]
        %v916 = vld [vmem:[#allocation5 + $0xc80] sm:$0xff]
        %v917 = vld [vmem:[#allocation5 + $0xc88] sm:$0xff]
        %v918 = vld [vmem:[#allocation5 + $0xc90] sm:$0xff]
        %v919 = vld [vmem:[#allocation5 + $0xc98] sm:$0xff]
        %v920 = vld [vmem:[#allocation5 + $0xca0] sm:$0xff]
        %v921 = vld [vmem:[#allocation5 + $0xca8] sm:$0xff]
        %v922 = vld [vmem:[#allocation5 + $0xcb0] sm:$0xff]
        %v923 = vld [vmem:[#allocation5 + $0xcb8] sm:$0xff]
        %v924 = vld [vmem:[#allocation5 + $0xcc0] sm:$0xff]
        %v925 = vld [vmem:[#allocation5 + $0xcc8] sm:$0xff]
        %v926 = vld [vmem:[#allocation5 + $0xcd0] sm:$0xff]
        %v927 = vld [vmem:[#allocation5 + $0xcd8] sm:$0xff]
        %v928 = vld [vmem:[#allocation5 + $0xce0] sm:$0xff]
        %v929 = vld [vmem:[#allocation5 + $0xce8] sm:$0xff]
        %v930 = vld [vmem:[#allocation5 + $0xcf0] sm:$0xff]
        %v931 = vld [vmem:[#allocation5 + $0xcf8] sm:$0xff]
        %v932 = vld [vmem:[#allocation5 + $0xd00] sm:$0xff]
        %v933 = vld [vmem:[#allocation5 + $0xd08] sm:$0xff]
        %v934 = vld [vmem:[#allocation5 + $0xd10] sm:$0xff]
        %v935 = vld [vmem:[#allocation5 + $0xd18] sm:$0xff]
        %v936 = vld [vmem:[#allocation5 + $0xd20] sm:$0xff]
        %v937 = vld [vmem:[#allocation5 + $0xd28] sm:$0xff]
        %v938 = vld [vmem:[#allocation5 + $0xd30] sm:$0xff]
        %v939 = vld [vmem:[#allocation5 + $0xd38] sm:$0xff]
        %v940 = vld [vmem:[#allocation5 + $0xd40] sm:$0xff]
        %v941 = vld [vmem:[#allocation5 + $0xd48] sm:$0xff]
        %v942 = vld [vmem:[#allocation5 + $0xd50] sm:$0xff]
        %v943 = vld [vmem:[#allocation5 + $0xd58] sm:$0xff]
        %v944 = vld [vmem:[#allocation5 + $0xd60] sm:$0xff]
        %v945 = vld [vmem:[#allocation5 + $0xd68] sm:$0xff]
        %v946 = vld [vmem:[#allocation5 + $0xd70] sm:$0xff]
        %v947 = vld [vmem:[#allocation5 + $0xd78] sm:$0xff]
        %v948 = vld [vmem:[#allocation5 + $0xd80] sm:$0xff]
        %v949 = vld [vmem:[#allocation5 + $0xd88] sm:$0xff]
        %v950 = vld [vmem:[#allocation5 + $0xd90] sm:$0xff]
        %v951 = vld [vmem:[#allocation5 + $0xd98] sm:$0xff]
        %v952 = vld [vmem:[#allocation5 + $0xda0] sm:$0xff]
        %v953 = vld [vmem:[#allocation5 + $0xda8] sm:$0xff]
        %v954 = vld [vmem:[#allocation5 + $0xdb0] sm:$0xff]
        %v955 = vld [vmem:[#allocation5 + $0xdb8] sm:$0xff]
        %v956 = vld [vmem:[#allocation5 + $0xdc0] sm:$0xff]
        %v957 = vld [vmem:[#allocation5 + $0xdc8] sm:$0xff]
        %v958 = vld [vmem:[#allocation5 + $0xdd0] sm:$0xff]
        %v959 = vld [vmem:[#allocation5 + $0xdd8] sm:$0xff]
        %v960 = vld [vmem:[#allocation5 + $0xde0] sm:$0xff]
        %v961 = vld [vmem:[#allocation5 + $0xde8] sm:$0xff]
        %v962 = vld [vmem:[#allocation5 + $0xdf0] sm:$0xff]
        %v963 = vld [vmem:[#allocation5 + $0xdf8] sm:$0xff]
        %v964 = vld [vmem:[#allocation5 + $0xe00] sm:$0xff]
        %v965 = vld [vmem:[#allocation5 + $0xe08] sm:$0xff]
        %v966 = vld [vmem:[#allocation5 + $0xe10] sm:$0xff]
        %v967 = vld [vmem:[#allocation5 + $0xe18] sm:$0xff]
        %v968 = vld [vmem:[#allocation5 + $0xe20] sm:$0xff]
        %v969 = vld [vmem:[#allocation5 + $0xe28] sm:$0xff]
        %v970 = vld [vmem:[#allocation5 + $0xe30] sm:$0xff]
        %v971 = vld [vmem:[#allocation5 + $0xe38] sm:$0xff]
        %v972 = vld [vmem:[#allocation5 + $0xe40] sm:$0xff]
        %v973 = vld [vmem:[#allocation5 + $0xe48] sm:$0xff]
        %v974 = vld [vmem:[#allocation5 + $0xe50] sm:$0xff]
        %v975 = vld [vmem:[#allocation5 + $0xe58] sm:$0xff]
        %v976 = vld [vmem:[#allocation5 + $0xe60] sm:$0xff]
        %v977 = vld [vmem:[#allocation5 + $0xe68] sm:$0xff]
        %v978 = vld [vmem:[#allocation5 + $0xe70] sm:$0xff]
        %v979 = vld [vmem:[#allocation5 + $0xe78] sm:$0xff]
        %v980 = vld [vmem:[#allocation5 + $0xe80] sm:$0xff]
        %v981 = vld [vmem:[#allocation5 + $0xe88] sm:$0xff]
        %v982 = vld [vmem:[#allocation5 + $0xe90] sm:$0xff]
        %v983 = vld [vmem:[#allocation5 + $0xe98] sm:$0xff]
        %v984 = vld [vmem:[#allocation5 + $0xea0] sm:$0xff]
        %v985 = vld [vmem:[#allocation5 + $0xea8] sm:$0xff]
        %v986 = vld [vmem:[#allocation5 + $0xeb0] sm:$0xff]
        %v987 = vld [vmem:[#allocation5 + $0xeb8] sm:$0xff]
        %v988 = vld [vmem:[#allocation5 + $0xec0] sm:$0xff]
        %v989 = vld [vmem:[#allocation5 + $0xec8] sm:$0xff]
        %v990 = vld [vmem:[#allocation5 + $0xed0] sm:$0xff]
        %v991 = vld [vmem:[#allocation5 + $0xed8] sm:$0xff]
        %v992 = vld [vmem:[#allocation5 + $0xee0] sm:$0xff]
        %v993 = vld [vmem:[#allocation5 + $0xee8] sm:$0xff]
        %v994 = vld [vmem:[#allocation5 + $0xef0] sm:$0xff]
        %v995 = vld [vmem:[#allocation5 + $0xef8] sm:$0xff]
        %v996 = vld [vmem:[#allocation5 + $0xf00] sm:$0xff]
        %v997 = vld [vmem:[#allocation5 + $0xf08] sm:$0xff]
        %v998 = vld [vmem:[#allocation5 + $0xf10] sm:$0xff]
        %v999 = vld [vmem:[#allocation5 + $0xf18] sm:$0xff]
        %v1000 = vld [vmem:[#allocation5 + $0xf20] sm:$0xff]
        %v1001 = vld [vmem:[#allocation5 + $0xf28] sm:$0xff]
        %v1002 = vld [vmem:[#allocation5 + $0xf30] sm:$0xff]
        %v1003 = vld [vmem:[#allocation5 + $0xf38] sm:$0xff]
        %v1004 = vld [vmem:[#allocation5 + $0xf40] sm:$0xff]
        %v1005 = vld [vmem:[#allocation5 + $0xf48] sm:$0xff]
        %v1006 = vld [vmem:[#allocation5 + $0xf50] sm:$0xff]
        %v1007 = vld [vmem:[#allocation5 + $0xf58] sm:$0xff]
        %v1008 = vld [vmem:[#allocation5 + $0xf60] sm:$0xff]
        %v1009 = vld [vmem:[#allocation5 + $0xf68] sm:$0xff]
        %v1010 = vld [vmem:[#allocation5 + $0xf70] sm:$0xff]
        %v1011 = vld [vmem:[#allocation5 + $0xf78] sm:$0xff]
        %v1012 = vld [vmem:[#allocation5 + $0xf80] sm:$0xff]
        %v1013 = vld [vmem:[#allocation5 + $0xf88] sm:$0xff]
        %v1014 = vld [vmem:[#allocation5 + $0xf90] sm:$0xff]
        %v1015 = vld [vmem:[#allocation5 + $0xf98] sm:$0xff]
        %1017 = vset.pattern.permute.xlu0 0
        %1018 = vperm.xlu0 %1017, %v502
        %v1019 = vpop.permute.xlu0 %1018
        %1022 = vset.pattern.permute.xlu0 0
        %1023 = vperm.xlu0 %1022, %v503
        %v1024 = vpop.permute.xlu0 %1023
        %1027 = vset.pattern.permute.xlu0 0
        %1028 = vperm.xlu0 %1027, %v504
        %v1029 = vpop.permute.xlu0 %1028
        %1032 = vset.pattern.permute.xlu0 0
        %1033 = vperm.xlu0 %1032, %v505
        %v1034 = vpop.permute.xlu0 %1033
        %v1037 = vperm.slane %v506, 0
        %v1038 = vperm.slane %v506, 1
        %v1039 = vperm.slane %v506, 2
        %v1040 = vperm.slane %v506, 3
        %v1045 = vmul.f32 %v1019, %v1037
        %v1046 = vmul.f32 %v1019, %v1038
        %v1047 = vmul.f32 %v1019, %v1039
        %v1048 = vmul.f32 %v1019, %v1040
        %v1049 = vmul.f32 %v1024, %v1037
        %v1050 = vmul.f32 %v1024, %v1038
        %v1051 = vmul.f32 %v1024, %v1039
        %v1052 = vmul.f32 %v1024, %v1040
        %v1053 = vmul.f32 %v1029, %v1037
        %v1054 = vmul.f32 %v1029, %v1038
        %v1055 = vmul.f32 %v1029, %v1039
        %v1056 = vmul.f32 %v1029, %v1040
        %v1057 = vmul.f32 %v1034, %v1037
        %v1058 = vmul.f32 %v1034, %v1038
        %v1059 = vmul.f32 %v1034, %v1039
        %v1060 = vmul.f32 %v1034, %v1040
        %v1561 = vunpack.c.l.b16 %v516
        %v1562 = vunpack.c.h.b16 %v516
        %v1563 = vunpack.c.l.b16 %v517
        %v1564 = vunpack.c.h.b16 %v517
        %v1565 = vunpack.c.l.b16 %v518
        %v1566 = vunpack.c.h.b16 %v518
        %v1567 = vunpack.c.l.b16 %v519
        %v1568 = vunpack.c.h.b16 %v519
        %v1569 = vunpack.c.l.b16 %v520
        %v1570 = vunpack.c.h.b16 %v520
        %v1571 = vunpack.c.l.b16 %v521
        %v1572 = vunpack.c.h.b16 %v521
        %v1573 = vunpack.c.l.b16 %v522
        %v1574 = vunpack.c.h.b16 %v522
        %v1575 = vunpack.c.l.b16 %v523
        %v1576 = vunpack.c.h.b16 %v523
        %v1577 = vunpack.c.l.b16 %v524
        %v1578 = vunpack.c.h.b16 %v524
        %v1579 = vunpack.c.l.b16 %v525
        %v1580 = vunpack.c.h.b16 %v525
        %v1581 = vunpack.c.l.b16 %v526
        %v1582 = vunpack.c.h.b16 %v526
        %v1583 = vunpack.c.l.b16 %v527
        %v1584 = vunpack.c.h.b16 %v527
        %v1585 = vunpack.c.l.b16 %v528
        %v1586 = vunpack.c.h.b16 %v528
        %v1587 = vunpack.c.l.b16 %v529
        %v1588 = vunpack.c.h.b16 %v529
        %v1589 = vunpack.c.l.b16 %v530
        %v1590 = vunpack.c.h.b16 %v530
        %v1591 = vunpack.c.l.b16 %v531
        %v1592 = vunpack.c.h.b16 %v531
        %v1593 = vunpack.c.l.b16 %v532
        %v1594 = vunpack.c.h.b16 %v532
        %v1595 = vunpack.c.l.b16 %v533
        %v1596 = vunpack.c.h.b16 %v533
        %v1597 = vunpack.c.l.b16 %v534
        %v1598 = vunpack.c.h.b16 %v534
        %v1599 = vunpack.c.l.b16 %v535
        %v1600 = vunpack.c.h.b16 %v535
        %v1601 = vunpack.c.l.b16 %v536
        %v1602 = vunpack.c.h.b16 %v536
        %v1603 = vunpack.c.l.b16 %v537
        %v1604 = vunpack.c.h.b16 %v537
        %v1605 = vunpack.c.l.b16 %v538
        %v1606 = vunpack.c.h.b16 %v538
        %v1607 = vunpack.c.l.b16 %v539
        %v1608 = vunpack.c.h.b16 %v539
        %v1609 = vunpack.c.l.b16 %v540
        %v1610 = vunpack.c.h.b16 %v540
        %v1611 = vunpack.c.l.b16 %v541
        %v1612 = vunpack.c.h.b16 %v541
        %v1613 = vunpack.c.l.b16 %v542
        %v1614 = vunpack.c.h.b16 %v542
        %v1615 = vunpack.c.l.b16 %v543
        %v1616 = vunpack.c.h.b16 %v543
        %v1617 = vunpack.c.l.b16 %v544
        %v1618 = vunpack.c.h.b16 %v544
        %v1619 = vunpack.c.l.b16 %v545
        %v1620 = vunpack.c.h.b16 %v545
        %v1621 = vunpack.c.l.b16 %v546
        %v1622 = vunpack.c.h.b16 %v546
        %v1623 = vunpack.c.l.b16 %v547
        %v1624 = vunpack.c.h.b16 %v547
        %v1625 = vunpack.c.l.b16 %v548
        %v1626 = vunpack.c.h.b16 %v548
        %v1627 = vunpack.c.l.b16 %v549
        %v1628 = vunpack.c.h.b16 %v549
        %v1629 = vunpack.c.l.b16 %v550
        %v1630 = vunpack.c.h.b16 %v550
        %v1631 = vunpack.c.l.b16 %v551
        %v1632 = vunpack.c.h.b16 %v551
        %v1633 = vunpack.c.l.b16 %v552
        %v1634 = vunpack.c.h.b16 %v552
        %v1635 = vunpack.c.l.b16 %v553
        %v1636 = vunpack.c.h.b16 %v553
        %v1637 = vunpack.c.l.b16 %v554
        %v1638 = vunpack.c.h.b16 %v554
        %v1639 = vunpack.c.l.b16 %v555
        %v1640 = vunpack.c.h.b16 %v555
        %v1641 = vunpack.c.l.b16 %v556
        %v1642 = vunpack.c.h.b16 %v556
        %v1643 = vunpack.c.l.b16 %v557
        %v1644 = vunpack.c.h.b16 %v557
        %v1645 = vunpack.c.l.b16 %v558
        %v1646 = vunpack.c.h.b16 %v558
        %v1647 = vunpack.c.l.b16 %v559
        %v1648 = vunpack.c.h.b16 %v559
        %v1649 = vunpack.c.l.b16 %v560
        %v1650 = vunpack.c.h.b16 %v560
        %v1651 = vunpack.c.l.b16 %v561
        %v1652 = vunpack.c.h.b16 %v561
        %v1653 = vunpack.c.l.b16 %v562
        %v1654 = vunpack.c.h.b16 %v562
        %v1655 = vunpack.c.l.b16 %v563
        %v1656 = vunpack.c.h.b16 %v563
        %v1657 = vunpack.c.l.b16 %v564
        %v1658 = vunpack.c.h.b16 %v564
        %v1659 = vunpack.c.l.b16 %v565
        %v1660 = vunpack.c.h.b16 %v565
        %v1661 = vunpack.c.l.b16 %v566
        %v1662 = vunpack.c.h.b16 %v566
        %v1663 = vunpack.c.l.b16 %v567
        %v1664 = vunpack.c.h.b16 %v567
        %v1665 = vunpack.c.l.b16 %v568
        %v1666 = vunpack.c.h.b16 %v568
        %v1667 = vunpack.c.l.b16 %v569
        %v1668 = vunpack.c.h.b16 %v569
        %v1669 = vunpack.c.l.b16 %v570
        %v1670 = vunpack.c.h.b16 %v570
        %v1671 = vunpack.c.l.b16 %v571
        %v1672 = vunpack.c.h.b16 %v571
        %v1673 = vunpack.c.l.b16 %v572
        %v1674 = vunpack.c.h.b16 %v572
        %v1675 = vunpack.c.l.b16 %v573
        %v1676 = vunpack.c.h.b16 %v573
        %v1677 = vunpack.c.l.b16 %v574
        %v1678 = vunpack.c.h.b16 %v574
        %v1679 = vunpack.c.l.b16 %v575
        %v1680 = vunpack.c.h.b16 %v575
        %v1681 = vunpack.c.l.b16 %v576
        %v1682 = vunpack.c.h.b16 %v576
        %v1683 = vunpack.c.l.b16 %v577
        %v1684 = vunpack.c.h.b16 %v577
        %v1685 = vunpack.c.l.b16 %v578
        %v1686 = vunpack.c.h.b16 %v578
        %v1687 = vunpack.c.l.b16 %v579
        %v1688 = vunpack.c.h.b16 %v579
        %v1689 = vunpack.c.l.b16 %v580
        %v1690 = vunpack.c.h.b16 %v580
        %v1691 = vunpack.c.l.b16 %v581
        %v1692 = vunpack.c.h.b16 %v581
        %v1693 = vunpack.c.l.b16 %v582
        %v1694 = vunpack.c.h.b16 %v582
        %v1695 = vunpack.c.l.b16 %v583
        %v1696 = vunpack.c.h.b16 %v583
        %v1697 = vunpack.c.l.b16 %v584
        %v1698 = vunpack.c.h.b16 %v584
        %v1699 = vunpack.c.l.b16 %v585
        %v1700 = vunpack.c.h.b16 %v585
        %v1701 = vunpack.c.l.b16 %v586
        %v1702 = vunpack.c.h.b16 %v586
        %v1703 = vunpack.c.l.b16 %v587
        %v1704 = vunpack.c.h.b16 %v587
        %v1705 = vunpack.c.l.b16 %v588
        %v1706 = vunpack.c.h.b16 %v588
        %v1707 = vunpack.c.l.b16 %v589
        %v1708 = vunpack.c.h.b16 %v589
        %v1709 = vunpack.c.l.b16 %v590
        %v1710 = vunpack.c.h.b16 %v590
        %v1711 = vunpack.c.l.b16 %v591
        %v1712 = vunpack.c.h.b16 %v591
        %v1713 = vunpack.c.l.b16 %v592
        %v1714 = vunpack.c.h.b16 %v592
        %v1715 = vunpack.c.l.b16 %v593
        %v1716 = vunpack.c.h.b16 %v593
        %v1717 = vunpack.c.l.b16 %v594
        %v1718 = vunpack.c.h.b16 %v594
        %v1719 = vunpack.c.l.b16 %v595
        %v1720 = vunpack.c.h.b16 %v595
        %v1721 = vunpack.c.l.b16 %v596
        %v1722 = vunpack.c.h.b16 %v596
        %v1723 = vunpack.c.l.b16 %v597
        %v1724 = vunpack.c.h.b16 %v597
        %v1725 = vunpack.c.l.b16 %v598
        %v1726 = vunpack.c.h.b16 %v598
        %v1727 = vunpack.c.l.b16 %v599
        %v1728 = vunpack.c.h.b16 %v599
        %v1729 = vunpack.c.l.b16 %v600
        %v1730 = vunpack.c.h.b16 %v600
        %v1731 = vunpack.c.l.b16 %v601
        %v1732 = vunpack.c.h.b16 %v601
        %v1733 = vunpack.c.l.b16 %v602
        %v1734 = vunpack.c.h.b16 %v602
        %v1735 = vunpack.c.l.b16 %v603
        %v1736 = vunpack.c.h.b16 %v603
        %v1737 = vunpack.c.l.b16 %v604
        %v1738 = vunpack.c.h.b16 %v604
        %v1739 = vunpack.c.l.b16 %v605
        %v1740 = vunpack.c.h.b16 %v605
        %v1741 = vunpack.c.l.b16 %v606
        %v1742 = vunpack.c.h.b16 %v606
        %v1743 = vunpack.c.l.b16 %v607
        %v1744 = vunpack.c.h.b16 %v607
        %v1745 = vunpack.c.l.b16 %v608
        %v1746 = vunpack.c.h.b16 %v608
        %v1747 = vunpack.c.l.b16 %v609
        %v1748 = vunpack.c.h.b16 %v609
        %v1749 = vunpack.c.l.b16 %v610
        %v1750 = vunpack.c.h.b16 %v610
        %v1751 = vunpack.c.l.b16 %v611
        %v1752 = vunpack.c.h.b16 %v611
        %v1753 = vunpack.c.l.b16 %v612
        %v1754 = vunpack.c.h.b16 %v612
        %v1755 = vunpack.c.l.b16 %v613
        %v1756 = vunpack.c.h.b16 %v613
        %v1757 = vunpack.c.l.b16 %v614
        %v1758 = vunpack.c.h.b16 %v614
        %v1759 = vunpack.c.l.b16 %v615
        %v1760 = vunpack.c.h.b16 %v615
        %v1761 = vunpack.c.l.b16 %v616
        %v1762 = vunpack.c.h.b16 %v616
        %v1763 = vunpack.c.l.b16 %v617
        %v1764 = vunpack.c.h.b16 %v617
        %v1765 = vunpack.c.l.b16 %v618
        %v1766 = vunpack.c.h.b16 %v618
        %v1767 = vunpack.c.l.b16 %v619
        %v1768 = vunpack.c.h.b16 %v619
        %v1769 = vunpack.c.l.b16 %v620
        %v1770 = vunpack.c.h.b16 %v620
        %v1771 = vunpack.c.l.b16 %v621
        %v1772 = vunpack.c.h.b16 %v621
        %v1773 = vunpack.c.l.b16 %v622
        %v1774 = vunpack.c.h.b16 %v622
        %v1775 = vunpack.c.l.b16 %v623
        %v1776 = vunpack.c.h.b16 %v623
        %v1777 = vunpack.c.l.b16 %v624
        %v1778 = vunpack.c.h.b16 %v624
        %v1779 = vunpack.c.l.b16 %v625
        %v1780 = vunpack.c.h.b16 %v625
        %v1781 = vunpack.c.l.b16 %v626
        %v1782 = vunpack.c.h.b16 %v626
        %v1783 = vunpack.c.l.b16 %v627
        %v1784 = vunpack.c.h.b16 %v627
        %v1785 = vunpack.c.l.b16 %v628
        %v1786 = vunpack.c.h.b16 %v628
        %v1787 = vunpack.c.l.b16 %v629
        %v1788 = vunpack.c.h.b16 %v629
        %v1789 = vunpack.c.l.b16 %v630
        %v1790 = vunpack.c.h.b16 %v630
        %v1791 = vunpack.c.l.b16 %v631
        %v1792 = vunpack.c.h.b16 %v631
        %v1793 = vunpack.c.l.b16 %v632
        %v1794 = vunpack.c.h.b16 %v632
        %v1795 = vunpack.c.l.b16 %v633
        %v1796 = vunpack.c.h.b16 %v633
        %v1797 = vunpack.c.l.b16 %v634
        %v1798 = vunpack.c.h.b16 %v634
        %v1799 = vunpack.c.l.b16 %v635
        %v1800 = vunpack.c.h.b16 %v635
        %v1801 = vunpack.c.l.b16 %v636
        %v1802 = vunpack.c.h.b16 %v636
        %v1803 = vunpack.c.l.b16 %v637
        %v1804 = vunpack.c.h.b16 %v637
        %v1805 = vunpack.c.l.b16 %v638
        %v1806 = vunpack.c.h.b16 %v638
        %v1807 = vunpack.c.l.b16 %v639
        %v1808 = vunpack.c.h.b16 %v639
        %v1809 = vunpack.c.l.b16 %v640
        %v1810 = vunpack.c.h.b16 %v640
        %v1811 = vunpack.c.l.b16 %v641
        %v1812 = vunpack.c.h.b16 %v641
        %v1813 = vunpack.c.l.b16 %v642
        %v1814 = vunpack.c.h.b16 %v642
        %v1815 = vunpack.c.l.b16 %v643
        %v1816 = vunpack.c.h.b16 %v643
        %v1817 = vunpack.c.l.b16 %v644
        %v1818 = vunpack.c.h.b16 %v644
        %v1819 = vunpack.c.l.b16 %v645
        %v1820 = vunpack.c.h.b16 %v645
        %v1821 = vunpack.c.l.b16 %v646
        %v1822 = vunpack.c.h.b16 %v646
        %v1823 = vunpack.c.l.b16 %v647
        %v1824 = vunpack.c.h.b16 %v647
        %v1825 = vunpack.c.l.b16 %v648
        %v1826 = vunpack.c.h.b16 %v648
        %v1827 = vunpack.c.l.b16 %v649
        %v1828 = vunpack.c.h.b16 %v649
        %v1829 = vunpack.c.l.b16 %v650
        %v1830 = vunpack.c.h.b16 %v650
        %v1831 = vunpack.c.l.b16 %v651
        %v1832 = vunpack.c.h.b16 %v651
        %v1833 = vunpack.c.l.b16 %v652
        %v1834 = vunpack.c.h.b16 %v652
        %v1835 = vunpack.c.l.b16 %v653
        %v1836 = vunpack.c.h.b16 %v653
        %v1837 = vunpack.c.l.b16 %v654
        %v1838 = vunpack.c.h.b16 %v654
        %v1839 = vunpack.c.l.b16 %v655
        %v1840 = vunpack.c.h.b16 %v655
        %v1841 = vunpack.c.l.b16 %v656
        %v1842 = vunpack.c.h.b16 %v656
        %v1843 = vunpack.c.l.b16 %v657
        %v1844 = vunpack.c.h.b16 %v657
        %v1845 = vunpack.c.l.b16 %v658
        %v1846 = vunpack.c.h.b16 %v658
        %v1847 = vunpack.c.l.b16 %v659
        %v1848 = vunpack.c.h.b16 %v659
        %v1849 = vunpack.c.l.b16 %v660
        %v1850 = vunpack.c.h.b16 %v660
        %v1851 = vunpack.c.l.b16 %v661
        %v1852 = vunpack.c.h.b16 %v661
        %v1853 = vunpack.c.l.b16 %v662
        %v1854 = vunpack.c.h.b16 %v662
        %v1855 = vunpack.c.l.b16 %v663
        %v1856 = vunpack.c.h.b16 %v663
        %v1857 = vunpack.c.l.b16 %v664
        %v1858 = vunpack.c.h.b16 %v664
        %v1859 = vunpack.c.l.b16 %v665
        %v1860 = vunpack.c.h.b16 %v665
        %v1861 = vunpack.c.l.b16 %v666
        %v1862 = vunpack.c.h.b16 %v666
        %v1863 = vunpack.c.l.b16 %v667
        %v1864 = vunpack.c.h.b16 %v667
        %v1865 = vunpack.c.l.b16 %v668
        %v1866 = vunpack.c.h.b16 %v668
        %v1867 = vunpack.c.l.b16 %v669
        %v1868 = vunpack.c.h.b16 %v669
        %v1869 = vunpack.c.l.b16 %v670
        %v1870 = vunpack.c.h.b16 %v670
        %v1871 = vunpack.c.l.b16 %v671
        %v1872 = vunpack.c.h.b16 %v671
        %v1873 = vunpack.c.l.b16 %v672
        %v1874 = vunpack.c.h.b16 %v672
        %v1875 = vunpack.c.l.b16 %v673
        %v1876 = vunpack.c.h.b16 %v673
        %v1877 = vunpack.c.l.b16 %v674
        %v1878 = vunpack.c.h.b16 %v674
        %v1879 = vunpack.c.l.b16 %v675
        %v1880 = vunpack.c.h.b16 %v675
        %v1881 = vunpack.c.l.b16 %v676
        %v1882 = vunpack.c.h.b16 %v676
        %v1883 = vunpack.c.l.b16 %v677
        %v1884 = vunpack.c.h.b16 %v677
        %v1885 = vunpack.c.l.b16 %v678
        %v1886 = vunpack.c.h.b16 %v678
        %v1887 = vunpack.c.l.b16 %v679
        %v1888 = vunpack.c.h.b16 %v679
        %v1889 = vunpack.c.l.b16 %v680
        %v1890 = vunpack.c.h.b16 %v680
        %v1891 = vunpack.c.l.b16 %v681
        %v1892 = vunpack.c.h.b16 %v681
        %v1893 = vunpack.c.l.b16 %v682
        %v1894 = vunpack.c.h.b16 %v682
        %v1895 = vunpack.c.l.b16 %v683
        %v1896 = vunpack.c.h.b16 %v683
        %v1897 = vunpack.c.l.b16 %v684
        %v1898 = vunpack.c.h.b16 %v684
        %v1899 = vunpack.c.l.b16 %v685
        %v1900 = vunpack.c.h.b16 %v685
        %v1901 = vunpack.c.l.b16 %v686
        %v1902 = vunpack.c.h.b16 %v686
        %v1903 = vunpack.c.l.b16 %v687
        %v1904 = vunpack.c.h.b16 %v687
        %v1905 = vunpack.c.l.b16 %v688
        %v1906 = vunpack.c.h.b16 %v688
        %v1907 = vunpack.c.l.b16 %v689
        %v1908 = vunpack.c.h.b16 %v689
        %v1909 = vunpack.c.l.b16 %v690
        %v1910 = vunpack.c.h.b16 %v690
        %v1911 = vunpack.c.l.b16 %v691
        %v1912 = vunpack.c.h.b16 %v691
        %v1913 = vunpack.c.l.b16 %v692
        %v1914 = vunpack.c.h.b16 %v692
        %v1915 = vunpack.c.l.b16 %v693
        %v1916 = vunpack.c.h.b16 %v693
        %v1917 = vunpack.c.l.b16 %v694
        %v1918 = vunpack.c.h.b16 %v694
        %v1919 = vunpack.c.l.b16 %v695
        %v1920 = vunpack.c.h.b16 %v695
        %v1921 = vunpack.c.l.b16 %v696
        %v1922 = vunpack.c.h.b16 %v696
        %v1923 = vunpack.c.l.b16 %v697
        %v1924 = vunpack.c.h.b16 %v697
        %v1925 = vunpack.c.l.b16 %v698
        %v1926 = vunpack.c.h.b16 %v698
        %v1927 = vunpack.c.l.b16 %v699
        %v1928 = vunpack.c.h.b16 %v699
        %v1929 = vunpack.c.l.b16 %v700
        %v1930 = vunpack.c.h.b16 %v700
        %v1931 = vunpack.c.l.b16 %v701
        %v1932 = vunpack.c.h.b16 %v701
        %v1933 = vunpack.c.l.b16 %v702
        %v1934 = vunpack.c.h.b16 %v702
        %v1935 = vunpack.c.l.b16 %v703
        %v1936 = vunpack.c.h.b16 %v703
        %v1937 = vunpack.c.l.b16 %v704
        %v1938 = vunpack.c.h.b16 %v704
        %v1939 = vunpack.c.l.b16 %v705
        %v1940 = vunpack.c.h.b16 %v705
        %v1941 = vunpack.c.l.b16 %v706
        %v1942 = vunpack.c.h.b16 %v706
        %v1943 = vunpack.c.l.b16 %v707
        %v1944 = vunpack.c.h.b16 %v707
        %v1945 = vunpack.c.l.b16 %v708
        %v1946 = vunpack.c.h.b16 %v708
        %v1947 = vunpack.c.l.b16 %v709
        %v1948 = vunpack.c.h.b16 %v709
        %v1949 = vunpack.c.l.b16 %v710
        %v1950 = vunpack.c.h.b16 %v710
        %v1951 = vunpack.c.l.b16 %v711
        %v1952 = vunpack.c.h.b16 %v711
        %v1953 = vunpack.c.l.b16 %v712
        %v1954 = vunpack.c.h.b16 %v712
        %v1955 = vunpack.c.l.b16 %v713
        %v1956 = vunpack.c.h.b16 %v713
        %v1957 = vunpack.c.l.b16 %v714
        %v1958 = vunpack.c.h.b16 %v714
        %v1959 = vunpack.c.l.b16 %v715
        %v1960 = vunpack.c.h.b16 %v715
        %v1961 = vunpack.c.l.b16 %v716
        %v1962 = vunpack.c.h.b16 %v716
        %v1963 = vunpack.c.l.b16 %v717
        %v1964 = vunpack.c.h.b16 %v717
        %v1965 = vunpack.c.l.b16 %v718
        %v1966 = vunpack.c.h.b16 %v718
        %v1967 = vunpack.c.l.b16 %v719
        %v1968 = vunpack.c.h.b16 %v719
        %v1969 = vunpack.c.l.b16 %v720
        %v1970 = vunpack.c.h.b16 %v720
        %v1971 = vunpack.c.l.b16 %v721
        %v1972 = vunpack.c.h.b16 %v721
        %v1973 = vunpack.c.l.b16 %v722
        %v1974 = vunpack.c.h.b16 %v722
        %v1975 = vunpack.c.l.b16 %v723
        %v1976 = vunpack.c.h.b16 %v723
        %v1977 = vunpack.c.l.b16 %v724
        %v1978 = vunpack.c.h.b16 %v724
        %v1979 = vunpack.c.l.b16 %v725
        %v1980 = vunpack.c.h.b16 %v725
        %v1981 = vunpack.c.l.b16 %v726
        %v1982 = vunpack.c.h.b16 %v726
        %v1983 = vunpack.c.l.b16 %v727
        %v1984 = vunpack.c.h.b16 %v727
        %v1985 = vunpack.c.l.b16 %v728
        %v1986 = vunpack.c.h.b16 %v728
        %v1987 = vunpack.c.l.b16 %v729
        %v1988 = vunpack.c.h.b16 %v729
        %v1989 = vunpack.c.l.b16 %v730
        %v1990 = vunpack.c.h.b16 %v730
        %v1991 = vunpack.c.l.b16 %v731
        %v1992 = vunpack.c.h.b16 %v731
        %v1993 = vunpack.c.l.b16 %v732
        %v1994 = vunpack.c.h.b16 %v732
        %v1995 = vunpack.c.l.b16 %v733
        %v1996 = vunpack.c.h.b16 %v733
        %v1997 = vunpack.c.l.b16 %v734
        %v1998 = vunpack.c.h.b16 %v734
        %v1999 = vunpack.c.l.b16 %v735
        %v2000 = vunpack.c.h.b16 %v735
        %v2001 = vunpack.c.l.b16 %v736
        %v2002 = vunpack.c.h.b16 %v736
        %v2003 = vunpack.c.l.b16 %v737
        %v2004 = vunpack.c.h.b16 %v737
        %v2005 = vunpack.c.l.b16 %v738
        %v2006 = vunpack.c.h.b16 %v738
        %v2007 = vunpack.c.l.b16 %v739
        %v2008 = vunpack.c.h.b16 %v739
        %v2009 = vunpack.c.l.b16 %v740
        %v2010 = vunpack.c.h.b16 %v740
        %v2011 = vunpack.c.l.b16 %v741
        %v2012 = vunpack.c.h.b16 %v741
        %v2013 = vunpack.c.l.b16 %v742
        %v2014 = vunpack.c.h.b16 %v742
        %v2015 = vunpack.c.l.b16 %v743
        %v2016 = vunpack.c.h.b16 %v743
        %v2017 = vunpack.c.l.b16 %v744
        %v2018 = vunpack.c.h.b16 %v744
        %v2019 = vunpack.c.l.b16 %v745
        %v2020 = vunpack.c.h.b16 %v745
        %v2021 = vunpack.c.l.b16 %v746
        %v2022 = vunpack.c.h.b16 %v746
        %v2023 = vunpack.c.l.b16 %v747
        %v2024 = vunpack.c.h.b16 %v747
        %v2025 = vunpack.c.l.b16 %v748
        %v2026 = vunpack.c.h.b16 %v748
        %v2027 = vunpack.c.l.b16 %v749
        %v2028 = vunpack.c.h.b16 %v749
        %v2029 = vunpack.c.l.b16 %v750
        %v2030 = vunpack.c.h.b16 %v750
        %v2031 = vunpack.c.l.b16 %v751
        %v2032 = vunpack.c.h.b16 %v751
        %v2033 = vunpack.c.l.b16 %v752
        %v2034 = vunpack.c.h.b16 %v752
        %v2035 = vunpack.c.l.b16 %v753
        %v2036 = vunpack.c.h.b16 %v753
        %v2037 = vunpack.c.l.b16 %v754
        %v2038 = vunpack.c.h.b16 %v754
        %v2039 = vunpack.c.l.b16 %v755
        %v2040 = vunpack.c.h.b16 %v755
        %v2041 = vunpack.c.l.b16 %v756
        %v2042 = vunpack.c.h.b16 %v756
        %v2043 = vunpack.c.l.b16 %v757
        %v2044 = vunpack.c.h.b16 %v757
        %v2045 = vunpack.c.l.b16 %v758
        %v2046 = vunpack.c.h.b16 %v758
        %v2047 = vunpack.c.l.b16 %v759
        %v2048 = vunpack.c.h.b16 %v759
        %v2049 = vunpack.c.l.b16 %v760
        %v2050 = vunpack.c.h.b16 %v760
        %v2051 = vunpack.c.l.b16 %v761
        %v2052 = vunpack.c.h.b16 %v761
        %v2053 = vunpack.c.l.b16 %v762
        %v2054 = vunpack.c.h.b16 %v762
        %v2055 = vunpack.c.l.b16 %v763
        %v2056 = vunpack.c.h.b16 %v763
        %v2057 = vunpack.c.l.b16 %v764
        %v2058 = vunpack.c.h.b16 %v764
        %v2059 = vunpack.c.l.b16 %v765
        %v2060 = vunpack.c.h.b16 %v765
        %v2061 = vunpack.c.l.b16 %v766
        %v2062 = vunpack.c.h.b16 %v766
        %v2063 = vunpack.c.l.b16 %v767
        %v2064 = vunpack.c.h.b16 %v767
        %v2065 = vunpack.c.l.b16 %v768
        %v2066 = vunpack.c.h.b16 %v768
        %v2067 = vunpack.c.l.b16 %v769
        %v2068 = vunpack.c.h.b16 %v769
        %v2069 = vunpack.c.l.b16 %v770
        %v2070 = vunpack.c.h.b16 %v770
        %v2071 = vunpack.c.l.b16 %v771
        %v2072 = vunpack.c.h.b16 %v771
        %v2073 = vunpack.c.l.b16 %v772
        %v2074 = vunpack.c.h.b16 %v772
        %v2075 = vunpack.c.l.b16 %v773
        %v2076 = vunpack.c.h.b16 %v773
        %v2077 = vunpack.c.l.b16 %v774
        %v2078 = vunpack.c.h.b16 %v774
        %v2079 = vunpack.c.l.b16 %v775
        %v2080 = vunpack.c.h.b16 %v775
        %v2081 = vunpack.c.l.b16 %v776
        %v2082 = vunpack.c.h.b16 %v776
        %v2083 = vunpack.c.l.b16 %v777
        %v2084 = vunpack.c.h.b16 %v777
        %v2085 = vunpack.c.l.b16 %v778
        %v2086 = vunpack.c.h.b16 %v778
        %v2087 = vunpack.c.l.b16 %v779
        %v2088 = vunpack.c.h.b16 %v779
        %v2089 = vunpack.c.l.b16 %v780
        %v2090 = vunpack.c.h.b16 %v780
        %v2091 = vunpack.c.l.b16 %v781
        %v2092 = vunpack.c.h.b16 %v781
        %v2093 = vunpack.c.l.b16 %v782
        %v2094 = vunpack.c.h.b16 %v782
        %v2095 = vunpack.c.l.b16 %v783
        %v2096 = vunpack.c.h.b16 %v783
        %v2097 = vunpack.c.l.b16 %v784
        %v2098 = vunpack.c.h.b16 %v784
        %v2099 = vunpack.c.l.b16 %v785
        %v2100 = vunpack.c.h.b16 %v785
        %v2101 = vunpack.c.l.b16 %v786
        %v2102 = vunpack.c.h.b16 %v786
        %v2103 = vunpack.c.l.b16 %v787
        %v2104 = vunpack.c.h.b16 %v787
        %v2105 = vunpack.c.l.b16 %v788
        %v2106 = vunpack.c.h.b16 %v788
        %v2107 = vunpack.c.l.b16 %v789
        %v2108 = vunpack.c.h.b16 %v789
        %v2109 = vunpack.c.l.b16 %v790
        %v2110 = vunpack.c.h.b16 %v790
        %v2111 = vunpack.c.l.b16 %v791
        %v2112 = vunpack.c.h.b16 %v791
        %v2113 = vunpack.c.l.b16 %v792
        %v2114 = vunpack.c.h.b16 %v792
        %v2115 = vunpack.c.l.b16 %v793
        %v2116 = vunpack.c.h.b16 %v793
        %v2117 = vunpack.c.l.b16 %v794
        %v2118 = vunpack.c.h.b16 %v794
        %v2119 = vunpack.c.l.b16 %v795
        %v2120 = vunpack.c.h.b16 %v795
        %v2121 = vunpack.c.l.b16 %v796
        %v2122 = vunpack.c.h.b16 %v796
        %v2123 = vunpack.c.l.b16 %v797
        %v2124 = vunpack.c.h.b16 %v797
        %v2125 = vunpack.c.l.b16 %v798
        %v2126 = vunpack.c.h.b16 %v798
        %v2127 = vunpack.c.l.b16 %v799
        %v2128 = vunpack.c.h.b16 %v799
        %v2129 = vunpack.c.l.b16 %v800
        %v2130 = vunpack.c.h.b16 %v800
        %v2131 = vunpack.c.l.b16 %v801
        %v2132 = vunpack.c.h.b16 %v801
        %v2133 = vunpack.c.l.b16 %v802
        %v2134 = vunpack.c.h.b16 %v802
        %v2135 = vunpack.c.l.b16 %v803
        %v2136 = vunpack.c.h.b16 %v803
        %v2137 = vunpack.c.l.b16 %v804
        %v2138 = vunpack.c.h.b16 %v804
        %v2139 = vunpack.c.l.b16 %v805
        %v2140 = vunpack.c.h.b16 %v805
        %v2141 = vunpack.c.l.b16 %v806
        %v2142 = vunpack.c.h.b16 %v806
        %v2143 = vunpack.c.l.b16 %v807
        %v2144 = vunpack.c.h.b16 %v807
        %v2145 = vunpack.c.l.b16 %v808
        %v2146 = vunpack.c.h.b16 %v808
        %v2147 = vunpack.c.l.b16 %v809
        %v2148 = vunpack.c.h.b16 %v809
        %v2149 = vunpack.c.l.b16 %v810
        %v2150 = vunpack.c.h.b16 %v810
        %v2151 = vunpack.c.l.b16 %v811
        %v2152 = vunpack.c.h.b16 %v811
        %v2153 = vunpack.c.l.b16 %v812
        %v2154 = vunpack.c.h.b16 %v812
        %v2155 = vunpack.c.l.b16 %v813
        %v2156 = vunpack.c.h.b16 %v813
        %v2157 = vunpack.c.l.b16 %v814
        %v2158 = vunpack.c.h.b16 %v814
        %v2159 = vunpack.c.l.b16 %v815
        %v2160 = vunpack.c.h.b16 %v815
        %v2161 = vunpack.c.l.b16 %v816
        %v2162 = vunpack.c.h.b16 %v816
        %v2163 = vunpack.c.l.b16 %v817
        %v2164 = vunpack.c.h.b16 %v817
        %v2165 = vunpack.c.l.b16 %v818
        %v2166 = vunpack.c.h.b16 %v818
        %v2167 = vunpack.c.l.b16 %v819
        %v2168 = vunpack.c.h.b16 %v819
        %v2169 = vunpack.c.l.b16 %v820
        %v2170 = vunpack.c.h.b16 %v820
        %v2171 = vunpack.c.l.b16 %v821
        %v2172 = vunpack.c.h.b16 %v821
        %v2173 = vunpack.c.l.b16 %v822
        %v2174 = vunpack.c.h.b16 %v822
        %v2175 = vunpack.c.l.b16 %v823
        %v2176 = vunpack.c.h.b16 %v823
        %v2177 = vunpack.c.l.b16 %v824
        %v2178 = vunpack.c.h.b16 %v824
        %v2179 = vunpack.c.l.b16 %v825
        %v2180 = vunpack.c.h.b16 %v825
        %v2181 = vunpack.c.l.b16 %v826
        %v2182 = vunpack.c.h.b16 %v826
        %v2183 = vunpack.c.l.b16 %v827
        %v2184 = vunpack.c.h.b16 %v827
        %v2185 = vunpack.c.l.b16 %v828
        %v2186 = vunpack.c.h.b16 %v828
        %v2187 = vunpack.c.l.b16 %v829
        %v2188 = vunpack.c.h.b16 %v829
        %v2189 = vunpack.c.l.b16 %v830
        %v2190 = vunpack.c.h.b16 %v830
        %v2191 = vunpack.c.l.b16 %v831
        %v2192 = vunpack.c.h.b16 %v831
        %v2193 = vunpack.c.l.b16 %v832
        %v2194 = vunpack.c.h.b16 %v832
        %v2195 = vunpack.c.l.b16 %v833
        %v2196 = vunpack.c.h.b16 %v833
        %v2197 = vunpack.c.l.b16 %v834
        %v2198 = vunpack.c.h.b16 %v834
        %v2199 = vunpack.c.l.b16 %v835
        %v2200 = vunpack.c.h.b16 %v835
        %v2201 = vunpack.c.l.b16 %v836
        %v2202 = vunpack.c.h.b16 %v836
        %v2203 = vunpack.c.l.b16 %v837
        %v2204 = vunpack.c.h.b16 %v837
        %v2205 = vunpack.c.l.b16 %v838
        %v2206 = vunpack.c.h.b16 %v838
        %v2207 = vunpack.c.l.b16 %v839
        %v2208 = vunpack.c.h.b16 %v839
        %v2209 = vunpack.c.l.b16 %v840
        %v2210 = vunpack.c.h.b16 %v840
        %v2211 = vunpack.c.l.b16 %v841
        %v2212 = vunpack.c.h.b16 %v841
        %v2213 = vunpack.c.l.b16 %v842
        %v2214 = vunpack.c.h.b16 %v842
        %v2215 = vunpack.c.l.b16 %v843
        %v2216 = vunpack.c.h.b16 %v843
        %v2217 = vunpack.c.l.b16 %v844
        %v2218 = vunpack.c.h.b16 %v844
        %v2219 = vunpack.c.l.b16 %v845
        %v2220 = vunpack.c.h.b16 %v845
        %v2221 = vunpack.c.l.b16 %v846
        %v2222 = vunpack.c.h.b16 %v846
        %v2223 = vunpack.c.l.b16 %v847
        %v2224 = vunpack.c.h.b16 %v847
        %v2225 = vunpack.c.l.b16 %v848
        %v2226 = vunpack.c.h.b16 %v848
        %v2227 = vunpack.c.l.b16 %v849
        %v2228 = vunpack.c.h.b16 %v849
        %v2229 = vunpack.c.l.b16 %v850
        %v2230 = vunpack.c.h.b16 %v850
        %v2231 = vunpack.c.l.b16 %v851
        %v2232 = vunpack.c.h.b16 %v851
        %v2233 = vunpack.c.l.b16 %v852
        %v2234 = vunpack.c.h.b16 %v852
        %v2235 = vunpack.c.l.b16 %v853
        %v2236 = vunpack.c.h.b16 %v853
        %v2237 = vunpack.c.l.b16 %v854
        %v2238 = vunpack.c.h.b16 %v854
        %v2239 = vunpack.c.l.b16 %v855
        %v2240 = vunpack.c.h.b16 %v855
        %v2241 = vunpack.c.l.b16 %v856
        %v2242 = vunpack.c.h.b16 %v856
        %v2243 = vunpack.c.l.b16 %v857
        %v2244 = vunpack.c.h.b16 %v857
        %v2245 = vunpack.c.l.b16 %v858
        %v2246 = vunpack.c.h.b16 %v858
        %v2247 = vunpack.c.l.b16 %v859
        %v2248 = vunpack.c.h.b16 %v859
        %v2249 = vunpack.c.l.b16 %v860
        %v2250 = vunpack.c.h.b16 %v860
        %v2251 = vunpack.c.l.b16 %v861
        %v2252 = vunpack.c.h.b16 %v861
        %v2253 = vunpack.c.l.b16 %v862
        %v2254 = vunpack.c.h.b16 %v862
        %v2255 = vunpack.c.l.b16 %v863
        %v2256 = vunpack.c.h.b16 %v863
        %v2257 = vunpack.c.l.b16 %v864
        %v2258 = vunpack.c.h.b16 %v864
        %v2259 = vunpack.c.l.b16 %v865
        %v2260 = vunpack.c.h.b16 %v865
        %v2261 = vunpack.c.l.b16 %v866
        %v2262 = vunpack.c.h.b16 %v866
        %v2263 = vunpack.c.l.b16 %v867
        %v2264 = vunpack.c.h.b16 %v867
        %v2265 = vunpack.c.l.b16 %v868
        %v2266 = vunpack.c.h.b16 %v868
        %v2267 = vunpack.c.l.b16 %v869
        %v2268 = vunpack.c.h.b16 %v869
        %v2269 = vunpack.c.l.b16 %v870
        %v2270 = vunpack.c.h.b16 %v870
        %v2271 = vunpack.c.l.b16 %v871
        %v2272 = vunpack.c.h.b16 %v871
        %v2273 = vunpack.c.l.b16 %v872
        %v2274 = vunpack.c.h.b16 %v872
        %v2275 = vunpack.c.l.b16 %v873
        %v2276 = vunpack.c.h.b16 %v873
        %v2277 = vunpack.c.l.b16 %v874
        %v2278 = vunpack.c.h.b16 %v874
        %v2279 = vunpack.c.l.b16 %v875
        %v2280 = vunpack.c.h.b16 %v875
        %v2281 = vunpack.c.l.b16 %v876
        %v2282 = vunpack.c.h.b16 %v876
        %v2283 = vunpack.c.l.b16 %v877
        %v2284 = vunpack.c.h.b16 %v877
        %v2285 = vunpack.c.l.b16 %v878
        %v2286 = vunpack.c.h.b16 %v878
        %v2287 = vunpack.c.l.b16 %v879
        %v2288 = vunpack.c.h.b16 %v879
        %v2289 = vunpack.c.l.b16 %v880
        %v2290 = vunpack.c.h.b16 %v880
        %v2291 = vunpack.c.l.b16 %v881
        %v2292 = vunpack.c.h.b16 %v881
        %v2293 = vunpack.c.l.b16 %v882
        %v2294 = vunpack.c.h.b16 %v882
        %v2295 = vunpack.c.l.b16 %v883
        %v2296 = vunpack.c.h.b16 %v883
        %v2297 = vunpack.c.l.b16 %v884
        %v2298 = vunpack.c.h.b16 %v884
        %v2299 = vunpack.c.l.b16 %v885
        %v2300 = vunpack.c.h.b16 %v885
        %v2301 = vunpack.c.l.b16 %v886
        %v2302 = vunpack.c.h.b16 %v886
        %v2303 = vunpack.c.l.b16 %v887
        %v2304 = vunpack.c.h.b16 %v887
        %v2305 = vunpack.c.l.b16 %v888
        %v2306 = vunpack.c.h.b16 %v888
        %v2307 = vunpack.c.l.b16 %v889
        %v2308 = vunpack.c.h.b16 %v889
        %v2309 = vunpack.c.l.b16 %v890
        %v2310 = vunpack.c.h.b16 %v890
        %v2311 = vunpack.c.l.b16 %v891
        %v2312 = vunpack.c.h.b16 %v891
        %v2313 = vunpack.c.l.b16 %v892
        %v2314 = vunpack.c.h.b16 %v892
        %v2315 = vunpack.c.l.b16 %v893
        %v2316 = vunpack.c.h.b16 %v893
        %v2317 = vunpack.c.l.b16 %v894
        %v2318 = vunpack.c.h.b16 %v894
        %v2319 = vunpack.c.l.b16 %v895
        %v2320 = vunpack.c.h.b16 %v895
        %v2321 = vunpack.c.l.b16 %v896
        %v2322 = vunpack.c.h.b16 %v896
        %v2323 = vunpack.c.l.b16 %v897
        %v2324 = vunpack.c.h.b16 %v897
        %v2325 = vunpack.c.l.b16 %v898
        %v2326 = vunpack.c.h.b16 %v898
        %v2327 = vunpack.c.l.b16 %v899
        %v2328 = vunpack.c.h.b16 %v899
        %v2329 = vunpack.c.l.b16 %v900
        %v2330 = vunpack.c.h.b16 %v900
        %v2331 = vunpack.c.l.b16 %v901
        %v2332 = vunpack.c.h.b16 %v901
        %v2333 = vunpack.c.l.b16 %v902
        %v2334 = vunpack.c.h.b16 %v902
        %v2335 = vunpack.c.l.b16 %v903
        %v2336 = vunpack.c.h.b16 %v903
        %v2337 = vunpack.c.l.b16 %v904
        %v2338 = vunpack.c.h.b16 %v904
        %v2339 = vunpack.c.l.b16 %v905
        %v2340 = vunpack.c.h.b16 %v905
        %v2341 = vunpack.c.l.b16 %v906
        %v2342 = vunpack.c.h.b16 %v906
        %v2343 = vunpack.c.l.b16 %v907
        %v2344 = vunpack.c.h.b16 %v907
        %v2345 = vunpack.c.l.b16 %v908
        %v2346 = vunpack.c.h.b16 %v908
        %v2347 = vunpack.c.l.b16 %v909
        %v2348 = vunpack.c.h.b16 %v909
        %v2349 = vunpack.c.l.b16 %v910
        %v2350 = vunpack.c.h.b16 %v910
        %v2351 = vunpack.c.l.b16 %v911
        %v2352 = vunpack.c.h.b16 %v911
        %v2353 = vunpack.c.l.b16 %v912
        %v2354 = vunpack.c.h.b16 %v912
        %v2355 = vunpack.c.l.b16 %v913
        %v2356 = vunpack.c.h.b16 %v913
        %v2357 = vunpack.c.l.b16 %v914
        %v2358 = vunpack.c.h.b16 %v914
        %v2359 = vunpack.c.l.b16 %v915
        %v2360 = vunpack.c.h.b16 %v915
        %v2361 = vunpack.c.l.b16 %v916
        %v2362 = vunpack.c.h.b16 %v916
        %v2363 = vunpack.c.l.b16 %v917
        %v2364 = vunpack.c.h.b16 %v917
        %v2365 = vunpack.c.l.b16 %v918
        %v2366 = vunpack.c.h.b16 %v918
        %v2367 = vunpack.c.l.b16 %v919
        %v2368 = vunpack.c.h.b16 %v919
        %v2369 = vunpack.c.l.b16 %v920
        %v2370 = vunpack.c.h.b16 %v920
        %v2371 = vunpack.c.l.b16 %v921
        %v2372 = vunpack.c.h.b16 %v921
        %v2373 = vunpack.c.l.b16 %v922
        %v2374 = vunpack.c.h.b16 %v922
        %v2375 = vunpack.c.l.b16 %v923
        %v2376 = vunpack.c.h.b16 %v923
        %v2377 = vunpack.c.l.b16 %v924
        %v2378 = vunpack.c.h.b16 %v924
        %v2379 = vunpack.c.l.b16 %v925
        %v2380 = vunpack.c.h.b16 %v925
        %v2381 = vunpack.c.l.b16 %v926
        %v2382 = vunpack.c.h.b16 %v926
        %v2383 = vunpack.c.l.b16 %v927
        %v2384 = vunpack.c.h.b16 %v927
        %v2385 = vunpack.c.l.b16 %v928
        %v2386 = vunpack.c.h.b16 %v928
        %v2387 = vunpack.c.l.b16 %v929
        %v2388 = vunpack.c.h.b16 %v929
        %v2389 = vunpack.c.l.b16 %v930
        %v2390 = vunpack.c.h.b16 %v930
        %v2391 = vunpack.c.l.b16 %v931
        %v2392 = vunpack.c.h.b16 %v931
        %v2393 = vunpack.c.l.b16 %v932
        %v2394 = vunpack.c.h.b16 %v932
        %v2395 = vunpack.c.l.b16 %v933
        %v2396 = vunpack.c.h.b16 %v933
        %v2397 = vunpack.c.l.b16 %v934
        %v2398 = vunpack.c.h.b16 %v934
        %v2399 = vunpack.c.l.b16 %v935
        %v2400 = vunpack.c.h.b16 %v935
        %v2401 = vunpack.c.l.b16 %v936
        %v2402 = vunpack.c.h.b16 %v936
        %v2403 = vunpack.c.l.b16 %v937
        %v2404 = vunpack.c.h.b16 %v937
        %v2405 = vunpack.c.l.b16 %v938
        %v2406 = vunpack.c.h.b16 %v938
        %v2407 = vunpack.c.l.b16 %v939
        %v2408 = vunpack.c.h.b16 %v939
        %v2409 = vunpack.c.l.b16 %v940
        %v2410 = vunpack.c.h.b16 %v940
        %v2411 = vunpack.c.l.b16 %v941
        %v2412 = vunpack.c.h.b16 %v941
        %v2413 = vunpack.c.l.b16 %v942
        %v2414 = vunpack.c.h.b16 %v942
        %v2415 = vunpack.c.l.b16 %v943
        %v2416 = vunpack.c.h.b16 %v943
        %v2417 = vunpack.c.l.b16 %v944
        %v2418 = vunpack.c.h.b16 %v944
        %v2419 = vunpack.c.l.b16 %v945
        %v2420 = vunpack.c.h.b16 %v945
        %v2421 = vunpack.c.l.b16 %v946
        %v2422 = vunpack.c.h.b16 %v946
        %v2423 = vunpack.c.l.b16 %v947
        %v2424 = vunpack.c.h.b16 %v947
        %v2425 = vunpack.c.l.b16 %v948
        %v2426 = vunpack.c.h.b16 %v948
        %v2427 = vunpack.c.l.b16 %v949
        %v2428 = vunpack.c.h.b16 %v949
        %v2429 = vunpack.c.l.b16 %v950
        %v2430 = vunpack.c.h.b16 %v950
        %v2431 = vunpack.c.l.b16 %v951
        %v2432 = vunpack.c.h.b16 %v951
        %v2433 = vunpack.c.l.b16 %v952
        %v2434 = vunpack.c.h.b16 %v952
        %v2435 = vunpack.c.l.b16 %v953
        %v2436 = vunpack.c.h.b16 %v953
        %v2437 = vunpack.c.l.b16 %v954
        %v2438 = vunpack.c.h.b16 %v954
        %v2439 = vunpack.c.l.b16 %v955
        %v2440 = vunpack.c.h.b16 %v955
        %v2441 = vunpack.c.l.b16 %v956
        %v2442 = vunpack.c.h.b16 %v956
        %v2443 = vunpack.c.l.b16 %v957
        %v2444 = vunpack.c.h.b16 %v957
        %v2445 = vunpack.c.l.b16 %v958
        %v2446 = vunpack.c.h.b16 %v958
        %v2447 = vunpack.c.l.b16 %v959
        %v2448 = vunpack.c.h.b16 %v959
        %v2449 = vunpack.c.l.b16 %v960
        %v2450 = vunpack.c.h.b16 %v960
        %v2451 = vunpack.c.l.b16 %v961
        %v2452 = vunpack.c.h.b16 %v961
        %v2453 = vunpack.c.l.b16 %v962
        %v2454 = vunpack.c.h.b16 %v962
        %v2455 = vunpack.c.l.b16 %v963
        %v2456 = vunpack.c.h.b16 %v963
        %v2457 = vunpack.c.l.b16 %v964
        %v2458 = vunpack.c.h.b16 %v964
        %v2459 = vunpack.c.l.b16 %v965
        %v2460 = vunpack.c.h.b16 %v965
        %v2461 = vunpack.c.l.b16 %v966
        %v2462 = vunpack.c.h.b16 %v966
        %v2463 = vunpack.c.l.b16 %v967
        %v2464 = vunpack.c.h.b16 %v967
        %v2465 = vunpack.c.l.b16 %v968
        %v2466 = vunpack.c.h.b16 %v968
        %v2467 = vunpack.c.l.b16 %v969
        %v2468 = vunpack.c.h.b16 %v969
        %v2469 = vunpack.c.l.b16 %v970
        %v2470 = vunpack.c.h.b16 %v970
        %v2471 = vunpack.c.l.b16 %v971
        %v2472 = vunpack.c.h.b16 %v971
        %v2473 = vunpack.c.l.b16 %v972
        %v2474 = vunpack.c.h.b16 %v972
        %v2475 = vunpack.c.l.b16 %v973
        %v2476 = vunpack.c.h.b16 %v973
        %v2477 = vunpack.c.l.b16 %v974
        %v2478 = vunpack.c.h.b16 %v974
        %v2479 = vunpack.c.l.b16 %v975
        %v2480 = vunpack.c.h.b16 %v975
        %v2481 = vunpack.c.l.b16 %v976
        %v2482 = vunpack.c.h.b16 %v976
        %v2483 = vunpack.c.l.b16 %v977
        %v2484 = vunpack.c.h.b16 %v977
        %v2485 = vunpack.c.l.b16 %v978
        %v2486 = vunpack.c.h.b16 %v978
        %v2487 = vunpack.c.l.b16 %v979
        %v2488 = vunpack.c.h.b16 %v979
        %v2489 = vunpack.c.l.b16 %v980
        %v2490 = vunpack.c.h.b16 %v980
        %v2491 = vunpack.c.l.b16 %v981
        %v2492 = vunpack.c.h.b16 %v981
        %v2493 = vunpack.c.l.b16 %v982
        %v2494 = vunpack.c.h.b16 %v982
        %v2495 = vunpack.c.l.b16 %v983
        %v2496 = vunpack.c.h.b16 %v983
        %v2497 = vunpack.c.l.b16 %v984
        %v2498 = vunpack.c.h.b16 %v984
        %v2499 = vunpack.c.l.b16 %v985
        %v2500 = vunpack.c.h.b16 %v985
        %v2501 = vunpack.c.l.b16 %v986
        %v2502 = vunpack.c.h.b16 %v986
        %v2503 = vunpack.c.l.b16 %v987
        %v2504 = vunpack.c.h.b16 %v987
        %v2505 = vunpack.c.l.b16 %v988
        %v2506 = vunpack.c.h.b16 %v988
        %v2507 = vunpack.c.l.b16 %v989
        %v2508 = vunpack.c.h.b16 %v989
        %v2509 = vunpack.c.l.b16 %v990
        %v2510 = vunpack.c.h.b16 %v990
        %v2511 = vunpack.c.l.b16 %v991
        %v2512 = vunpack.c.h.b16 %v991
        %v2513 = vunpack.c.l.b16 %v992
        %v2514 = vunpack.c.h.b16 %v992
        %v2515 = vunpack.c.l.b16 %v993
        %v2516 = vunpack.c.h.b16 %v993
        %v2517 = vunpack.c.l.b16 %v994
        %v2518 = vunpack.c.h.b16 %v994
        %v2519 = vunpack.c.l.b16 %v995
        %v2520 = vunpack.c.h.b16 %v995
        %v2521 = vunpack.c.l.b16 %v996
        %v2522 = vunpack.c.h.b16 %v996
        %v2523 = vunpack.c.l.b16 %v997
        %v2524 = vunpack.c.h.b16 %v997
        %v2525 = vunpack.c.l.b16 %v998
        %v2526 = vunpack.c.h.b16 %v998
        %v2527 = vunpack.c.l.b16 %v999
        %v2528 = vunpack.c.h.b16 %v999
        %v2529 = vunpack.c.l.b16 %v1000
        %v2530 = vunpack.c.h.b16 %v1000
        %v2531 = vunpack.c.l.b16 %v1001
        %v2532 = vunpack.c.h.b16 %v1001
        %v2533 = vunpack.c.l.b16 %v1002
        %v2534 = vunpack.c.h.b16 %v1002
        %v2535 = vunpack.c.l.b16 %v1003
        %v2536 = vunpack.c.h.b16 %v1003
        %v2537 = vunpack.c.l.b16 %v1004
        %v2538 = vunpack.c.h.b16 %v1004
        %v2539 = vunpack.c.l.b16 %v1005
        %v2540 = vunpack.c.h.b16 %v1005
        %v2541 = vunpack.c.l.b16 %v1006
        %v2542 = vunpack.c.h.b16 %v1006
        %v2543 = vunpack.c.l.b16 %v1007
        %v2544 = vunpack.c.h.b16 %v1007
        %v2545 = vunpack.c.l.b16 %v1008
        %v2546 = vunpack.c.h.b16 %v1008
        %v2547 = vunpack.c.l.b16 %v1009
        %v2548 = vunpack.c.h.b16 %v1009
        %v2549 = vunpack.c.l.b16 %v1010
        %v2550 = vunpack.c.h.b16 %v1010
        %v2551 = vunpack.c.l.b16 %v1011
        %v2552 = vunpack.c.h.b16 %v1011
        %v2553 = vunpack.c.l.b16 %v1012
        %v2554 = vunpack.c.h.b16 %v1012
        %v2555 = vunpack.c.l.b16 %v1013
        %v2556 = vunpack.c.h.b16 %v1013
        %v2557 = vunpack.c.l.b16 %v1014
        %v2558 = vunpack.c.h.b16 %v1014
        %v2559 = vunpack.c.l.b16 %v1015
        %v2560 = vunpack.c.h.b16 %v1015
        %v2561 = vpack.c.b16 %v1565, %v1561
        %v2562 = vpack.c.b16 %v1566, %v1562
        %v2563 = vpack.c.b16 %v1567, %v1563
        %v2564 = vpack.c.b16 %v1568, %v1564
        %v2565 = vpack.c.b16 %v1573, %v1569
        %v2566 = vpack.c.b16 %v1574, %v1570
        %v2567 = vpack.c.b16 %v1575, %v1571
        %v2568 = vpack.c.b16 %v1576, %v1572
        %v2569 = vpack.c.b16 %v1581, %v1577
        %v2570 = vpack.c.b16 %v1582, %v1578
        %v2571 = vpack.c.b16 %v1583, %v1579
        %v2572 = vpack.c.b16 %v1584, %v1580
        %v2573 = vpack.c.b16 %v1589, %v1585
        %v2574 = vpack.c.b16 %v1590, %v1586
        %v2575 = vpack.c.b16 %v1591, %v1587
        %v2576 = vpack.c.b16 %v1592, %v1588
        %v2577 = vpack.c.b16 %v1597, %v1593
        %v2578 = vpack.c.b16 %v1598, %v1594
        %v2579 = vpack.c.b16 %v1599, %v1595
        %v2580 = vpack.c.b16 %v1600, %v1596
        %v2581 = vpack.c.b16 %v1605, %v1601
        %v2582 = vpack.c.b16 %v1606, %v1602
        %v2583 = vpack.c.b16 %v1607, %v1603
        %v2584 = vpack.c.b16 %v1608, %v1604
        %v2585 = vpack.c.b16 %v1613, %v1609
        %v2586 = vpack.c.b16 %v1614, %v1610
        %v2587 = vpack.c.b16 %v1615, %v1611
        %v2588 = vpack.c.b16 %v1616, %v1612
        %v2589 = vpack.c.b16 %v1621, %v1617
        %v2590 = vpack.c.b16 %v1622, %v1618
        %v2591 = vpack.c.b16 %v1623, %v1619
        %v2592 = vpack.c.b16 %v1624, %v1620
        %v2593 = vpack.c.b16 %v1629, %v1625
        %v2594 = vpack.c.b16 %v1630, %v1626
        %v2595 = vpack.c.b16 %v1631, %v1627
        %v2596 = vpack.c.b16 %v1632, %v1628
        %v2597 = vpack.c.b16 %v1637, %v1633
        %v2598 = vpack.c.b16 %v1638, %v1634
        %v2599 = vpack.c.b16 %v1639, %v1635
        %v2600 = vpack.c.b16 %v1640, %v1636
        %v2601 = vpack.c.b16 %v1645, %v1641
        %v2602 = vpack.c.b16 %v1646, %v1642
        %v2603 = vpack.c.b16 %v1647, %v1643
        %v2604 = vpack.c.b16 %v1648, %v1644
        %v2605 = vpack.c.b16 %v1653, %v1649
        %v2606 = vpack.c.b16 %v1654, %v1650
        %v2607 = vpack.c.b16 %v1655, %v1651
        %v2608 = vpack.c.b16 %v1656, %v1652
        %v2609 = vpack.c.b16 %v1661, %v1657
        %v2610 = vpack.c.b16 %v1662, %v1658
        %v2611 = vpack.c.b16 %v1663, %v1659
        %v2612 = vpack.c.b16 %v1664, %v1660
        %v2613 = vpack.c.b16 %v1669, %v1665
        %v2614 = vpack.c.b16 %v1670, %v1666
        %v2615 = vpack.c.b16 %v1671, %v1667
        %v2616 = vpack.c.b16 %v1672, %v1668
        %v2617 = vpack.c.b16 %v1677, %v1673
        %v2618 = vpack.c.b16 %v1678, %v1674
        %v2619 = vpack.c.b16 %v1679, %v1675
        %v2620 = vpack.c.b16 %v1680, %v1676
        %v2621 = vpack.c.b16 %v1685, %v1681
        %v2622 = vpack.c.b16 %v1686, %v1682
        %v2623 = vpack.c.b16 %v1687, %v1683
        %v2624 = vpack.c.b16 %v1688, %v1684
        %v2625 = vpack.c.b16 %v1693, %v1689
        %v2626 = vpack.c.b16 %v1694, %v1690
        %v2627 = vpack.c.b16 %v1695, %v1691
        %v2628 = vpack.c.b16 %v1696, %v1692
        %v2629 = vpack.c.b16 %v1701, %v1697
        %v2630 = vpack.c.b16 %v1702, %v1698
        %v2631 = vpack.c.b16 %v1703, %v1699
        %v2632 = vpack.c.b16 %v1704, %v1700
        %v2633 = vpack.c.b16 %v1709, %v1705
        %v2634 = vpack.c.b16 %v1710, %v1706
        %v2635 = vpack.c.b16 %v1711, %v1707
        %v2636 = vpack.c.b16 %v1712, %v1708
        %v2637 = vpack.c.b16 %v1717, %v1713
        %v2638 = vpack.c.b16 %v1718, %v1714
        %v2639 = vpack.c.b16 %v1719, %v1715
        %v2640 = vpack.c.b16 %v1720, %v1716
        %v2641 = vpack.c.b16 %v1725, %v1721
        %v2642 = vpack.c.b16 %v1726, %v1722
        %v2643 = vpack.c.b16 %v1727, %v1723
        %v2644 = vpack.c.b16 %v1728, %v1724
        %v2645 = vpack.c.b16 %v1733, %v1729
        %v2646 = vpack.c.b16 %v1734, %v1730
        %v2647 = vpack.c.b16 %v1735, %v1731
        %v2648 = vpack.c.b16 %v1736, %v1732
        %v2649 = vpack.c.b16 %v1741, %v1737
        %v2650 = vpack.c.b16 %v1742, %v1738
        %v2651 = vpack.c.b16 %v1743, %v1739
        %v2652 = vpack.c.b16 %v1744, %v1740
        %v2653 = vpack.c.b16 %v1749, %v1745
        %v2654 = vpack.c.b16 %v1750, %v1746
        %v2655 = vpack.c.b16 %v1751, %v1747
        %v2656 = vpack.c.b16 %v1752, %v1748
        %v2657 = vpack.c.b16 %v1757, %v1753
        %v2658 = vpack.c.b16 %v1758, %v1754
        %v2659 = vpack.c.b16 %v1759, %v1755
        %v2660 = vpack.c.b16 %v1760, %v1756
        %v2661 = vpack.c.b16 %v1765, %v1761
        %v2662 = vpack.c.b16 %v1766, %v1762
        %v2663 = vpack.c.b16 %v1767, %v1763
        %v2664 = vpack.c.b16 %v1768, %v1764
        %v2665 = vpack.c.b16 %v1773, %v1769
        %v2666 = vpack.c.b16 %v1774, %v1770
        %v2667 = vpack.c.b16 %v1775, %v1771
        %v2668 = vpack.c.b16 %v1776, %v1772
        %v2669 = vpack.c.b16 %v1781, %v1777
        %v2670 = vpack.c.b16 %v1782, %v1778
        %v2671 = vpack.c.b16 %v1783, %v1779
        %v2672 = vpack.c.b16 %v1784, %v1780
        %v2673 = vpack.c.b16 %v1789, %v1785
        %v2674 = vpack.c.b16 %v1790, %v1786
        %v2675 = vpack.c.b16 %v1791, %v1787
        %v2676 = vpack.c.b16 %v1792, %v1788
        %v2677 = vpack.c.b16 %v1797, %v1793
        %v2678 = vpack.c.b16 %v1798, %v1794
        %v2679 = vpack.c.b16 %v1799, %v1795
        %v2680 = vpack.c.b16 %v1800, %v1796
        %v2681 = vpack.c.b16 %v1805, %v1801
        %v2682 = vpack.c.b16 %v1806, %v1802
        %v2683 = vpack.c.b16 %v1807, %v1803
        %v2684 = vpack.c.b16 %v1808, %v1804
        %v2685 = vpack.c.b16 %v1813, %v1809
        %v2686 = vpack.c.b16 %v1814, %v1810
        %v2687 = vpack.c.b16 %v1815, %v1811
        %v2688 = vpack.c.b16 %v1816, %v1812
        %v2689 = vpack.c.b16 %v1821, %v1817
        %v2690 = vpack.c.b16 %v1822, %v1818
        %v2691 = vpack.c.b16 %v1823, %v1819
        %v2692 = vpack.c.b16 %v1824, %v1820
        %v2693 = vpack.c.b16 %v1829, %v1825
        %v2694 = vpack.c.b16 %v1830, %v1826
        %v2695 = vpack.c.b16 %v1831, %v1827
        %v2696 = vpack.c.b16 %v1832, %v1828
        %v2697 = vpack.c.b16 %v1837, %v1833
        %v2698 = vpack.c.b16 %v1838, %v1834
        %v2699 = vpack.c.b16 %v1839, %v1835
        %v2700 = vpack.c.b16 %v1840, %v1836
        %v2701 = vpack.c.b16 %v1845, %v1841
        %v2702 = vpack.c.b16 %v1846, %v1842
        %v2703 = vpack.c.b16 %v1847, %v1843
        %v2704 = vpack.c.b16 %v1848, %v1844
        %v2705 = vpack.c.b16 %v1853, %v1849
        %v2706 = vpack.c.b16 %v1854, %v1850
        %v2707 = vpack.c.b16 %v1855, %v1851
        %v2708 = vpack.c.b16 %v1856, %v1852
        %v2709 = vpack.c.b16 %v1861, %v1857
        %v2710 = vpack.c.b16 %v1862, %v1858
        %v2711 = vpack.c.b16 %v1863, %v1859
        %v2712 = vpack.c.b16 %v1864, %v1860
        %v2713 = vpack.c.b16 %v1869, %v1865
        %v2714 = vpack.c.b16 %v1870, %v1866
        %v2715 = vpack.c.b16 %v1871, %v1867
        %v2716 = vpack.c.b16 %v1872, %v1868
        %v2717 = vpack.c.b16 %v1877, %v1873
        %v2718 = vpack.c.b16 %v1878, %v1874
        %v2719 = vpack.c.b16 %v1879, %v1875
        %v2720 = vpack.c.b16 %v1880, %v1876
        %v2721 = vpack.c.b16 %v1885, %v1881
        %v2722 = vpack.c.b16 %v1886, %v1882
        %v2723 = vpack.c.b16 %v1887, %v1883
        %v2724 = vpack.c.b16 %v1888, %v1884
        %v2725 = vpack.c.b16 %v1893, %v1889
        %v2726 = vpack.c.b16 %v1894, %v1890
        %v2727 = vpack.c.b16 %v1895, %v1891
        %v2728 = vpack.c.b16 %v1896, %v1892
        %v2729 = vpack.c.b16 %v1901, %v1897
        %v2730 = vpack.c.b16 %v1902, %v1898
        %v2731 = vpack.c.b16 %v1903, %v1899
        %v2732 = vpack.c.b16 %v1904, %v1900
        %v2733 = vpack.c.b16 %v1909, %v1905
        %v2734 = vpack.c.b16 %v1910, %v1906
        %v2735 = vpack.c.b16 %v1911, %v1907
        %v2736 = vpack.c.b16 %v1912, %v1908
        %v2737 = vpack.c.b16 %v1917, %v1913
        %v2738 = vpack.c.b16 %v1918, %v1914
        %v2739 = vpack.c.b16 %v1919, %v1915
        %v2740 = vpack.c.b16 %v1920, %v1916
        %v2741 = vpack.c.b16 %v1925, %v1921
        %v2742 = vpack.c.b16 %v1926, %v1922
        %v2743 = vpack.c.b16 %v1927, %v1923
        %v2744 = vpack.c.b16 %v1928, %v1924
        %v2745 = vpack.c.b16 %v1933, %v1929
        %v2746 = vpack.c.b16 %v1934, %v1930
        %v2747 = vpack.c.b16 %v1935, %v1931
        %v2748 = vpack.c.b16 %v1936, %v1932
        %v2749 = vpack.c.b16 %v1941, %v1937
        %v2750 = vpack.c.b16 %v1942, %v1938
        %v2751 = vpack.c.b16 %v1943, %v1939
        %v2752 = vpack.c.b16 %v1944, %v1940
        %v2753 = vpack.c.b16 %v1949, %v1945
        %v2754 = vpack.c.b16 %v1950, %v1946
        %v2755 = vpack.c.b16 %v1951, %v1947
        %v2756 = vpack.c.b16 %v1952, %v1948
        %v2757 = vpack.c.b16 %v1957, %v1953
        %v2758 = vpack.c.b16 %v1958, %v1954
        %v2759 = vpack.c.b16 %v1959, %v1955
        %v2760 = vpack.c.b16 %v1960, %v1956
        %v2761 = vpack.c.b16 %v1965, %v1961
        %v2762 = vpack.c.b16 %v1966, %v1962
        %v2763 = vpack.c.b16 %v1967, %v1963
        %v2764 = vpack.c.b16 %v1968, %v1964
        %v2765 = vpack.c.b16 %v1973, %v1969
        %v2766 = vpack.c.b16 %v1974, %v1970
        %v2767 = vpack.c.b16 %v1975, %v1971
        %v2768 = vpack.c.b16 %v1976, %v1972
        %v2769 = vpack.c.b16 %v1981, %v1977
        %v2770 = vpack.c.b16 %v1982, %v1978
        %v2771 = vpack.c.b16 %v1983, %v1979
        %v2772 = vpack.c.b16 %v1984, %v1980
        %v2773 = vpack.c.b16 %v1989, %v1985
        %v2774 = vpack.c.b16 %v1990, %v1986
        %v2775 = vpack.c.b16 %v1991, %v1987
        %v2776 = vpack.c.b16 %v1992, %v1988
        %v2777 = vpack.c.b16 %v1997, %v1993
        %v2778 = vpack.c.b16 %v1998, %v1994
        %v2779 = vpack.c.b16 %v1999, %v1995
        %v2780 = vpack.c.b16 %v2000, %v1996
        %v2781 = vpack.c.b16 %v2005, %v2001
        %v2782 = vpack.c.b16 %v2006, %v2002
        %v2783 = vpack.c.b16 %v2007, %v2003
        %v2784 = vpack.c.b16 %v2008, %v2004
        %v2785 = vpack.c.b16 %v2013, %v2009
        %v2786 = vpack.c.b16 %v2014, %v2010
        %v2787 = vpack.c.b16 %v2015, %v2011
        %v2788 = vpack.c.b16 %v2016, %v2012
        %v2789 = vpack.c.b16 %v2021, %v2017
        %v2790 = vpack.c.b16 %v2022, %v2018
        %v2791 = vpack.c.b16 %v2023, %v2019
        %v2792 = vpack.c.b16 %v2024, %v2020
        %v2793 = vpack.c.b16 %v2029, %v2025
        %v2794 = vpack.c.b16 %v2030, %v2026
        %v2795 = vpack.c.b16 %v2031, %v2027
        %v2796 = vpack.c.b16 %v2032, %v2028
        %v2797 = vpack.c.b16 %v2037, %v2033
        %v2798 = vpack.c.b16 %v2038, %v2034
        %v2799 = vpack.c.b16 %v2039, %v2035
        %v2800 = vpack.c.b16 %v2040, %v2036
        %v2801 = vpack.c.b16 %v2045, %v2041
        %v2802 = vpack.c.b16 %v2046, %v2042
        %v2803 = vpack.c.b16 %v2047, %v2043
        %v2804 = vpack.c.b16 %v2048, %v2044
        %v2805 = vpack.c.b16 %v2053, %v2049
        %v2806 = vpack.c.b16 %v2054, %v2050
        %v2807 = vpack.c.b16 %v2055, %v2051
        %v2808 = vpack.c.b16 %v2056, %v2052
        %v2809 = vpack.c.b16 %v2061, %v2057
        %v2810 = vpack.c.b16 %v2062, %v2058
        %v2811 = vpack.c.b16 %v2063, %v2059
        %v2812 = vpack.c.b16 %v2064, %v2060
        %v2813 = vpack.c.b16 %v2069, %v2065
        %v2814 = vpack.c.b16 %v2070, %v2066
        %v2815 = vpack.c.b16 %v2071, %v2067
        %v2816 = vpack.c.b16 %v2072, %v2068
        %v2817 = vpack.c.b16 %v2077, %v2073
        %v2818 = vpack.c.b16 %v2078, %v2074
        %v2819 = vpack.c.b16 %v2079, %v2075
        %v2820 = vpack.c.b16 %v2080, %v2076
        %v2821 = vpack.c.b16 %v2085, %v2081
        %v2822 = vpack.c.b16 %v2086, %v2082
        %v2823 = vpack.c.b16 %v2087, %v2083
        %v2824 = vpack.c.b16 %v2088, %v2084
        %v2825 = vpack.c.b16 %v2093, %v2089
        %v2826 = vpack.c.b16 %v2094, %v2090
        %v2827 = vpack.c.b16 %v2095, %v2091
        %v2828 = vpack.c.b16 %v2096, %v2092
        %v2829 = vpack.c.b16 %v2101, %v2097
        %v2830 = vpack.c.b16 %v2102, %v2098
        %v2831 = vpack.c.b16 %v2103, %v2099
        %v2832 = vpack.c.b16 %v2104, %v2100
        %v2833 = vpack.c.b16 %v2109, %v2105
        %v2834 = vpack.c.b16 %v2110, %v2106
        %v2835 = vpack.c.b16 %v2111, %v2107
        %v2836 = vpack.c.b16 %v2112, %v2108
        %v2837 = vpack.c.b16 %v2117, %v2113
        %v2838 = vpack.c.b16 %v2118, %v2114
        %v2839 = vpack.c.b16 %v2119, %v2115
        %v2840 = vpack.c.b16 %v2120, %v2116
        %v2841 = vpack.c.b16 %v2125, %v2121
        %v2842 = vpack.c.b16 %v2126, %v2122
        %v2843 = vpack.c.b16 %v2127, %v2123
        %v2844 = vpack.c.b16 %v2128, %v2124
        %v2845 = vpack.c.b16 %v2133, %v2129
        %v2846 = vpack.c.b16 %v2134, %v2130
        %v2847 = vpack.c.b16 %v2135, %v2131
        %v2848 = vpack.c.b16 %v2136, %v2132
        %v2849 = vpack.c.b16 %v2141, %v2137
        %v2850 = vpack.c.b16 %v2142, %v2138
        %v2851 = vpack.c.b16 %v2143, %v2139
        %v2852 = vpack.c.b16 %v2144, %v2140
        %v2853 = vpack.c.b16 %v2149, %v2145
        %v2854 = vpack.c.b16 %v2150, %v2146
        %v2855 = vpack.c.b16 %v2151, %v2147
        %v2856 = vpack.c.b16 %v2152, %v2148
        %v2857 = vpack.c.b16 %v2157, %v2153
        %v2858 = vpack.c.b16 %v2158, %v2154
        %v2859 = vpack.c.b16 %v2159, %v2155
        %v2860 = vpack.c.b16 %v2160, %v2156
        %v2861 = vpack.c.b16 %v2165, %v2161
        %v2862 = vpack.c.b16 %v2166, %v2162
        %v2863 = vpack.c.b16 %v2167, %v2163
        %v2864 = vpack.c.b16 %v2168, %v2164
        %v2865 = vpack.c.b16 %v2173, %v2169
        %v2866 = vpack.c.b16 %v2174, %v2170
        %v2867 = vpack.c.b16 %v2175, %v2171
        %v2868 = vpack.c.b16 %v2176, %v2172
        %v2869 = vpack.c.b16 %v2181, %v2177
        %v2870 = vpack.c.b16 %v2182, %v2178
        %v2871 = vpack.c.b16 %v2183, %v2179
        %v2872 = vpack.c.b16 %v2184, %v2180
        %v2873 = vpack.c.b16 %v2189, %v2185
        %v2874 = vpack.c.b16 %v2190, %v2186
        %v2875 = vpack.c.b16 %v2191, %v2187
        %v2876 = vpack.c.b16 %v2192, %v2188
        %v2877 = vpack.c.b16 %v2197, %v2193
        %v2878 = vpack.c.b16 %v2198, %v2194
        %v2879 = vpack.c.b16 %v2199, %v2195
        %v2880 = vpack.c.b16 %v2200, %v2196
        %v2881 = vpack.c.b16 %v2205, %v2201
        %v2882 = vpack.c.b16 %v2206, %v2202
        %v2883 = vpack.c.b16 %v2207, %v2203
        %v2884 = vpack.c.b16 %v2208, %v2204
        %v2885 = vpack.c.b16 %v2213, %v2209
        %v2886 = vpack.c.b16 %v2214, %v2210
        %v2887 = vpack.c.b16 %v2215, %v2211
        %v2888 = vpack.c.b16 %v2216, %v2212
        %v2889 = vpack.c.b16 %v2221, %v2217
        %v2890 = vpack.c.b16 %v2222, %v2218
        %v2891 = vpack.c.b16 %v2223, %v2219
        %v2892 = vpack.c.b16 %v2224, %v2220
        %v2893 = vpack.c.b16 %v2229, %v2225
        %v2894 = vpack.c.b16 %v2230, %v2226
        %v2895 = vpack.c.b16 %v2231, %v2227
        %v2896 = vpack.c.b16 %v2232, %v2228
        %v2897 = vpack.c.b16 %v2237, %v2233
        %v2898 = vpack.c.b16 %v2238, %v2234
        %v2899 = vpack.c.b16 %v2239, %v2235
        %v2900 = vpack.c.b16 %v2240, %v2236
        %v2901 = vpack.c.b16 %v2245, %v2241
        %v2902 = vpack.c.b16 %v2246, %v2242
        %v2903 = vpack.c.b16 %v2247, %v2243
        %v2904 = vpack.c.b16 %v2248, %v2244
        %v2905 = vpack.c.b16 %v2253, %v2249
        %v2906 = vpack.c.b16 %v2254, %v2250
        %v2907 = vpack.c.b16 %v2255, %v2251
        %v2908 = vpack.c.b16 %v2256, %v2252
        %v2909 = vpack.c.b16 %v2261, %v2257
        %v2910 = vpack.c.b16 %v2262, %v2258
        %v2911 = vpack.c.b16 %v2263, %v2259
        %v2912 = vpack.c.b16 %v2264, %v2260
        %v2913 = vpack.c.b16 %v2269, %v2265
        %v2914 = vpack.c.b16 %v2270, %v2266
        %v2915 = vpack.c.b16 %v2271, %v2267
        %v2916 = vpack.c.b16 %v2272, %v2268
        %v2917 = vpack.c.b16 %v2277, %v2273
        %v2918 = vpack.c.b16 %v2278, %v2274
        %v2919 = vpack.c.b16 %v2279, %v2275
        %v2920 = vpack.c.b16 %v2280, %v2276
        %v2921 = vpack.c.b16 %v2285, %v2281
        %v2922 = vpack.c.b16 %v2286, %v2282
        %v2923 = vpack.c.b16 %v2287, %v2283
        %v2924 = vpack.c.b16 %v2288, %v2284
        %v2925 = vpack.c.b16 %v2293, %v2289
        %v2926 = vpack.c.b16 %v2294, %v2290
        %v2927 = vpack.c.b16 %v2295, %v2291
        %v2928 = vpack.c.b16 %v2296, %v2292
        %v2929 = vpack.c.b16 %v2301, %v2297
        %v2930 = vpack.c.b16 %v2302, %v2298
        %v2931 = vpack.c.b16 %v2303, %v2299
        %v2932 = vpack.c.b16 %v2304, %v2300
        %v2933 = vpack.c.b16 %v2309, %v2305
        %v2934 = vpack.c.b16 %v2310, %v2306
        %v2935 = vpack.c.b16 %v2311, %v2307
        %v2936 = vpack.c.b16 %v2312, %v2308
        %v2937 = vpack.c.b16 %v2317, %v2313
        %v2938 = vpack.c.b16 %v2318, %v2314
        %v2939 = vpack.c.b16 %v2319, %v2315
        %v2940 = vpack.c.b16 %v2320, %v2316
        %v2941 = vpack.c.b16 %v2325, %v2321
        %v2942 = vpack.c.b16 %v2326, %v2322
        %v2943 = vpack.c.b16 %v2327, %v2323
        %v2944 = vpack.c.b16 %v2328, %v2324
        %v2945 = vpack.c.b16 %v2333, %v2329
        %v2946 = vpack.c.b16 %v2334, %v2330
        %v2947 = vpack.c.b16 %v2335, %v2331
        %v2948 = vpack.c.b16 %v2336, %v2332
        %v2949 = vpack.c.b16 %v2341, %v2337
        %v2950 = vpack.c.b16 %v2342, %v2338
        %v2951 = vpack.c.b16 %v2343, %v2339
        %v2952 = vpack.c.b16 %v2344, %v2340
        %v2953 = vpack.c.b16 %v2349, %v2345
        %v2954 = vpack.c.b16 %v2350, %v2346
        %v2955 = vpack.c.b16 %v2351, %v2347
        %v2956 = vpack.c.b16 %v2352, %v2348
        %v2957 = vpack.c.b16 %v2357, %v2353
        %v2958 = vpack.c.b16 %v2358, %v2354
        %v2959 = vpack.c.b16 %v2359, %v2355
        %v2960 = vpack.c.b16 %v2360, %v2356
        %v2961 = vpack.c.b16 %v2365, %v2361
        %v2962 = vpack.c.b16 %v2366, %v2362
        %v2963 = vpack.c.b16 %v2367, %v2363
        %v2964 = vpack.c.b16 %v2368, %v2364
        %v2965 = vpack.c.b16 %v2373, %v2369
        %v2966 = vpack.c.b16 %v2374, %v2370
        %v2967 = vpack.c.b16 %v2375, %v2371
        %v2968 = vpack.c.b16 %v2376, %v2372
        %v2969 = vpack.c.b16 %v2381, %v2377
        %v2970 = vpack.c.b16 %v2382, %v2378
        %v2971 = vpack.c.b16 %v2383, %v2379
        %v2972 = vpack.c.b16 %v2384, %v2380
        %v2973 = vpack.c.b16 %v2389, %v2385
        %v2974 = vpack.c.b16 %v2390, %v2386
        %v2975 = vpack.c.b16 %v2391, %v2387
        %v2976 = vpack.c.b16 %v2392, %v2388
        %v2977 = vpack.c.b16 %v2397, %v2393
        %v2978 = vpack.c.b16 %v2398, %v2394
        %v2979 = vpack.c.b16 %v2399, %v2395
        %v2980 = vpack.c.b16 %v2400, %v2396
        %v2981 = vpack.c.b16 %v2405, %v2401
        %v2982 = vpack.c.b16 %v2406, %v2402
        %v2983 = vpack.c.b16 %v2407, %v2403
        %v2984 = vpack.c.b16 %v2408, %v2404
        %v2985 = vpack.c.b16 %v2413, %v2409
        %v2986 = vpack.c.b16 %v2414, %v2410
        %v2987 = vpack.c.b16 %v2415, %v2411
        %v2988 = vpack.c.b16 %v2416, %v2412
        %v2989 = vpack.c.b16 %v2421, %v2417
        %v2990 = vpack.c.b16 %v2422, %v2418
        %v2991 = vpack.c.b16 %v2423, %v2419
        %v2992 = vpack.c.b16 %v2424, %v2420
        %v2993 = vpack.c.b16 %v2429, %v2425
        %v2994 = vpack.c.b16 %v2430, %v2426
        %v2995 = vpack.c.b16 %v2431, %v2427
        %v2996 = vpack.c.b16 %v2432, %v2428
        %v2997 = vpack.c.b16 %v2437, %v2433
        %v2998 = vpack.c.b16 %v2438, %v2434
        %v2999 = vpack.c.b16 %v2439, %v2435
        %v3000 = vpack.c.b16 %v2440, %v2436
        %v3001 = vpack.c.b16 %v2445, %v2441
        %v3002 = vpack.c.b16 %v2446, %v2442
        %v3003 = vpack.c.b16 %v2447, %v2443
        %v3004 = vpack.c.b16 %v2448, %v2444
        %v3005 = vpack.c.b16 %v2453, %v2449
        %v3006 = vpack.c.b16 %v2454, %v2450
        %v3007 = vpack.c.b16 %v2455, %v2451
        %v3008 = vpack.c.b16 %v2456, %v2452
        %v3009 = vpack.c.b16 %v2461, %v2457
        %v3010 = vpack.c.b16 %v2462, %v2458
        %v3011 = vpack.c.b16 %v2463, %v2459
        %v3012 = vpack.c.b16 %v2464, %v2460
        %v3013 = vpack.c.b16 %v2469, %v2465
        %v3014 = vpack.c.b16 %v2470, %v2466
        %v3015 = vpack.c.b16 %v2471, %v2467
        %v3016 = vpack.c.b16 %v2472, %v2468
        %v3017 = vpack.c.b16 %v2477, %v2473
        %v3018 = vpack.c.b16 %v2478, %v2474
        %v3019 = vpack.c.b16 %v2479, %v2475
        %v3020 = vpack.c.b16 %v2480, %v2476
        %v3021 = vpack.c.b16 %v2485, %v2481
        %v3022 = vpack.c.b16 %v2486, %v2482
        %v3023 = vpack.c.b16 %v2487, %v2483
        %v3024 = vpack.c.b16 %v2488, %v2484
        %v3025 = vpack.c.b16 %v2493, %v2489
        %v3026 = vpack.c.b16 %v2494, %v2490
        %v3027 = vpack.c.b16 %v2495, %v2491
        %v3028 = vpack.c.b16 %v2496, %v2492
        %v3029 = vpack.c.b16 %v2501, %v2497
        %v3030 = vpack.c.b16 %v2502, %v2498
        %v3031 = vpack.c.b16 %v2503, %v2499
        %v3032 = vpack.c.b16 %v2504, %v2500
        %v3033 = vpack.c.b16 %v2509, %v2505
        %v3034 = vpack.c.b16 %v2510, %v2506
        %v3035 = vpack.c.b16 %v2511, %v2507
        %v3036 = vpack.c.b16 %v2512, %v2508
        %v3037 = vpack.c.b16 %v2517, %v2513
        %v3038 = vpack.c.b16 %v2518, %v2514
        %v3039 = vpack.c.b16 %v2519, %v2515
        %v3040 = vpack.c.b16 %v2520, %v2516
        %v3041 = vpack.c.b16 %v2525, %v2521
        %v3042 = vpack.c.b16 %v2526, %v2522
        %v3043 = vpack.c.b16 %v2527, %v2523
        %v3044 = vpack.c.b16 %v2528, %v2524
        %v3045 = vpack.c.b16 %v2533, %v2529
        %v3046 = vpack.c.b16 %v2534, %v2530
        %v3047 = vpack.c.b16 %v2535, %v2531
        %v3048 = vpack.c.b16 %v2536, %v2532
        %v3049 = vpack.c.b16 %v2541, %v2537
        %v3050 = vpack.c.b16 %v2542, %v2538
        %v3051 = vpack.c.b16 %v2543, %v2539
        %v3052 = vpack.c.b16 %v2544, %v2540
        %v3053 = vpack.c.b16 %v2549, %v2545
        %v3054 = vpack.c.b16 %v2550, %v2546
        %v3055 = vpack.c.b16 %v2551, %v2547
        %v3056 = vpack.c.b16 %v2552, %v2548
        %v3057 = vpack.c.b16 %v2557, %v2553
        %v3058 = vpack.c.b16 %v2558, %v2554
        %v3059 = vpack.c.b16 %v2559, %v2555
        %v3060 = vpack.c.b16 %v2560, %v2556
        %vm3561 = vcmask 654336
        %v3563 = vsel %vm3561, %v485, 0
        %v3566 = vsel %vm3561, %v501, 0
        %3568 = vmatpush.bf16.msra.mxu0 %v2589
        %3569 = vmatpush.bf16.msra.mxu0 %v2585
        %3570 = vmatpush.bf16.msra.mxu0 %v2581
        %3571 = vmatpush.bf16.msra.mxu0 %v2577
        %3572 = vmatpush.bf16.msra.mxu0 %v2573
        %3573 = vmatpush.bf16.msra.mxu0 %v2569
        %3574 = vmatpush.bf16.msra.mxu0 %v2565
        %3575 = vmatpush.bf16.msra.mxu0 %v2561
        %3576 = vmatmul.bf16.gmra.mxu0 %v470
        %v3577 = vpop.f32.mrf.mxu0
        %v3578 = vadd.f32 %v1045, %v3577
        %v3579 = vpop.f32.mrf.mxu0
        %v3580 = vadd.f32 %v1049, %v3579
        %3581 = vmatmul.bf16.gmra.mxu0 %v486
        %v3582 = vpop.f32.mrf.mxu0
        %v3583 = vadd.f32 %v1053, %v3582
        %v3584 = vpop.f32.mrf.mxu0
        %v3585 = vadd.f32 %v1057, %v3584
        %3586 = vdwg.mxu0
        %3587 = vmatpush.bf16.msra.mxu0 %v2621
        %3588 = vmatpush.bf16.msra.mxu0 %v2617
        %3589 = vmatpush.bf16.msra.mxu0 %v2613
        %3590 = vmatpush.bf16.msra.mxu0 %v2609
        %3591 = vmatpush.bf16.msra.mxu0 %v2605
        %3592 = vmatpush.bf16.msra.mxu0 %v2601
        %3593 = vmatpush.bf16.msra.mxu0 %v2597
        %3594 = vmatpush.bf16.msra.mxu0 %v2593
        %3595 = vmatmul.bf16.gmra.mxu0 %v471
        %v3596 = vpop.f32.mrf.mxu0
        %v3597 = vadd.f32 %v3578, %v3596
        %v3598 = vpop.f32.mrf.mxu0
        %v3599 = vadd.f32 %v3580, %v3598
        %3600 = vmatmul.bf16.gmra.mxu0 %v487
        %v3601 = vpop.f32.mrf.mxu0
        %v3602 = vadd.f32 %v3583, %v3601
        %v3603 = vpop.f32.mrf.mxu0
        %v3604 = vadd.f32 %v3585, %v3603
        %3605 = vdwg.mxu0
        %3606 = vmatpush.bf16.msra.mxu0 %v2653
        %3607 = vmatpush.bf16.msra.mxu0 %v2649
        %3608 = vmatpush.bf16.msra.mxu0 %v2645
        %3609 = vmatpush.bf16.msra.mxu0 %v2641
        %3610 = vmatpush.bf16.msra.mxu0 %v2637
        %3611 = vmatpush.bf16.msra.mxu0 %v2633
        %3612 = vmatpush.bf16.msra.mxu0 %v2629
        %3613 = vmatpush.bf16.msra.mxu0 %v2625
        %3614 = vmatmul.bf16.gmra.mxu0 %v472
        %v3615 = vpop.f32.mrf.mxu0
        %v3616 = vadd.f32 %v3597, %v3615
        %v3617 = vpop.f32.mrf.mxu0
        %v3618 = vadd.f32 %v3599, %v3617
        %3619 = vmatmul.bf16.gmra.mxu0 %v488
        %v3620 = vpop.f32.mrf.mxu0
        %v3621 = vadd.f32 %v3602, %v3620
        %v3622 = vpop.f32.mrf.mxu0
        %v3623 = vadd.f32 %v3604, %v3622
        %3624 = vdwg.mxu0
        %3625 = vmatpush.bf16.msra.mxu0 %v2685
        %3626 = vmatpush.bf16.msra.mxu0 %v2681
        %3627 = vmatpush.bf16.msra.mxu0 %v2677
        %3628 = vmatpush.bf16.msra.mxu0 %v2673
        %3629 = vmatpush.bf16.msra.mxu0 %v2669
        %3630 = vmatpush.bf16.msra.mxu0 %v2665
        %3631 = vmatpush.bf16.msra.mxu0 %v2661
        %3632 = vmatpush.bf16.msra.mxu0 %v2657
        %3633 = vmatmul.bf16.gmra.mxu0 %v473
        %v3634 = vpop.f32.mrf.mxu0
        %v3635 = vadd.f32 %v3616, %v3634
        %v3636 = vpop.f32.mrf.mxu0
        %v3637 = vadd.f32 %v3618, %v3636
        %3638 = vmatmul.bf16.gmra.mxu0 %v489
        %v3639 = vpop.f32.mrf.mxu0
        %v3640 = vadd.f32 %v3621, %v3639
        %v3641 = vpop.f32.mrf.mxu0
        %v3642 = vadd.f32 %v3623, %v3641
        %3643 = vdwg.mxu0
        %3644 = vmatpush.bf16.msra.mxu0 %v2717
        %3645 = vmatpush.bf16.msra.mxu0 %v2713
        %3646 = vmatpush.bf16.msra.mxu0 %v2709
        %3647 = vmatpush.bf16.msra.mxu0 %v2705
        %3648 = vmatpush.bf16.msra.mxu0 %v2701
        %3649 = vmatpush.bf16.msra.mxu0 %v2697
        %3650 = vmatpush.bf16.msra.mxu0 %v2693
        %3651 = vmatpush.bf16.msra.mxu0 %v2689
        %3652 = vmatmul.bf16.gmra.mxu0 %v474
        %v3653 = vpop.f32.mrf.mxu0
        %v3654 = vadd.f32 %v3635, %v3653
        %v3655 = vpop.f32.mrf.mxu0
        %v3656 = vadd.f32 %v3637, %v3655
        %3657 = vmatmul.bf16.gmra.mxu0 %v490
        %v3658 = vpop.f32.mrf.mxu0
        %v3659 = vadd.f32 %v3640, %v3658
        %v3660 = vpop.f32.mrf.mxu0
        %v3661 = vadd.f32 %v3642, %v3660
        %3662 = vdwg.mxu0
        %3663 = vmatpush.bf16.msra.mxu0 %v2749
        %3664 = vmatpush.bf16.msra.mxu0 %v2745
        %3665 = vmatpush.bf16.msra.mxu0 %v2741
        %3666 = vmatpush.bf16.msra.mxu0 %v2737
        %3667 = vmatpush.bf16.msra.mxu0 %v2733
        %3668 = vmatpush.bf16.msra.mxu0 %v2729
        %3669 = vmatpush.bf16.msra.mxu0 %v2725
        %3670 = vmatpush.bf16.msra.mxu0 %v2721
        %3671 = vmatmul.bf16.gmra.mxu0 %v475
        %v3672 = vpop.f32.mrf.mxu0
        %v3673 = vadd.f32 %v3654, %v3672
        %v3674 = vpop.f32.mrf.mxu0
        %v3675 = vadd.f32 %v3656, %v3674
        %3676 = vmatmul.bf16.gmra.mxu0 %v491
        %v3677 = vpop.f32.mrf.mxu0
        %v3678 = vadd.f32 %v3659, %v3677
        %v3679 = vpop.f32.mrf.mxu0
        %v3680 = vadd.f32 %v3661, %v3679
        %3681 = vdwg.mxu0
        %3682 = vmatpush.bf16.msra.mxu0 %v2781
        %3683 = vmatpush.bf16.msra.mxu0 %v2777
        %3684 = vmatpush.bf16.msra.mxu0 %v2773
        %3685 = vmatpush.bf16.msra.mxu0 %v2769
        %3686 = vmatpush.bf16.msra.mxu0 %v2765
        %3687 = vmatpush.bf16.msra.mxu0 %v2761
        %3688 = vmatpush.bf16.msra.mxu0 %v2757
        %3689 = vmatpush.bf16.msra.mxu0 %v2753
        %3690 = vmatmul.bf16.gmra.mxu0 %v476
        %v3691 = vpop.f32.mrf.mxu0
        %v3692 = vadd.f32 %v3673, %v3691
        %v3693 = vpop.f32.mrf.mxu0
        %v3694 = vadd.f32 %v3675, %v3693
        %3695 = vmatmul.bf16.gmra.mxu0 %v492
        %v3696 = vpop.f32.mrf.mxu0
        %v3697 = vadd.f32 %v3678, %v3696
        %v3698 = vpop.f32.mrf.mxu0
        %v3699 = vadd.f32 %v3680, %v3698
        %3700 = vdwg.mxu0
        %3701 = vmatpush.bf16.msra.mxu0 %v2813
        %3702 = vmatpush.bf16.msra.mxu0 %v2809
        %3703 = vmatpush.bf16.msra.mxu0 %v2805
        %3704 = vmatpush.bf16.msra.mxu0 %v2801
        %3705 = vmatpush.bf16.msra.mxu0 %v2797
        %3706 = vmatpush.bf16.msra.mxu0 %v2793
        %3707 = vmatpush.bf16.msra.mxu0 %v2789
        %3708 = vmatpush.bf16.msra.mxu0 %v2785
        %3709 = vmatmul.bf16.gmra.mxu0 %v477
        %v3710 = vpop.f32.mrf.mxu0
        %v3711 = vadd.f32 %v3692, %v3710
        %v3712 = vpop.f32.mrf.mxu0
        %v3713 = vadd.f32 %v3694, %v3712
        %3714 = vmatmul.bf16.gmra.mxu0 %v493
        %v3715 = vpop.f32.mrf.mxu0
        %v3716 = vadd.f32 %v3697, %v3715
        %v3717 = vpop.f32.mrf.mxu0
        %v3718 = vadd.f32 %v3699, %v3717
        %3719 = vdwg.mxu0
        %3720 = vmatpush.bf16.msra.mxu0 %v2845
        %3721 = vmatpush.bf16.msra.mxu0 %v2841
        %3722 = vmatpush.bf16.msra.mxu0 %v2837
        %3723 = vmatpush.bf16.msra.mxu0 %v2833
        %3724 = vmatpush.bf16.msra.mxu0 %v2829
        %3725 = vmatpush.bf16.msra.mxu0 %v2825
        %3726 = vmatpush.bf16.msra.mxu0 %v2821
        %3727 = vmatpush.bf16.msra.mxu0 %v2817
        %3728 = vmatmul.bf16.gmra.mxu0 %v478
        %v3729 = vpop.f32.mrf.mxu0
        %v3730 = vadd.f32 %v3711, %v3729
        %v3731 = vpop.f32.mrf.mxu0
        %v3732 = vadd.f32 %v3713, %v3731
        %3733 = vmatmul.bf16.gmra.mxu0 %v494
        %v3734 = vpop.f32.mrf.mxu0
        %v3735 = vadd.f32 %v3716, %v3734
        %v3736 = vpop.f32.mrf.mxu0
        %v3737 = vadd.f32 %v3718, %v3736
        %3738 = vdwg.mxu0
        %3739 = vmatpush.bf16.msra.mxu0 %v2877
        %3740 = vmatpush.bf16.msra.mxu0 %v2873
        %3741 = vmatpush.bf16.msra.mxu0 %v2869
        %3742 = vmatpush.bf16.msra.mxu0 %v2865
        %3743 = vmatpush.bf16.msra.mxu0 %v2861
        %3744 = vmatpush.bf16.msra.mxu0 %v2857
        %3745 = vmatpush.bf16.msra.mxu0 %v2853
        %3746 = vmatpush.bf16.msra.mxu0 %v2849
        %3747 = vmatmul.bf16.gmra.mxu0 %v479
        %v3748 = vpop.f32.mrf.mxu0
        %v3749 = vadd.f32 %v3730, %v3748
        %v3750 = vpop.f32.mrf.mxu0
        %v3751 = vadd.f32 %v3732, %v3750
        %3752 = vmatmul.bf16.gmra.mxu0 %v495
        %v3753 = vpop.f32.mrf.mxu0
        %v3754 = vadd.f32 %v3735, %v3753
        %v3755 = vpop.f32.mrf.mxu0
        %v3756 = vadd.f32 %v3737, %v3755
        %3757 = vdwg.mxu0
        %3758 = vmatpush.bf16.msra.mxu0 %v2909
        %3759 = vmatpush.bf16.msra.mxu0 %v2905
        %3760 = vmatpush.bf16.msra.mxu0 %v2901
        %3761 = vmatpush.bf16.msra.mxu0 %v2897
        %3762 = vmatpush.bf16.msra.mxu0 %v2893
        %3763 = vmatpush.bf16.msra.mxu0 %v2889
        %3764 = vmatpush.bf16.msra.mxu0 %v2885
        %3765 = vmatpush.bf16.msra.mxu0 %v2881
        %3766 = vmatmul.bf16.gmra.mxu0 %v480
        %v3767 = vpop.f32.mrf.mxu0
        %v3768 = vadd.f32 %v3749, %v3767
        %v3769 = vpop.f32.mrf.mxu0
        %v3770 = vadd.f32 %v3751, %v3769
        %3771 = vmatmul.bf16.gmra.mxu0 %v496
        %v3772 = vpop.f32.mrf.mxu0
        %v3773 = vadd.f32 %v3754, %v3772
        %v3774 = vpop.f32.mrf.mxu0
        %v3775 = vadd.f32 %v3756, %v3774
        %3776 = vdwg.mxu0
        %3777 = vmatpush.bf16.msra.mxu0 %v2941
        %3778 = vmatpush.bf16.msra.mxu0 %v2937
        %3779 = vmatpush.bf16.msra.mxu0 %v2933
        %3780 = vmatpush.bf16.msra.mxu0 %v2929
        %3781 = vmatpush.bf16.msra.mxu0 %v2925
        %3782 = vmatpush.bf16.msra.mxu0 %v2921
        %3783 = vmatpush.bf16.msra.mxu0 %v2917
        %3784 = vmatpush.bf16.msra.mxu0 %v2913
        %3785 = vmatmul.bf16.gmra.mxu0 %v481
        %v3786 = vpop.f32.mrf.mxu0
        %v3787 = vadd.f32 %v3768, %v3786
        %v3788 = vpop.f32.mrf.mxu0
        %v3789 = vadd.f32 %v3770, %v3788
        %3790 = vmatmul.bf16.gmra.mxu0 %v497
        %v3791 = vpop.f32.mrf.mxu0
        %v3792 = vadd.f32 %v3773, %v3791
        %v3793 = vpop.f32.mrf.mxu0
        %v3794 = vadd.f32 %v3775, %v3793
        %3795 = vdwg.mxu0
        %3796 = vmatpush.bf16.msra.mxu0 %v2973
        %3797 = vmatpush.bf16.msra.mxu0 %v2969
        %3798 = vmatpush.bf16.msra.mxu0 %v2965
        %3799 = vmatpush.bf16.msra.mxu0 %v2961
        %3800 = vmatpush.bf16.msra.mxu0 %v2957
        %3801 = vmatpush.bf16.msra.mxu0 %v2953
        %3802 = vmatpush.bf16.msra.mxu0 %v2949
        %3803 = vmatpush.bf16.msra.mxu0 %v2945
        %3804 = vmatmul.bf16.gmra.mxu0 %v482
        %v3805 = vpop.f32.mrf.mxu0
        %v3806 = vadd.f32 %v3787, %v3805
        %v3807 = vpop.f32.mrf.mxu0
        %v3808 = vadd.f32 %v3789, %v3807
        %3809 = vmatmul.bf16.gmra.mxu0 %v498
        %v3810 = vpop.f32.mrf.mxu0
        %v3811 = vadd.f32 %v3792, %v3810
        %v3812 = vpop.f32.mrf.mxu0
        %v3813 = vadd.f32 %v3794, %v3812
        %3814 = vdwg.mxu0
        %3815 = vmatpush.bf16.msra.mxu0 %v3005
        %3816 = vmatpush.bf16.msra.mxu0 %v3001
        %3817 = vmatpush.bf16.msra.mxu0 %v2997
        %3818 = vmatpush.bf16.msra.mxu0 %v2993
        %3819 = vmatpush.bf16.msra.mxu0 %v2989
        %3820 = vmatpush.bf16.msra.mxu0 %v2985
        %3821 = vmatpush.bf16.msra.mxu0 %v2981
        %3822 = vmatpush.bf16.msra.mxu0 %v2977
        %3823 = vmatmul.bf16.gmra.mxu0 %v483
        %v3824 = vpop.f32.mrf.mxu0
        %v3825 = vadd.f32 %v3806, %v3824
        %v3826 = vpop.f32.mrf.mxu0
        %v3827 = vadd.f32 %v3808, %v3826
        %3828 = vmatmul.bf16.gmra.mxu0 %v499
        %v3829 = vpop.f32.mrf.mxu0
        %v3830 = vadd.f32 %v3811, %v3829
        %v3831 = vpop.f32.mrf.mxu0
        %v3832 = vadd.f32 %v3813, %v3831
        %3833 = vdwg.mxu0
        %3834 = vmatpush.bf16.msra.mxu0 %v3037
        %3835 = vmatpush.bf16.msra.mxu0 %v3033
        %3836 = vmatpush.bf16.msra.mxu0 %v3029
        %3837 = vmatpush.bf16.msra.mxu0 %v3025
        %3838 = vmatpush.bf16.msra.mxu0 %v3021
        %3839 = vmatpush.bf16.msra.mxu0 %v3017
        %3840 = vmatpush.bf16.msra.mxu0 %v3013
        %3841 = vmatpush.bf16.msra.mxu0 %v3009
        %3842 = vmatmul.bf16.gmra.mxu0 %v484
        %v3843 = vpop.f32.mrf.mxu0
        %v3844 = vadd.f32 %v3825, %v3843
        %v3845 = vpop.f32.mrf.mxu0
        %v3846 = vadd.f32 %v3827, %v3845
        %3847 = vmatmul.bf16.gmra.mxu0 %v500
        %v3848 = vpop.f32.mrf.mxu0
        %v3849 = vadd.f32 %v3830, %v3848
        %v3850 = vpop.f32.mrf.mxu0
        %v3851 = vadd.f32 %v3832, %v3850
        %3852 = vdwg.mxu0
        %3853 = vmatpush.bf16.msra.mxu0 0
        %3854 = vmatpush.bf16.msra.mxu0 0
        %3855 = vmatpush.bf16.msra.mxu0 0
        %3856 = vmatpush.bf16.msra.mxu0 %v3057
        %3857 = vmatpush.bf16.msra.mxu0 %v3053
        %3858 = vmatpush.bf16.msra.mxu0 %v3049
        %3859 = vmatpush.bf16.msra.mxu0 %v3045
        %3860 = vmatpush.bf16.msra.mxu0 %v3041
        %3861 = vmatmul.bf16.gmra.mxu0 %v3563
        %v3862 = vpop.f32.mrf.mxu0
        %v3863 = vadd.f32 %v3844, %v3862
        %v3864 = vpop.f32.mrf.mxu0
        %v3865 = vadd.f32 %v3846, %v3864
        %3866 = vmatmul.bf16.gmra.mxu0 %v3566
        %v3867 = vpop.f32.mrf.mxu0
        %v3868 = vadd.f32 %v3849, %v3867
        %v3869 = vpop.f32.mrf.mxu0
        %v3870 = vadd.f32 %v3851, %v3869
        %3871 = vdwg.mxu0
        %3872 = vmatpush.bf16.msra.mxu0 %v2590
        %3873 = vmatpush.bf16.msra.mxu0 %v2586
        %3874 = vmatpush.bf16.msra.mxu0 %v2582
        %3875 = vmatpush.bf16.msra.mxu0 %v2578
        %3876 = vmatpush.bf16.msra.mxu0 %v2574
        %3877 = vmatpush.bf16.msra.mxu0 %v2570
        %3878 = vmatpush.bf16.msra.mxu0 %v2566
        %3879 = vmatpush.bf16.msra.mxu0 %v2562
        %3880 = vmatmul.bf16.gmra.mxu0 %v470
        %v3881 = vpop.f32.mrf.mxu0
        %v3882 = vadd.f32 %v1046, %v3881
        %v3883 = vpop.f32.mrf.mxu0
        %v3884 = vadd.f32 %v1050, %v3883
        %3885 = vmatmul.bf16.gmra.mxu0 %v486
        %v3886 = vpop.f32.mrf.mxu0
        %v3887 = vadd.f32 %v1054, %v3886
        %v3888 = vpop.f32.mrf.mxu0
        %v3889 = vadd.f32 %v1058, %v3888
        %3890 = vdwg.mxu0
        %3891 = vmatpush.bf16.msra.mxu0 %v2622
        %3892 = vmatpush.bf16.msra.mxu0 %v2618
        %3893 = vmatpush.bf16.msra.mxu0 %v2614
        %3894 = vmatpush.bf16.msra.mxu0 %v2610
        %3895 = vmatpush.bf16.msra.mxu0 %v2606
        %3896 = vmatpush.bf16.msra.mxu0 %v2602
        %3897 = vmatpush.bf16.msra.mxu0 %v2598
        %3898 = vmatpush.bf16.msra.mxu0 %v2594
        %3899 = vmatmul.bf16.gmra.mxu0 %v471
        %v3900 = vpop.f32.mrf.mxu0
        %v3901 = vadd.f32 %v3882, %v3900
        %v3902 = vpop.f32.mrf.mxu0
        %v3903 = vadd.f32 %v3884, %v3902
        %3904 = vmatmul.bf16.gmra.mxu0 %v487
        %v3905 = vpop.f32.mrf.mxu0
        %v3906 = vadd.f32 %v3887, %v3905
        %v3907 = vpop.f32.mrf.mxu0
        %v3908 = vadd.f32 %v3889, %v3907
        %3909 = vdwg.mxu0
        %3910 = vmatpush.bf16.msra.mxu0 %v2654
        %3911 = vmatpush.bf16.msra.mxu0 %v2650
        %3912 = vmatpush.bf16.msra.mxu0 %v2646
        %3913 = vmatpush.bf16.msra.mxu0 %v2642
        %3914 = vmatpush.bf16.msra.mxu0 %v2638
        %3915 = vmatpush.bf16.msra.mxu0 %v2634
        %3916 = vmatpush.bf16.msra.mxu0 %v2630
        %3917 = vmatpush.bf16.msra.mxu0 %v2626
        %3918 = vmatmul.bf16.gmra.mxu0 %v472
        %v3919 = vpop.f32.mrf.mxu0
        %v3920 = vadd.f32 %v3901, %v3919
        %v3921 = vpop.f32.mrf.mxu0
        %v3922 = vadd.f32 %v3903, %v3921
        %3923 = vmatmul.bf16.gmra.mxu0 %v488
        %v3924 = vpop.f32.mrf.mxu0
        %v3925 = vadd.f32 %v3906, %v3924
        %v3926 = vpop.f32.mrf.mxu0
        %v3927 = vadd.f32 %v3908, %v3926
        %3928 = vdwg.mxu0
        %3929 = vmatpush.bf16.msra.mxu0 %v2686
        %3930 = vmatpush.bf16.msra.mxu0 %v2682
        %3931 = vmatpush.bf16.msra.mxu0 %v2678
        %3932 = vmatpush.bf16.msra.mxu0 %v2674
        %3933 = vmatpush.bf16.msra.mxu0 %v2670
        %3934 = vmatpush.bf16.msra.mxu0 %v2666
        %3935 = vmatpush.bf16.msra.mxu0 %v2662
        %3936 = vmatpush.bf16.msra.mxu0 %v2658
        %3937 = vmatmul.bf16.gmra.mxu0 %v473
        %v3938 = vpop.f32.mrf.mxu0
        %v3939 = vadd.f32 %v3920, %v3938
        %v3940 = vpop.f32.mrf.mxu0
        %v3941 = vadd.f32 %v3922, %v3940
        %3942 = vmatmul.bf16.gmra.mxu0 %v489
        %v3943 = vpop.f32.mrf.mxu0
        %v3944 = vadd.f32 %v3925, %v3943
        %v3945 = vpop.f32.mrf.mxu0
        %v3946 = vadd.f32 %v3927, %v3945
        %3947 = vdwg.mxu0
        %3948 = vmatpush.bf16.msra.mxu0 %v2718
        %3949 = vmatpush.bf16.msra.mxu0 %v2714
        %3950 = vmatpush.bf16.msra.mxu0 %v2710
        %3951 = vmatpush.bf16.msra.mxu0 %v2706
        %3952 = vmatpush.bf16.msra.mxu0 %v2702
        %3953 = vmatpush.bf16.msra.mxu0 %v2698
        %3954 = vmatpush.bf16.msra.mxu0 %v2694
        %3955 = vmatpush.bf16.msra.mxu0 %v2690
        %3956 = vmatmul.bf16.gmra.mxu0 %v474
        %v3957 = vpop.f32.mrf.mxu0
        %v3958 = vadd.f32 %v3939, %v3957
        %v3959 = vpop.f32.mrf.mxu0
        %v3960 = vadd.f32 %v3941, %v3959
        %3961 = vmatmul.bf16.gmra.mxu0 %v490
        %v3962 = vpop.f32.mrf.mxu0
        %v3963 = vadd.f32 %v3944, %v3962
        %v3964 = vpop.f32.mrf.mxu0
        %v3965 = vadd.f32 %v3946, %v3964
        %3966 = vdwg.mxu0
        %3967 = vmatpush.bf16.msra.mxu0 %v2750
        %3968 = vmatpush.bf16.msra.mxu0 %v2746
        %3969 = vmatpush.bf16.msra.mxu0 %v2742
        %3970 = vmatpush.bf16.msra.mxu0 %v2738
        %3971 = vmatpush.bf16.msra.mxu0 %v2734
        %3972 = vmatpush.bf16.msra.mxu0 %v2730
        %3973 = vmatpush.bf16.msra.mxu0 %v2726
        %3974 = vmatpush.bf16.msra.mxu0 %v2722
        %3975 = vmatmul.bf16.gmra.mxu0 %v475
        %v3976 = vpop.f32.mrf.mxu0
        %v3977 = vadd.f32 %v3958, %v3976
        %v3978 = vpop.f32.mrf.mxu0
        %v3979 = vadd.f32 %v3960, %v3978
        %3980 = vmatmul.bf16.gmra.mxu0 %v491
        %v3981 = vpop.f32.mrf.mxu0
        %v3982 = vadd.f32 %v3963, %v3981
        %v3983 = vpop.f32.mrf.mxu0
        %v3984 = vadd.f32 %v3965, %v3983
        %3985 = vdwg.mxu0
        %3986 = vmatpush.bf16.msra.mxu0 %v2782
        %3987 = vmatpush.bf16.msra.mxu0 %v2778
        %3988 = vmatpush.bf16.msra.mxu0 %v2774
        %3989 = vmatpush.bf16.msra.mxu0 %v2770
        %3990 = vmatpush.bf16.msra.mxu0 %v2766
        %3991 = vmatpush.bf16.msra.mxu0 %v2762
        %3992 = vmatpush.bf16.msra.mxu0 %v2758
        %3993 = vmatpush.bf16.msra.mxu0 %v2754
        %3994 = vmatmul.bf16.gmra.mxu0 %v476
        %v3995 = vpop.f32.mrf.mxu0
        %v3996 = vadd.f32 %v3977, %v3995
        %v3997 = vpop.f32.mrf.mxu0
        %v3998 = vadd.f32 %v3979, %v3997
        %3999 = vmatmul.bf16.gmra.mxu0 %v492
        %v4000 = vpop.f32.mrf.mxu0
        %v4001 = vadd.f32 %v3982, %v4000
        %v4002 = vpop.f32.mrf.mxu0
        %v4003 = vadd.f32 %v3984, %v4002
        %4004 = vdwg.mxu0
        %4005 = vmatpush.bf16.msra.mxu0 %v2814
        %4006 = vmatpush.bf16.msra.mxu0 %v2810
        %4007 = vmatpush.bf16.msra.mxu0 %v2806
        %4008 = vmatpush.bf16.msra.mxu0 %v2802
        %4009 = vmatpush.bf16.msra.mxu0 %v2798
        %4010 = vmatpush.bf16.msra.mxu0 %v2794
        %4011 = vmatpush.bf16.msra.mxu0 %v2790
        %4012 = vmatpush.bf16.msra.mxu0 %v2786
        %4013 = vmatmul.bf16.gmra.mxu0 %v477
        %v4014 = vpop.f32.mrf.mxu0
        %v4015 = vadd.f32 %v3996, %v4014
        %v4016 = vpop.f32.mrf.mxu0
        %v4017 = vadd.f32 %v3998, %v4016
        %4018 = vmatmul.bf16.gmra.mxu0 %v493
        %v4019 = vpop.f32.mrf.mxu0
        %v4020 = vadd.f32 %v4001, %v4019
        %v4021 = vpop.f32.mrf.mxu0
        %v4022 = vadd.f32 %v4003, %v4021
        %4023 = vdwg.mxu0
        %4024 = vmatpush.bf16.msra.mxu0 %v2846
        %4025 = vmatpush.bf16.msra.mxu0 %v2842
        %4026 = vmatpush.bf16.msra.mxu0 %v2838
        %4027 = vmatpush.bf16.msra.mxu0 %v2834
        %4028 = vmatpush.bf16.msra.mxu0 %v2830
        %4029 = vmatpush.bf16.msra.mxu0 %v2826
        %4030 = vmatpush.bf16.msra.mxu0 %v2822
        %4031 = vmatpush.bf16.msra.mxu0 %v2818
        %4032 = vmatmul.bf16.gmra.mxu0 %v478
        %v4033 = vpop.f32.mrf.mxu0
        %v4034 = vadd.f32 %v4015, %v4033
        %v4035 = vpop.f32.mrf.mxu0
        %v4036 = vadd.f32 %v4017, %v4035
        %4037 = vmatmul.bf16.gmra.mxu0 %v494
        %v4038 = vpop.f32.mrf.mxu0
        %v4039 = vadd.f32 %v4020, %v4038
        %v4040 = vpop.f32.mrf.mxu0
        %v4041 = vadd.f32 %v4022, %v4040
        %4042 = vdwg.mxu0
        %4043 = vmatpush.bf16.msra.mxu0 %v2878
        %4044 = vmatpush.bf16.msra.mxu0 %v2874
        %4045 = vmatpush.bf16.msra.mxu0 %v2870
        %4046 = vmatpush.bf16.msra.mxu0 %v2866
        %4047 = vmatpush.bf16.msra.mxu0 %v2862
        %4048 = vmatpush.bf16.msra.mxu0 %v2858
        %4049 = vmatpush.bf16.msra.mxu0 %v2854
        %4050 = vmatpush.bf16.msra.mxu0 %v2850
        %4051 = vmatmul.bf16.gmra.mxu0 %v479
        %v4052 = vpop.f32.mrf.mxu0
        %v4053 = vadd.f32 %v4034, %v4052
        %v4054 = vpop.f32.mrf.mxu0
        %v4055 = vadd.f32 %v4036, %v4054
        %4056 = vmatmul.bf16.gmra.mxu0 %v495
        %v4057 = vpop.f32.mrf.mxu0
        %v4058 = vadd.f32 %v4039, %v4057
        %v4059 = vpop.f32.mrf.mxu0
        %v4060 = vadd.f32 %v4041, %v4059
        %4061 = vdwg.mxu0
        %4062 = vmatpush.bf16.msra.mxu0 %v2910
        %4063 = vmatpush.bf16.msra.mxu0 %v2906
        %4064 = vmatpush.bf16.msra.mxu0 %v2902
        %4065 = vmatpush.bf16.msra.mxu0 %v2898
        %4066 = vmatpush.bf16.msra.mxu0 %v2894
        %4067 = vmatpush.bf16.msra.mxu0 %v2890
        %4068 = vmatpush.bf16.msra.mxu0 %v2886
        %4069 = vmatpush.bf16.msra.mxu0 %v2882
        %4070 = vmatmul.bf16.gmra.mxu0 %v480
        %v4071 = vpop.f32.mrf.mxu0
        %v4072 = vadd.f32 %v4053, %v4071
        %v4073 = vpop.f32.mrf.mxu0
        %v4074 = vadd.f32 %v4055, %v4073
        %4075 = vmatmul.bf16.gmra.mxu0 %v496
        %v4076 = vpop.f32.mrf.mxu0
        %v4077 = vadd.f32 %v4058, %v4076
        %v4078 = vpop.f32.mrf.mxu0
        %v4079 = vadd.f32 %v4060, %v4078
        %4080 = vdwg.mxu0
        %4081 = vmatpush.bf16.msra.mxu0 %v2942
        %4082 = vmatpush.bf16.msra.mxu0 %v2938
        %4083 = vmatpush.bf16.msra.mxu0 %v2934
        %4084 = vmatpush.bf16.msra.mxu0 %v2930
        %4085 = vmatpush.bf16.msra.mxu0 %v2926
        %4086 = vmatpush.bf16.msra.mxu0 %v2922
        %4087 = vmatpush.bf16.msra.mxu0 %v2918
        %4088 = vmatpush.bf16.msra.mxu0 %v2914
        %4089 = vmatmul.bf16.gmra.mxu0 %v481
        %v4090 = vpop.f32.mrf.mxu0
        %v4091 = vadd.f32 %v4072, %v4090
        %v4092 = vpop.f32.mrf.mxu0
        %v4093 = vadd.f32 %v4074, %v4092
        %4094 = vmatmul.bf16.gmra.mxu0 %v497
        %v4095 = vpop.f32.mrf.mxu0
        %v4096 = vadd.f32 %v4077, %v4095
        %v4097 = vpop.f32.mrf.mxu0
        %v4098 = vadd.f32 %v4079, %v4097
        %4099 = vdwg.mxu0
        %4100 = vmatpush.bf16.msra.mxu0 %v2974
        %4101 = vmatpush.bf16.msra.mxu0 %v2970
        %4102 = vmatpush.bf16.msra.mxu0 %v2966
        %4103 = vmatpush.bf16.msra.mxu0 %v2962
        %4104 = vmatpush.bf16.msra.mxu0 %v2958
        %4105 = vmatpush.bf16.msra.mxu0 %v2954
        %4106 = vmatpush.bf16.msra.mxu0 %v2950
        %4107 = vmatpush.bf16.msra.mxu0 %v2946
        %4108 = vmatmul.bf16.gmra.mxu0 %v482
        %v4109 = vpop.f32.mrf.mxu0
        %v4110 = vadd.f32 %v4091, %v4109
        %v4111 = vpop.f32.mrf.mxu0
        %v4112 = vadd.f32 %v4093, %v4111
        %4113 = vmatmul.bf16.gmra.mxu0 %v498
        %v4114 = vpop.f32.mrf.mxu0
        %v4115 = vadd.f32 %v4096, %v4114
        %v4116 = vpop.f32.mrf.mxu0
        %v4117 = vadd.f32 %v4098, %v4116
        %4118 = vdwg.mxu0
        %4119 = vmatpush.bf16.msra.mxu0 %v3006
        %4120 = vmatpush.bf16.msra.mxu0 %v3002
        %4121 = vmatpush.bf16.msra.mxu0 %v2998
        %4122 = vmatpush.bf16.msra.mxu0 %v2994
        %4123 = vmatpush.bf16.msra.mxu0 %v2990
        %4124 = vmatpush.bf16.msra.mxu0 %v2986
        %4125 = vmatpush.bf16.msra.mxu0 %v2982
        %4126 = vmatpush.bf16.msra.mxu0 %v2978
        %4127 = vmatmul.bf16.gmra.mxu0 %v483
        %v4128 = vpop.f32.mrf.mxu0
        %v4129 = vadd.f32 %v4110, %v4128
        %v4130 = vpop.f32.mrf.mxu0
        %v4131 = vadd.f32 %v4112, %v4130
        %4132 = vmatmul.bf16.gmra.mxu0 %v499
        %v4133 = vpop.f32.mrf.mxu0
        %v4134 = vadd.f32 %v4115, %v4133
        %v4135 = vpop.f32.mrf.mxu0
        %v4136 = vadd.f32 %v4117, %v4135
        %4137 = vdwg.mxu0
        %4138 = vmatpush.bf16.msra.mxu0 %v3038
        %4139 = vmatpush.bf16.msra.mxu0 %v3034
        %4140 = vmatpush.bf16.msra.mxu0 %v3030
        %4141 = vmatpush.bf16.msra.mxu0 %v3026
        %4142 = vmatpush.bf16.msra.mxu0 %v3022
        %4143 = vmatpush.bf16.msra.mxu0 %v3018
        %4144 = vmatpush.bf16.msra.mxu0 %v3014
        %4145 = vmatpush.bf16.msra.mxu0 %v3010
        %4146 = vmatmul.bf16.gmra.mxu0 %v484
        %v4147 = vpop.f32.mrf.mxu0
        %v4148 = vadd.f32 %v4129, %v4147
        %v4149 = vpop.f32.mrf.mxu0
        %v4150 = vadd.f32 %v4131, %v4149
        %4151 = vmatmul.bf16.gmra.mxu0 %v500
        %v4152 = vpop.f32.mrf.mxu0
        %v4153 = vadd.f32 %v4134, %v4152
        %v4154 = vpop.f32.mrf.mxu0
        %v4155 = vadd.f32 %v4136, %v4154
        %4156 = vdwg.mxu0
        %4157 = vmatpush.bf16.msra.mxu0 0
        %4158 = vmatpush.bf16.msra.mxu0 0
        %4159 = vmatpush.bf16.msra.mxu0 0
        %4160 = vmatpush.bf16.msra.mxu0 %v3058
        %4161 = vmatpush.bf16.msra.mxu0 %v3054
        %4162 = vmatpush.bf16.msra.mxu0 %v3050
        %4163 = vmatpush.bf16.msra.mxu0 %v3046
        %4164 = vmatpush.bf16.msra.mxu0 %v3042
        %4165 = vmatmul.bf16.gmra.mxu0 %v3563
        %v4166 = vpop.f32.mrf.mxu0
        %v4167 = vadd.f32 %v4148, %v4166
        %v4168 = vpop.f32.mrf.mxu0
        %v4169 = vadd.f32 %v4150, %v4168
        %4170 = vmatmul.bf16.gmra.mxu0 %v3566
        %v4171 = vpop.f32.mrf.mxu0
        %v4172 = vadd.f32 %v4153, %v4171
        %v4173 = vpop.f32.mrf.mxu0
        %v4174 = vadd.f32 %v4155, %v4173
        %4175 = vdwg.mxu0
        %4176 = vmatpush.bf16.msra.mxu0 %v2591
        %4177 = vmatpush.bf16.msra.mxu0 %v2587
        %4178 = vmatpush.bf16.msra.mxu0 %v2583
        %4179 = vmatpush.bf16.msra.mxu0 %v2579
        %4180 = vmatpush.bf16.msra.mxu0 %v2575
        %4181 = vmatpush.bf16.msra.mxu0 %v2571
        %4182 = vmatpush.bf16.msra.mxu0 %v2567
        %4183 = vmatpush.bf16.msra.mxu0 %v2563
        %4184 = vmatmul.bf16.gmra.mxu0 %v470
        %v4185 = vpop.f32.mrf.mxu0
        %v4186 = vadd.f32 %v1047, %v4185
        %v4187 = vpop.f32.mrf.mxu0
        %v4188 = vadd.f32 %v1051, %v4187
        %4189 = vmatmul.bf16.gmra.mxu0 %v486
        %v4190 = vpop.f32.mrf.mxu0
        %v4191 = vadd.f32 %v1055, %v4190
        %v4192 = vpop.f32.mrf.mxu0
        %v4193 = vadd.f32 %v1059, %v4192
        %4194 = vdwg.mxu0
        %4195 = vmatpush.bf16.msra.mxu0 %v2623
        %4196 = vmatpush.bf16.msra.mxu0 %v2619
        %4197 = vmatpush.bf16.msra.mxu0 %v2615
        %4198 = vmatpush.bf16.msra.mxu0 %v2611
        %4199 = vmatpush.bf16.msra.mxu0 %v2607
        %4200 = vmatpush.bf16.msra.mxu0 %v2603
        %4201 = vmatpush.bf16.msra.mxu0 %v2599
        %4202 = vmatpush.bf16.msra.mxu0 %v2595
        %4203 = vmatmul.bf16.gmra.mxu0 %v471
        %v4204 = vpop.f32.mrf.mxu0
        %v4205 = vadd.f32 %v4186, %v4204
        %v4206 = vpop.f32.mrf.mxu0
        %v4207 = vadd.f32 %v4188, %v4206
        %4208 = vmatmul.bf16.gmra.mxu0 %v487
        %v4209 = vpop.f32.mrf.mxu0
        %v4210 = vadd.f32 %v4191, %v4209
        %v4211 = vpop.f32.mrf.mxu0
        %v4212 = vadd.f32 %v4193, %v4211
        %4213 = vdwg.mxu0
        %4214 = vmatpush.bf16.msra.mxu0 %v2655
        %4215 = vmatpush.bf16.msra.mxu0 %v2651
        %4216 = vmatpush.bf16.msra.mxu0 %v2647
        %4217 = vmatpush.bf16.msra.mxu0 %v2643
        %4218 = vmatpush.bf16.msra.mxu0 %v2639
        %4219 = vmatpush.bf16.msra.mxu0 %v2635
        %4220 = vmatpush.bf16.msra.mxu0 %v2631
        %4221 = vmatpush.bf16.msra.mxu0 %v2627
        %4222 = vmatmul.bf16.gmra.mxu0 %v472
        %v4223 = vpop.f32.mrf.mxu0
        %v4224 = vadd.f32 %v4205, %v4223
        %v4225 = vpop.f32.mrf.mxu0
        %v4226 = vadd.f32 %v4207, %v4225
        %4227 = vmatmul.bf16.gmra.mxu0 %v488
        %v4228 = vpop.f32.mrf.mxu0
        %v4229 = vadd.f32 %v4210, %v4228
        %v4230 = vpop.f32.mrf.mxu0
        %v4231 = vadd.f32 %v4212, %v4230
        %4232 = vdwg.mxu0
        %4233 = vmatpush.bf16.msra.mxu0 %v2687
        %4234 = vmatpush.bf16.msra.mxu0 %v2683
        %4235 = vmatpush.bf16.msra.mxu0 %v2679
        %4236 = vmatpush.bf16.msra.mxu0 %v2675
        %4237 = vmatpush.bf16.msra.mxu0 %v2671
        %4238 = vmatpush.bf16.msra.mxu0 %v2667
        %4239 = vmatpush.bf16.msra.mxu0 %v2663
        %4240 = vmatpush.bf16.msra.mxu0 %v2659
        %4241 = vmatmul.bf16.gmra.mxu0 %v473
        %v4242 = vpop.f32.mrf.mxu0
        %v4243 = vadd.f32 %v4224, %v4242
        %v4244 = vpop.f32.mrf.mxu0
        %v4245 = vadd.f32 %v4226, %v4244
        %4246 = vmatmul.bf16.gmra.mxu0 %v489
        %v4247 = vpop.f32.mrf.mxu0
        %v4248 = vadd.f32 %v4229, %v4247
        %v4249 = vpop.f32.mrf.mxu0
        %v4250 = vadd.f32 %v4231, %v4249
        %4251 = vdwg.mxu0
        %4252 = vmatpush.bf16.msra.mxu0 %v2719
        %4253 = vmatpush.bf16.msra.mxu0 %v2715
        %4254 = vmatpush.bf16.msra.mxu0 %v2711
        %4255 = vmatpush.bf16.msra.mxu0 %v2707
        %4256 = vmatpush.bf16.msra.mxu0 %v2703
        %4257 = vmatpush.bf16.msra.mxu0 %v2699
        %4258 = vmatpush.bf16.msra.mxu0 %v2695
        %4259 = vmatpush.bf16.msra.mxu0 %v2691
        %4260 = vmatmul.bf16.gmra.mxu0 %v474
        %v4261 = vpop.f32.mrf.mxu0
        %v4262 = vadd.f32 %v4243, %v4261
        %v4263 = vpop.f32.mrf.mxu0
        %v4264 = vadd.f32 %v4245, %v4263
        %4265 = vmatmul.bf16.gmra.mxu0 %v490
        %v4266 = vpop.f32.mrf.mxu0
        %v4267 = vadd.f32 %v4248, %v4266
        %v4268 = vpop.f32.mrf.mxu0
        %v4269 = vadd.f32 %v4250, %v4268
        %4270 = vdwg.mxu0
        %4271 = vmatpush.bf16.msra.mxu0 %v2751
        %4272 = vmatpush.bf16.msra.mxu0 %v2747
        %4273 = vmatpush.bf16.msra.mxu0 %v2743
        %4274 = vmatpush.bf16.msra.mxu0 %v2739
        %4275 = vmatpush.bf16.msra.mxu0 %v2735
        %4276 = vmatpush.bf16.msra.mxu0 %v2731
        %4277 = vmatpush.bf16.msra.mxu0 %v2727
        %4278 = vmatpush.bf16.msra.mxu0 %v2723
        %4279 = vmatmul.bf16.gmra.mxu0 %v475
        %v4280 = vpop.f32.mrf.mxu0
        %v4281 = vadd.f32 %v4262, %v4280
        %v4282 = vpop.f32.mrf.mxu0
        %v4283 = vadd.f32 %v4264, %v4282
        %4284 = vmatmul.bf16.gmra.mxu0 %v491
        %v4285 = vpop.f32.mrf.mxu0
        %v4286 = vadd.f32 %v4267, %v4285
        %v4287 = vpop.f32.mrf.mxu0
        %v4288 = vadd.f32 %v4269, %v4287
        %4289 = vdwg.mxu0
        %4290 = vmatpush.bf16.msra.mxu0 %v2783
        %4291 = vmatpush.bf16.msra.mxu0 %v2779
        %4292 = vmatpush.bf16.msra.mxu0 %v2775
        %4293 = vmatpush.bf16.msra.mxu0 %v2771
        %4294 = vmatpush.bf16.msra.mxu0 %v2767
        %4295 = vmatpush.bf16.msra.mxu0 %v2763
        %4296 = vmatpush.bf16.msra.mxu0 %v2759
        %4297 = vmatpush.bf16.msra.mxu0 %v2755
        %4298 = vmatmul.bf16.gmra.mxu0 %v476
        %v4299 = vpop.f32.mrf.mxu0
        %v4300 = vadd.f32 %v4281, %v4299
        %v4301 = vpop.f32.mrf.mxu0
        %v4302 = vadd.f32 %v4283, %v4301
        %4303 = vmatmul.bf16.gmra.mxu0 %v492
        %v4304 = vpop.f32.mrf.mxu0
        %v4305 = vadd.f32 %v4286, %v4304
        %v4306 = vpop.f32.mrf.mxu0
        %v4307 = vadd.f32 %v4288, %v4306
        %4308 = vdwg.mxu0
        %4309 = vmatpush.bf16.msra.mxu0 %v2815
        %4310 = vmatpush.bf16.msra.mxu0 %v2811
        %4311 = vmatpush.bf16.msra.mxu0 %v2807
        %4312 = vmatpush.bf16.msra.mxu0 %v2803
        %4313 = vmatpush.bf16.msra.mxu0 %v2799
        %4314 = vmatpush.bf16.msra.mxu0 %v2795
        %4315 = vmatpush.bf16.msra.mxu0 %v2791
        %4316 = vmatpush.bf16.msra.mxu0 %v2787
        %4317 = vmatmul.bf16.gmra.mxu0 %v477
        %v4318 = vpop.f32.mrf.mxu0
        %v4319 = vadd.f32 %v4300, %v4318
        %v4320 = vpop.f32.mrf.mxu0
        %v4321 = vadd.f32 %v4302, %v4320
        %4322 = vmatmul.bf16.gmra.mxu0 %v493
        %v4323 = vpop.f32.mrf.mxu0
        %v4324 = vadd.f32 %v4305, %v4323
        %v4325 = vpop.f32.mrf.mxu0
        %v4326 = vadd.f32 %v4307, %v4325
        %4327 = vdwg.mxu0
        %4328 = vmatpush.bf16.msra.mxu0 %v2847
        %4329 = vmatpush.bf16.msra.mxu0 %v2843
        %4330 = vmatpush.bf16.msra.mxu0 %v2839
        %4331 = vmatpush.bf16.msra.mxu0 %v2835
        %4332 = vmatpush.bf16.msra.mxu0 %v2831
        %4333 = vmatpush.bf16.msra.mxu0 %v2827
        %4334 = vmatpush.bf16.msra.mxu0 %v2823
        %4335 = vmatpush.bf16.msra.mxu0 %v2819
        %4336 = vmatmul.bf16.gmra.mxu0 %v478
        %v4337 = vpop.f32.mrf.mxu0
        %v4338 = vadd.f32 %v4319, %v4337
        %v4339 = vpop.f32.mrf.mxu0
        %v4340 = vadd.f32 %v4321, %v4339
        %4341 = vmatmul.bf16.gmra.mxu0 %v494
        %v4342 = vpop.f32.mrf.mxu0
        %v4343 = vadd.f32 %v4324, %v4342
        %v4344 = vpop.f32.mrf.mxu0
        %v4345 = vadd.f32 %v4326, %v4344
        %4346 = vdwg.mxu0
        %4347 = vmatpush.bf16.msra.mxu0 %v2879
        %4348 = vmatpush.bf16.msra.mxu0 %v2875
        %4349 = vmatpush.bf16.msra.mxu0 %v2871
        %4350 = vmatpush.bf16.msra.mxu0 %v2867
        %4351 = vmatpush.bf16.msra.mxu0 %v2863
        %4352 = vmatpush.bf16.msra.mxu0 %v2859
        %4353 = vmatpush.bf16.msra.mxu0 %v2855
        %4354 = vmatpush.bf16.msra.mxu0 %v2851
        %4355 = vmatmul.bf16.gmra.mxu0 %v479
        %v4356 = vpop.f32.mrf.mxu0
        %v4357 = vadd.f32 %v4338, %v4356
        %v4358 = vpop.f32.mrf.mxu0
        %v4359 = vadd.f32 %v4340, %v4358
        %4360 = vmatmul.bf16.gmra.mxu0 %v495
        %v4361 = vpop.f32.mrf.mxu0
        %v4362 = vadd.f32 %v4343, %v4361
        %v4363 = vpop.f32.mrf.mxu0
        %v4364 = vadd.f32 %v4345, %v4363
        %4365 = vdwg.mxu0
        %4366 = vmatpush.bf16.msra.mxu0 %v2911
        %4367 = vmatpush.bf16.msra.mxu0 %v2907
        %4368 = vmatpush.bf16.msra.mxu0 %v2903
        %4369 = vmatpush.bf16.msra.mxu0 %v2899
        %4370 = vmatpush.bf16.msra.mxu0 %v2895
        %4371 = vmatpush.bf16.msra.mxu0 %v2891
        %4372 = vmatpush.bf16.msra.mxu0 %v2887
        %4373 = vmatpush.bf16.msra.mxu0 %v2883
        %4374 = vmatmul.bf16.gmra.mxu0 %v480
        %v4375 = vpop.f32.mrf.mxu0
        %v4376 = vadd.f32 %v4357, %v4375
        %v4377 = vpop.f32.mrf.mxu0
        %v4378 = vadd.f32 %v4359, %v4377
        %4379 = vmatmul.bf16.gmra.mxu0 %v496
        %v4380 = vpop.f32.mrf.mxu0
        %v4381 = vadd.f32 %v4362, %v4380
        %v4382 = vpop.f32.mrf.mxu0
        %v4383 = vadd.f32 %v4364, %v4382
        %4384 = vdwg.mxu0
        %4385 = vmatpush.bf16.msra.mxu0 %v2943
        %4386 = vmatpush.bf16.msra.mxu0 %v2939
        %4387 = vmatpush.bf16.msra.mxu0 %v2935
        %4388 = vmatpush.bf16.msra.mxu0 %v2931
        %4389 = vmatpush.bf16.msra.mxu0 %v2927
        %4390 = vmatpush.bf16.msra.mxu0 %v2923
        %4391 = vmatpush.bf16.msra.mxu0 %v2919
        %4392 = vmatpush.bf16.msra.mxu0 %v2915
        %4393 = vmatmul.bf16.gmra.mxu0 %v481
        %v4394 = vpop.f32.mrf.mxu0
        %v4395 = vadd.f32 %v4376, %v4394
        %v4396 = vpop.f32.mrf.mxu0
        %v4397 = vadd.f32 %v4378, %v4396
        %4398 = vmatmul.bf16.gmra.mxu0 %v497
        %v4399 = vpop.f32.mrf.mxu0
        %v4400 = vadd.f32 %v4381, %v4399
        %v4401 = vpop.f32.mrf.mxu0
        %v4402 = vadd.f32 %v4383, %v4401
        %4403 = vdwg.mxu0
        %4404 = vmatpush.bf16.msra.mxu0 %v2975
        %4405 = vmatpush.bf16.msra.mxu0 %v2971
        %4406 = vmatpush.bf16.msra.mxu0 %v2967
        %4407 = vmatpush.bf16.msra.mxu0 %v2963
        %4408 = vmatpush.bf16.msra.mxu0 %v2959
        %4409 = vmatpush.bf16.msra.mxu0 %v2955
        %4410 = vmatpush.bf16.msra.mxu0 %v2951
        %4411 = vmatpush.bf16.msra.mxu0 %v2947
        %4412 = vmatmul.bf16.gmra.mxu0 %v482
        %v4413 = vpop.f32.mrf.mxu0
        %v4414 = vadd.f32 %v4395, %v4413
        %v4415 = vpop.f32.mrf.mxu0
        %v4416 = vadd.f32 %v4397, %v4415
        %4417 = vmatmul.bf16.gmra.mxu0 %v498
        %v4418 = vpop.f32.mrf.mxu0
        %v4419 = vadd.f32 %v4400, %v4418
        %v4420 = vpop.f32.mrf.mxu0
        %v4421 = vadd.f32 %v4402, %v4420
        %4422 = vdwg.mxu0
        %4423 = vmatpush.bf16.msra.mxu0 %v3007
        %4424 = vmatpush.bf16.msra.mxu0 %v3003
        %4425 = vmatpush.bf16.msra.mxu0 %v2999
        %4426 = vmatpush.bf16.msra.mxu0 %v2995
        %4427 = vmatpush.bf16.msra.mxu0 %v2991
        %4428 = vmatpush.bf16.msra.mxu0 %v2987
        %4429 = vmatpush.bf16.msra.mxu0 %v2983
        %4430 = vmatpush.bf16.msra.mxu0 %v2979
        %4431 = vmatmul.bf16.gmra.mxu0 %v483
        %v4432 = vpop.f32.mrf.mxu0
        %v4433 = vadd.f32 %v4414, %v4432
        %v4434 = vpop.f32.mrf.mxu0
        %v4435 = vadd.f32 %v4416, %v4434
        %4436 = vmatmul.bf16.gmra.mxu0 %v499
        %v4437 = vpop.f32.mrf.mxu0
        %v4438 = vadd.f32 %v4419, %v4437
        %v4439 = vpop.f32.mrf.mxu0
        %v4440 = vadd.f32 %v4421, %v4439
        %4441 = vdwg.mxu0
        %4442 = vmatpush.bf16.msra.mxu0 %v3039
        %4443 = vmatpush.bf16.msra.mxu0 %v3035
        %4444 = vmatpush.bf16.msra.mxu0 %v3031
        %4445 = vmatpush.bf16.msra.mxu0 %v3027
        %4446 = vmatpush.bf16.msra.mxu0 %v3023
        %4447 = vmatpush.bf16.msra.mxu0 %v3019
        %4448 = vmatpush.bf16.msra.mxu0 %v3015
        %4449 = vmatpush.bf16.msra.mxu0 %v3011
        %4450 = vmatmul.bf16.gmra.mxu0 %v484
        %v4451 = vpop.f32.mrf.mxu0
        %v4452 = vadd.f32 %v4433, %v4451
        %v4453 = vpop.f32.mrf.mxu0
        %v4454 = vadd.f32 %v4435, %v4453
        %4455 = vmatmul.bf16.gmra.mxu0 %v500
        %v4456 = vpop.f32.mrf.mxu0
        %v4457 = vadd.f32 %v4438, %v4456
        %v4458 = vpop.f32.mrf.mxu0
        %v4459 = vadd.f32 %v4440, %v4458
        %4460 = vdwg.mxu0
        %4461 = vmatpush.bf16.msra.mxu0 0
        %4462 = vmatpush.bf16.msra.mxu0 0
        %4463 = vmatpush.bf16.msra.mxu0 0
        %4464 = vmatpush.bf16.msra.mxu0 %v3059
        %4465 = vmatpush.bf16.msra.mxu0 %v3055
        %4466 = vmatpush.bf16.msra.mxu0 %v3051
        %4467 = vmatpush.bf16.msra.mxu0 %v3047
        %4468 = vmatpush.bf16.msra.mxu0 %v3043
        %4469 = vmatmul.bf16.gmra.mxu0 %v3563
        %v4470 = vpop.f32.mrf.mxu0
        %v4471 = vadd.f32 %v4452, %v4470
        %v4472 = vpop.f32.mrf.mxu0
        %v4473 = vadd.f32 %v4454, %v4472
        %4474 = vmatmul.bf16.gmra.mxu0 %v3566
        %v4475 = vpop.f32.mrf.mxu0
        %v4476 = vadd.f32 %v4457, %v4475
        %v4477 = vpop.f32.mrf.mxu0
        %v4478 = vadd.f32 %v4459, %v4477
        %4479 = vdwg.mxu0
        %4480 = vmatpush.bf16.msra.mxu0 %v2592
        %4481 = vmatpush.bf16.msra.mxu0 %v2588
        %4482 = vmatpush.bf16.msra.mxu0 %v2584
        %4483 = vmatpush.bf16.msra.mxu0 %v2580
        %4484 = vmatpush.bf16.msra.mxu0 %v2576
        %4485 = vmatpush.bf16.msra.mxu0 %v2572
        %4486 = vmatpush.bf16.msra.mxu0 %v2568
        %4487 = vmatpush.bf16.msra.mxu0 %v2564
        %4488 = vmatmul.bf16.gmra.mxu0 %v470
        %v4489 = vpop.f32.mrf.mxu0
        %v4490 = vadd.f32 %v1048, %v4489
        %v4491 = vpop.f32.mrf.mxu0
        %v4492 = vadd.f32 %v1052, %v4491
        %4493 = vmatmul.bf16.gmra.mxu0 %v486
        %v4494 = vpop.f32.mrf.mxu0
        %v4495 = vadd.f32 %v1056, %v4494
        %v4496 = vpop.f32.mrf.mxu0
        %v4497 = vadd.f32 %v1060, %v4496
        %4498 = vdwg.mxu0
        %4499 = vmatpush.bf16.msra.mxu0 %v2624
        %4500 = vmatpush.bf16.msra.mxu0 %v2620
        %4501 = vmatpush.bf16.msra.mxu0 %v2616
        %4502 = vmatpush.bf16.msra.mxu0 %v2612
        %4503 = vmatpush.bf16.msra.mxu0 %v2608
        %4504 = vmatpush.bf16.msra.mxu0 %v2604
        %4505 = vmatpush.bf16.msra.mxu0 %v2600
        %4506 = vmatpush.bf16.msra.mxu0 %v2596
        %4507 = vmatmul.bf16.gmra.mxu0 %v471
        %v4508 = vpop.f32.mrf.mxu0
        %v4509 = vadd.f32 %v4490, %v4508
        %v4510 = vpop.f32.mrf.mxu0
        %v4511 = vadd.f32 %v4492, %v4510
        %4512 = vmatmul.bf16.gmra.mxu0 %v487
        %v4513 = vpop.f32.mrf.mxu0
        %v4514 = vadd.f32 %v4495, %v4513
        %v4515 = vpop.f32.mrf.mxu0
        %v4516 = vadd.f32 %v4497, %v4515
        %4517 = vdwg.mxu0
        %4518 = vmatpush.bf16.msra.mxu0 %v2656
        %4519 = vmatpush.bf16.msra.mxu0 %v2652
        %4520 = vmatpush.bf16.msra.mxu0 %v2648
        %4521 = vmatpush.bf16.msra.mxu0 %v2644
        %4522 = vmatpush.bf16.msra.mxu0 %v2640
        %4523 = vmatpush.bf16.msra.mxu0 %v2636
        %4524 = vmatpush.bf16.msra.mxu0 %v2632
        %4525 = vmatpush.bf16.msra.mxu0 %v2628
        %4526 = vmatmul.bf16.gmra.mxu0 %v472
        %v4527 = vpop.f32.mrf.mxu0
        %v4528 = vadd.f32 %v4509, %v4527
        %v4529 = vpop.f32.mrf.mxu0
        %v4530 = vadd.f32 %v4511, %v4529
        %4531 = vmatmul.bf16.gmra.mxu0 %v488
        %v4532 = vpop.f32.mrf.mxu0
        %v4533 = vadd.f32 %v4514, %v4532
        %v4534 = vpop.f32.mrf.mxu0
        %v4535 = vadd.f32 %v4516, %v4534
        %4536 = vdwg.mxu0
        %4537 = vmatpush.bf16.msra.mxu0 %v2688
        %4538 = vmatpush.bf16.msra.mxu0 %v2684
        %4539 = vmatpush.bf16.msra.mxu0 %v2680
        %4540 = vmatpush.bf16.msra.mxu0 %v2676
        %4541 = vmatpush.bf16.msra.mxu0 %v2672
        %4542 = vmatpush.bf16.msra.mxu0 %v2668
        %4543 = vmatpush.bf16.msra.mxu0 %v2664
        %4544 = vmatpush.bf16.msra.mxu0 %v2660
        %4545 = vmatmul.bf16.gmra.mxu0 %v473
        %v4546 = vpop.f32.mrf.mxu0
        %v4547 = vadd.f32 %v4528, %v4546
        %v4548 = vpop.f32.mrf.mxu0
        %v4549 = vadd.f32 %v4530, %v4548
        %4550 = vmatmul.bf16.gmra.mxu0 %v489
        %v4551 = vpop.f32.mrf.mxu0
        %v4552 = vadd.f32 %v4533, %v4551
        %v4553 = vpop.f32.mrf.mxu0
        %v4554 = vadd.f32 %v4535, %v4553
        %4555 = vdwg.mxu0
        %4556 = vmatpush.bf16.msra.mxu0 %v2720
        %4557 = vmatpush.bf16.msra.mxu0 %v2716
        %4558 = vmatpush.bf16.msra.mxu0 %v2712
        %4559 = vmatpush.bf16.msra.mxu0 %v2708
        %4560 = vmatpush.bf16.msra.mxu0 %v2704
        %4561 = vmatpush.bf16.msra.mxu0 %v2700
        %4562 = vmatpush.bf16.msra.mxu0 %v2696
        %4563 = vmatpush.bf16.msra.mxu0 %v2692
        %4564 = vmatmul.bf16.gmra.mxu0 %v474
        %v4565 = vpop.f32.mrf.mxu0
        %v4566 = vadd.f32 %v4547, %v4565
        %v4567 = vpop.f32.mrf.mxu0
        %v4568 = vadd.f32 %v4549, %v4567
        %4569 = vmatmul.bf16.gmra.mxu0 %v490
        %v4570 = vpop.f32.mrf.mxu0
        %v4571 = vadd.f32 %v4552, %v4570
        %v4572 = vpop.f32.mrf.mxu0
        %v4573 = vadd.f32 %v4554, %v4572
        %4574 = vdwg.mxu0
        %4575 = vmatpush.bf16.msra.mxu0 %v2752
        %4576 = vmatpush.bf16.msra.mxu0 %v2748
        %4577 = vmatpush.bf16.msra.mxu0 %v2744
        %4578 = vmatpush.bf16.msra.mxu0 %v2740
        %4579 = vmatpush.bf16.msra.mxu0 %v2736
        %4580 = vmatpush.bf16.msra.mxu0 %v2732
        %4581 = vmatpush.bf16.msra.mxu0 %v2728
        %4582 = vmatpush.bf16.msra.mxu0 %v2724
        %4583 = vmatmul.bf16.gmra.mxu0 %v475
        %v4584 = vpop.f32.mrf.mxu0
        %v4585 = vadd.f32 %v4566, %v4584
        %v4586 = vpop.f32.mrf.mxu0
        %v4587 = vadd.f32 %v4568, %v4586
        %4588 = vmatmul.bf16.gmra.mxu0 %v491
        %v4589 = vpop.f32.mrf.mxu0
        %v4590 = vadd.f32 %v4571, %v4589
        %v4591 = vpop.f32.mrf.mxu0
        %v4592 = vadd.f32 %v4573, %v4591
        %4593 = vdwg.mxu0
        %4594 = vmatpush.bf16.msra.mxu0 %v2784
        %4595 = vmatpush.bf16.msra.mxu0 %v2780
        %4596 = vmatpush.bf16.msra.mxu0 %v2776
        %4597 = vmatpush.bf16.msra.mxu0 %v2772
        %4598 = vmatpush.bf16.msra.mxu0 %v2768
        %4599 = vmatpush.bf16.msra.mxu0 %v2764
        %4600 = vmatpush.bf16.msra.mxu0 %v2760
        %4601 = vmatpush.bf16.msra.mxu0 %v2756
        %4602 = vmatmul.bf16.gmra.mxu0 %v476
        %v4603 = vpop.f32.mrf.mxu0
        %v4604 = vadd.f32 %v4585, %v4603
        %v4605 = vpop.f32.mrf.mxu0
        %v4606 = vadd.f32 %v4587, %v4605
        %4607 = vmatmul.bf16.gmra.mxu0 %v492
        %v4608 = vpop.f32.mrf.mxu0
        %v4609 = vadd.f32 %v4590, %v4608
        %v4610 = vpop.f32.mrf.mxu0
        %v4611 = vadd.f32 %v4592, %v4610
        %4612 = vdwg.mxu0
        %4613 = vmatpush.bf16.msra.mxu0 %v2816
        %4614 = vmatpush.bf16.msra.mxu0 %v2812
        %4615 = vmatpush.bf16.msra.mxu0 %v2808
        %4616 = vmatpush.bf16.msra.mxu0 %v2804
        %4617 = vmatpush.bf16.msra.mxu0 %v2800
        %4618 = vmatpush.bf16.msra.mxu0 %v2796
        %4619 = vmatpush.bf16.msra.mxu0 %v2792
        %4620 = vmatpush.bf16.msra.mxu0 %v2788
        %4621 = vmatmul.bf16.gmra.mxu0 %v477
        %v4622 = vpop.f32.mrf.mxu0
        %v4623 = vadd.f32 %v4604, %v4622
        %v4624 = vpop.f32.mrf.mxu0
        %v4625 = vadd.f32 %v4606, %v4624
        %4626 = vmatmul.bf16.gmra.mxu0 %v493
        %v4627 = vpop.f32.mrf.mxu0
        %v4628 = vadd.f32 %v4609, %v4627
        %v4629 = vpop.f32.mrf.mxu0
        %v4630 = vadd.f32 %v4611, %v4629
        %4631 = vdwg.mxu0
        %4632 = vmatpush.bf16.msra.mxu0 %v2848
        %4633 = vmatpush.bf16.msra.mxu0 %v2844
        %4634 = vmatpush.bf16.msra.mxu0 %v2840
        %4635 = vmatpush.bf16.msra.mxu0 %v2836
        %4636 = vmatpush.bf16.msra.mxu0 %v2832
        %4637 = vmatpush.bf16.msra.mxu0 %v2828
        %4638 = vmatpush.bf16.msra.mxu0 %v2824
        %4639 = vmatpush.bf16.msra.mxu0 %v2820
        %4640 = vmatmul.bf16.gmra.mxu0 %v478
        %v4641 = vpop.f32.mrf.mxu0
        %v4642 = vadd.f32 %v4623, %v4641
        %v4643 = vpop.f32.mrf.mxu0
        %v4644 = vadd.f32 %v4625, %v4643
        %4645 = vmatmul.bf16.gmra.mxu0 %v494
        %v4646 = vpop.f32.mrf.mxu0
        %v4647 = vadd.f32 %v4628, %v4646
        %v4648 = vpop.f32.mrf.mxu0
        %v4649 = vadd.f32 %v4630, %v4648
        %4650 = vdwg.mxu0
        %4651 = vmatpush.bf16.msra.mxu0 %v2880
        %4652 = vmatpush.bf16.msra.mxu0 %v2876
        %4653 = vmatpush.bf16.msra.mxu0 %v2872
        %4654 = vmatpush.bf16.msra.mxu0 %v2868
        %4655 = vmatpush.bf16.msra.mxu0 %v2864
        %4656 = vmatpush.bf16.msra.mxu0 %v2860
        %4657 = vmatpush.bf16.msra.mxu0 %v2856
        %4658 = vmatpush.bf16.msra.mxu0 %v2852
        %4659 = vmatmul.bf16.gmra.mxu0 %v479
        %v4660 = vpop.f32.mrf.mxu0
        %v4661 = vadd.f32 %v4642, %v4660
        %v4662 = vpop.f32.mrf.mxu0
        %v4663 = vadd.f32 %v4644, %v4662
        %4664 = vmatmul.bf16.gmra.mxu0 %v495
        %v4665 = vpop.f32.mrf.mxu0
        %v4666 = vadd.f32 %v4647, %v4665
        %v4667 = vpop.f32.mrf.mxu0
        %v4668 = vadd.f32 %v4649, %v4667
        %4669 = vdwg.mxu0
        %4670 = vmatpush.bf16.msra.mxu0 %v2912
        %4671 = vmatpush.bf16.msra.mxu0 %v2908
        %4672 = vmatpush.bf16.msra.mxu0 %v2904
        %4673 = vmatpush.bf16.msra.mxu0 %v2900
        %4674 = vmatpush.bf16.msra.mxu0 %v2896
        %4675 = vmatpush.bf16.msra.mxu0 %v2892
        %4676 = vmatpush.bf16.msra.mxu0 %v2888
        %4677 = vmatpush.bf16.msra.mxu0 %v2884
        %4678 = vmatmul.bf16.gmra.mxu0 %v480
        %v4679 = vpop.f32.mrf.mxu0
        %v4680 = vadd.f32 %v4661, %v4679
        %v4681 = vpop.f32.mrf.mxu0
        %v4682 = vadd.f32 %v4663, %v4681
        %4683 = vmatmul.bf16.gmra.mxu0 %v496
        %v4684 = vpop.f32.mrf.mxu0
        %v4685 = vadd.f32 %v4666, %v4684
        %v4686 = vpop.f32.mrf.mxu0
        %v4687 = vadd.f32 %v4668, %v4686
        %4688 = vdwg.mxu0
        %4689 = vmatpush.bf16.msra.mxu0 %v2944
        %4690 = vmatpush.bf16.msra.mxu0 %v2940
        %4691 = vmatpush.bf16.msra.mxu0 %v2936
        %4692 = vmatpush.bf16.msra.mxu0 %v2932
        %4693 = vmatpush.bf16.msra.mxu0 %v2928
        %4694 = vmatpush.bf16.msra.mxu0 %v2924
        %4695 = vmatpush.bf16.msra.mxu0 %v2920
        %4696 = vmatpush.bf16.msra.mxu0 %v2916
        %4697 = vmatmul.bf16.gmra.mxu0 %v481
        %v4698 = vpop.f32.mrf.mxu0
        %v4699 = vadd.f32 %v4680, %v4698
        %v4700 = vpop.f32.mrf.mxu0
        %v4701 = vadd.f32 %v4682, %v4700
        %4702 = vmatmul.bf16.gmra.mxu0 %v497
        %v4703 = vpop.f32.mrf.mxu0
        %v4704 = vadd.f32 %v4685, %v4703
        %v4705 = vpop.f32.mrf.mxu0
        %v4706 = vadd.f32 %v4687, %v4705
        %4707 = vdwg.mxu0
        %4708 = vmatpush.bf16.msra.mxu0 %v2976
        %4709 = vmatpush.bf16.msra.mxu0 %v2972
        %4710 = vmatpush.bf16.msra.mxu0 %v2968
        %4711 = vmatpush.bf16.msra.mxu0 %v2964
        %4712 = vmatpush.bf16.msra.mxu0 %v2960
        %4713 = vmatpush.bf16.msra.mxu0 %v2956
        %4714 = vmatpush.bf16.msra.mxu0 %v2952
        %4715 = vmatpush.bf16.msra.mxu0 %v2948
        %4716 = vmatmul.bf16.gmra.mxu0 %v482
        %v4717 = vpop.f32.mrf.mxu0
        %v4718 = vadd.f32 %v4699, %v4717
        %v4719 = vpop.f32.mrf.mxu0
        %v4720 = vadd.f32 %v4701, %v4719
        %4721 = vmatmul.bf16.gmra.mxu0 %v498
        %v4722 = vpop.f32.mrf.mxu0
        %v4723 = vadd.f32 %v4704, %v4722
        %v4724 = vpop.f32.mrf.mxu0
        %v4725 = vadd.f32 %v4706, %v4724
        %4726 = vdwg.mxu0
        %4727 = vmatpush.bf16.msra.mxu0 %v3008
        %4728 = vmatpush.bf16.msra.mxu0 %v3004
        %4729 = vmatpush.bf16.msra.mxu0 %v3000
        %4730 = vmatpush.bf16.msra.mxu0 %v2996
        %4731 = vmatpush.bf16.msra.mxu0 %v2992
        %4732 = vmatpush.bf16.msra.mxu0 %v2988
        %4733 = vmatpush.bf16.msra.mxu0 %v2984
        %4734 = vmatpush.bf16.msra.mxu0 %v2980
        %4735 = vmatmul.bf16.gmra.mxu0 %v483
        %v4736 = vpop.f32.mrf.mxu0
        %v4737 = vadd.f32 %v4718, %v4736
        %v4738 = vpop.f32.mrf.mxu0
        %v4739 = vadd.f32 %v4720, %v4738
        %4740 = vmatmul.bf16.gmra.mxu0 %v499
        %v4741 = vpop.f32.mrf.mxu0
        %v4742 = vadd.f32 %v4723, %v4741
        %v4743 = vpop.f32.mrf.mxu0
        %v4744 = vadd.f32 %v4725, %v4743
        %4745 = vdwg.mxu0
        %4746 = vmatpush.bf16.msra.mxu0 %v3040
        %4747 = vmatpush.bf16.msra.mxu0 %v3036
        %4748 = vmatpush.bf16.msra.mxu0 %v3032
        %4749 = vmatpush.bf16.msra.mxu0 %v3028
        %4750 = vmatpush.bf16.msra.mxu0 %v3024
        %4751 = vmatpush.bf16.msra.mxu0 %v3020
        %4752 = vmatpush.bf16.msra.mxu0 %v3016
        %4753 = vmatpush.bf16.msra.mxu0 %v3012
        %4754 = vmatmul.bf16.gmra.mxu0 %v484
        %v4755 = vpop.f32.mrf.mxu0
        %v4756 = vadd.f32 %v4737, %v4755
        %v4757 = vpop.f32.mrf.mxu0
        %v4758 = vadd.f32 %v4739, %v4757
        %4759 = vmatmul.bf16.gmra.mxu0 %v500
        %v4760 = vpop.f32.mrf.mxu0
        %v4761 = vadd.f32 %v4742, %v4760
        %v4762 = vpop.f32.mrf.mxu0
        %v4763 = vadd.f32 %v4744, %v4762
        %4764 = vdwg.mxu0
        %4765 = vmatpush.bf16.msra.mxu0 0
        %4766 = vmatpush.bf16.msra.mxu0 0
        %4767 = vmatpush.bf16.msra.mxu0 0
        %4768 = vmatpush.bf16.msra.mxu0 %v3060
        %4769 = vmatpush.bf16.msra.mxu0 %v3056
        %4770 = vmatpush.bf16.msra.mxu0 %v3052
        %4771 = vmatpush.bf16.msra.mxu0 %v3048
        %4772 = vmatpush.bf16.msra.mxu0 %v3044
        %4773 = vmatmul.bf16.gmra.mxu0 %v3563
        %v4774 = vpop.f32.mrf.mxu0
        %v4775 = vadd.f32 %v4756, %v4774
        %v4776 = vpop.f32.mrf.mxu0
        %v4777 = vadd.f32 %v4758, %v4776
        %4778 = vmatmul.bf16.gmra.mxu0 %v3566
        %v4779 = vpop.f32.mrf.mxu0
        %v4780 = vadd.f32 %v4761, %v4779
        %v4781 = vpop.f32.mrf.mxu0
        %v4782 = vadd.f32 %v4763, %v4781
        %4783 = vdwg.mxu0
        %4784 = vset.pattern.permute.xlu0 1
        %4785 = vperm.xlu0 %4784, %v502
        %v4786 = vpop.permute.xlu0 %4785
        %4788 = vset.pattern.permute.xlu0 1
        %4789 = vperm.xlu0 %4788, %v503
        %v4790 = vpop.permute.xlu0 %4789
        %4792 = vset.pattern.permute.xlu0 1
        %4793 = vperm.xlu0 %4792, %v504
        %v4794 = vpop.permute.xlu0 %4793
        %4796 = vset.pattern.permute.xlu0 1
        %4797 = vperm.xlu0 %4796, %v505
        %v4798 = vpop.permute.xlu0 %4797
        %v4801 = vperm.slane %v508, 0
        %v4802 = vperm.slane %v508, 1
        %v4803 = vperm.slane %v508, 2
        %v4804 = vperm.slane %v508, 3
        %v4809 = vmul.f32 %v4786, %v4801
        %v4810 = vmul.f32 %v4786, %v4802
        %v4811 = vmul.f32 %v4786, %v4803
        %v4812 = vmul.f32 %v4786, %v4804
        %v4813 = vmul.f32 %v4790, %v4801
        %v4814 = vmul.f32 %v4790, %v4802
        %v4815 = vmul.f32 %v4790, %v4803
        %v4816 = vmul.f32 %v4790, %v4804
        %v4817 = vmul.f32 %v4794, %v4801
        %v4818 = vmul.f32 %v4794, %v4802
        %v4819 = vmul.f32 %v4794, %v4803
        %v4820 = vmul.f32 %v4794, %v4804
        %v4821 = vmul.f32 %v4798, %v4801
        %v4822 = vmul.f32 %v4798, %v4802
        %v4823 = vmul.f32 %v4798, %v4803
        %v4824 = vmul.f32 %v4798, %v4804
        %v4825 = vadd.f32 %v3863, %v4809
        %v4826 = vadd.f32 %v4167, %v4810
        %v4827 = vadd.f32 %v4471, %v4811
        %v4828 = vadd.f32 %v4775, %v4812
        %v4829 = vadd.f32 %v3865, %v4813
        %v4830 = vadd.f32 %v4169, %v4814
        %v4831 = vadd.f32 %v4473, %v4815
        %v4832 = vadd.f32 %v4777, %v4816
        %v4833 = vadd.f32 %v3868, %v4817
        %v4834 = vadd.f32 %v4172, %v4818
        %v4835 = vadd.f32 %v4476, %v4819
        %v4836 = vadd.f32 %v4780, %v4820
        %v4837 = vadd.f32 %v3870, %v4821
        %v4838 = vadd.f32 %v4174, %v4822
        %v4839 = vadd.f32 %v4478, %v4823
        %v4840 = vadd.f32 %v4782, %v4824
        %v4842 = vperm.slane %v510, 0
        %v4843 = vperm.slane %v510, 1
        %v4844 = vperm.slane %v510, 2
        %v4845 = vperm.slane %v510, 3
        %v4850 = vadd.f32 %v4825, %v4842
        %v4851 = vadd.f32 %v4826, %v4843
        %v4852 = vadd.f32 %v4827, %v4844
        %v4853 = vadd.f32 %v4828, %v4845
        %v4854 = vadd.f32 %v4829, %v4842
        %v4855 = vadd.f32 %v4830, %v4843
        %v4856 = vadd.f32 %v4831, %v4844
        %v4857 = vadd.f32 %v4832, %v4845
        %v4858 = vadd.f32 %v4833, %v4842
        %v4859 = vadd.f32 %v4834, %v4843
        %v4860 = vadd.f32 %v4835, %v4844
        %v4861 = vadd.f32 %v4836, %v4845
        %v4862 = vadd.f32 %v4837, %v4842
        %v4863 = vadd.f32 %v4838, %v4843
        %v4864 = vadd.f32 %v4839, %v4844
        %v4865 = vadd.f32 %v4840, %v4845
        %vm4866 = vcmp.ge.f32.partialorder %v4850, 0.0
        %vm4867 = vcmp.ge.f32.partialorder %v4851, 0.0
        %vm4868 = vcmp.ge.f32.partialorder %v4852, 0.0
        %vm4869 = vcmp.ge.f32.partialorder %v4853, 0.0
        %vm4870 = vcmp.ge.f32.partialorder %v4854, 0.0
        %vm4871 = vcmp.ge.f32.partialorder %v4855, 0.0
        %vm4872 = vcmp.ge.f32.partialorder %v4856, 0.0
        %vm4873 = vcmp.ge.f32.partialorder %v4857, 0.0
        %vm4874 = vcmp.ge.f32.partialorder %v4858, 0.0
        %vm4875 = vcmp.ge.f32.partialorder %v4859, 0.0
        %vm4876 = vcmp.ge.f32.partialorder %v4860, 0.0
        %vm4877 = vcmp.ge.f32.partialorder %v4861, 0.0
        %vm4878 = vcmp.ge.f32.partialorder %v4862, 0.0
        %vm4879 = vcmp.ge.f32.partialorder %v4863, 0.0
        %vm4880 = vcmp.ge.f32.partialorder %v4864, 0.0
        %vm4881 = vcmp.ge.f32.partialorder %v4865, 0.0
        %v4882 = vmul.f32 %v4850, 0.2
        %v4883 = vmul.f32 %v4851, 0.2
        %v4884 = vmul.f32 %v4852, 0.2
        %v4885 = vmul.f32 %v4853, 0.2
        %v4886 = vmul.f32 %v4854, 0.2
        %v4887 = vmul.f32 %v4855, 0.2
        %v4888 = vmul.f32 %v4856, 0.2
        %v4889 = vmul.f32 %v4857, 0.2
        %v4890 = vmul.f32 %v4858, 0.2
        %v4891 = vmul.f32 %v4859, 0.2
        %v4892 = vmul.f32 %v4860, 0.2
        %v4893 = vmul.f32 %v4861, 0.2
        %v4894 = vmul.f32 %v4862, 0.2
        %v4895 = vmul.f32 %v4863, 0.2
        %v4896 = vmul.f32 %v4864, 0.2
        %v4897 = vmul.f32 %v4865, 0.2
        %v4898 = vsel %vm4866, %v4850, %v4882
        %v4899 = vsel %vm4867, %v4851, %v4883
        %v4900 = vsel %vm4868, %v4852, %v4884
        %v4901 = vsel %vm4869, %v4853, %v4885
        %v4902 = vsel %vm4870, %v4854, %v4886
        %v4903 = vsel %vm4871, %v4855, %v4887
        %v4904 = vsel %vm4872, %v4856, %v4888
        %v4905 = vsel %vm4873, %v4857, %v4889
        %v4906 = vsel %vm4874, %v4858, %v4890
        %v4907 = vsel %vm4875, %v4859, %v4891
        %v4908 = vsel %vm4876, %v4860, %v4892
        %v4909 = vsel %vm4877, %v4861, %v4893
        %v4910 = vsel %vm4878, %v4862, %v4894
        %v4911 = vsel %vm4879, %v4863, %v4895
        %v4912 = vsel %vm4880, %v4864, %v4896
        %v4913 = vsel %vm4881, %v4865, %v4897
        %v4914 = vpack.c.bf16 %v4902, %v4898
        %v4915 = vpack.c.bf16 %v4903, %v4899
        %v4916 = vpack.c.bf16 %v4904, %v4900
        %v4917 = vpack.c.bf16 %v4905, %v4901
        %v4918 = vpack.c.bf16 %v4910, %v4906
        %v4919 = vpack.c.bf16 %v4911, %v4907
        %v4920 = vpack.c.bf16 %v4912, %v4908
        %v4921 = vpack.c.bf16 %v4913, %v4909
        %v4922 = vld [vmem:[#allocation7] sm:$0xf]
        %v4923 = vld [vmem:[#allocation7 + $0x4] sm:$0xf]
        %v4924 = vld [vmem:[#allocation7 + $0x8] sm:$0xf]
        %v4925 = vld [vmem:[#allocation7 + $0xc] sm:$0xf]
        %v4926 = vld [vmem:[#allocation7 + $0x10] sm:$0xf]
        %v4927 = vld [vmem:[#allocation7 + $0x14] sm:$0xf]
        %v4928 = vld [vmem:[#allocation7 + $0x18] sm:$0xf]
        %v4929 = vld [vmem:[#allocation7 + $0x1c] sm:$0xf]
        %v4930 = vld [vmem:[#allocation7 + $0x20] sm:$0xf]
        %v4931 = vld [vmem:[#allocation7 + $0x24] sm:$0xf]
        %v4932 = vld [vmem:[#allocation7 + $0x28] sm:$0xf]
        %v4933 = vld [vmem:[#allocation7 + $0x2c] sm:$0xf]
        %v4934 = vld [vmem:[#allocation7 + $0x30] sm:$0xf]
        %v4935 = vld [vmem:[#allocation7 + $0x34] sm:$0xf]
        %v4936 = vld [vmem:[#allocation7 + $0x38] sm:$0xf]
        %v4937 = vld [vmem:[#allocation7 + $0x3c] sm:$0xf]
        %v4938 = vld [vmem:[#allocation7 + $0x40] sm:$0xf]
        %v4939 = vld [vmem:[#allocation7 + $0x44] sm:$0xf]
        %v4940 = vld [vmem:[#allocation7 + $0x48] sm:$0xf]
        %v4941 = vld [vmem:[#allocation7 + $0x4c] sm:$0xf]
        %v4942 = vld [vmem:[#allocation7 + $0x50] sm:$0xf]
        %v4943 = vld [vmem:[#allocation7 + $0x54] sm:$0xf]
        %v4944 = vld [vmem:[#allocation7 + $0x58] sm:$0xf]
        %v4945 = vld [vmem:[#allocation7 + $0x5c] sm:$0xf]
        %v4946 = vld [vmem:[#allocation7 + $0x60] sm:$0xf]
        %v4947 = vld [vmem:[#allocation7 + $0x64] sm:$0xf]
        %v4948 = vld [vmem:[#allocation7 + $0x68] sm:$0xf]
        %v4949 = vld [vmem:[#allocation7 + $0x6c] sm:$0xf]
        %v4950 = vld [vmem:[#allocation7 + $0x70] sm:$0xf]
        %v4951 = vld [vmem:[#allocation7 + $0x74] sm:$0xf]
        %v4952 = vld [vmem:[#allocation7 + $0x78] sm:$0xf]
        %v4953 = vld [vmem:[#allocation7 + $0x7c] sm:$0xf]
        %v4954 = vld [vmem:[#allocation7 + $0x80] sm:$0xf]
        %v4955 = vld [vmem:[#allocation7 + $0x84] sm:$0xf]
        %v4956 = vld [vmem:[#allocation7 + $0x88] sm:$0xf]
        %v4957 = vld [vmem:[#allocation7 + $0x8c] sm:$0xf]
        %v4958 = vld [vmem:[#allocation7 + $0x90] sm:$0xf]
        %v4959 = vld [vmem:[#allocation7 + $0x94] sm:$0xf]
        %v4960 = vld [vmem:[#allocation7 + $0x98] sm:$0xf]
        %v4961 = vld [vmem:[#allocation7 + $0x9c] sm:$0xf]
        %v4962 = vld [vmem:[#allocation7 + $0xa0] sm:$0xf]
        %v4963 = vld [vmem:[#allocation7 + $0xa4] sm:$0xf]
        %v4964 = vld [vmem:[#allocation7 + $0xa8] sm:$0xf]
        %v4965 = vld [vmem:[#allocation7 + $0xac] sm:$0xf]
        %v4966 = vld [vmem:[#allocation7 + $0xb0] sm:$0xf]
        %v4967 = vld [vmem:[#allocation7 + $0xb4] sm:$0xf]
        %v4968 = vld [vmem:[#allocation7 + $0xb8] sm:$0xf]
        %v4969 = vld [vmem:[#allocation7 + $0xbc] sm:$0xf]
        %v4970 = vld [vmem:[#allocation7 + $0xc0] sm:$0xf]
        %v4971 = vld [vmem:[#allocation7 + $0xc4] sm:$0xf]
        %v4972 = vld [vmem:[#allocation7 + $0xc8] sm:$0xf]
        %v4973 = vld [vmem:[#allocation7 + $0xcc] sm:$0xf]
        %v4974 = vld [vmem:[#allocation7 + $0xd0] sm:$0xf]
        %v4975 = vld [vmem:[#allocation7 + $0xd4] sm:$0xf]
        %v4976 = vld [vmem:[#allocation7 + $0xd8] sm:$0xf]
        %v4977 = vld [vmem:[#allocation7 + $0xdc] sm:$0xf]
        %v4978 = vld [vmem:[#allocation7 + $0xe0] sm:$0xf]
        %v4979 = vld [vmem:[#allocation7 + $0xe4] sm:$0xf]
        %v4980 = vld [vmem:[#allocation7 + $0xe8] sm:$0xf]
        %v4981 = vld [vmem:[#allocation7 + $0xec] sm:$0xf]
        %v4982 = vld [vmem:[#allocation7 + $0xf0] sm:$0xf]
        %v4983 = vld [vmem:[#allocation7 + $0xf4] sm:$0xf]
        %v4984 = vld [vmem:[#allocation7 + $0xf8] sm:$0xf]
        %v4985 = vld [vmem:[#allocation7 + $0xfc] sm:$0xf]
        %v5050 = vunpack.c.l.b16 %v4922
        %v5051 = vunpack.c.l.b16 %v4923
        %v5052 = vunpack.c.l.b16 %v4924
        %v5053 = vunpack.c.l.b16 %v4925
        %v5054 = vunpack.c.l.b16 %v4926
        %v5055 = vunpack.c.l.b16 %v4927
        %v5056 = vunpack.c.l.b16 %v4928
        %v5057 = vunpack.c.l.b16 %v4929
        %v5058 = vunpack.c.l.b16 %v4930
        %v5059 = vunpack.c.l.b16 %v4931
        %v5060 = vunpack.c.l.b16 %v4932
        %v5061 = vunpack.c.l.b16 %v4933
        %v5062 = vunpack.c.l.b16 %v4934
        %v5063 = vunpack.c.l.b16 %v4935
        %v5064 = vunpack.c.l.b16 %v4936
        %v5065 = vunpack.c.l.b16 %v4937
        %v5066 = vunpack.c.l.b16 %v4938
        %v5067 = vunpack.c.l.b16 %v4939
        %v5068 = vunpack.c.l.b16 %v4940
        %v5069 = vunpack.c.l.b16 %v4941
        %v5070 = vunpack.c.l.b16 %v4942
        %v5071 = vunpack.c.l.b16 %v4943
        %v5072 = vunpack.c.l.b16 %v4944
        %v5073 = vunpack.c.l.b16 %v4945
        %v5074 = vunpack.c.l.b16 %v4946
        %v5075 = vunpack.c.l.b16 %v4947
        %v5076 = vunpack.c.l.b16 %v4948
        %v5077 = vunpack.c.l.b16 %v4949
        %v5078 = vunpack.c.l.b16 %v4950
        %v5079 = vunpack.c.l.b16 %v4951
        %v5080 = vunpack.c.l.b16 %v4952
        %v5081 = vunpack.c.l.b16 %v4953
        %v5082 = vunpack.c.l.b16 %v4954
        %v5083 = vunpack.c.l.b16 %v4955
        %v5084 = vunpack.c.l.b16 %v4956
        %v5085 = vunpack.c.l.b16 %v4957
        %v5086 = vunpack.c.l.b16 %v4958
        %v5087 = vunpack.c.l.b16 %v4959
        %v5088 = vunpack.c.l.b16 %v4960
        %v5089 = vunpack.c.l.b16 %v4961
        %v5090 = vunpack.c.l.b16 %v4962
        %v5091 = vunpack.c.l.b16 %v4963
        %v5092 = vunpack.c.l.b16 %v4964
        %v5093 = vunpack.c.l.b16 %v4965
        %v5094 = vunpack.c.l.b16 %v4966
        %v5095 = vunpack.c.l.b16 %v4967
        %v5096 = vunpack.c.l.b16 %v4968
        %v5097 = vunpack.c.l.b16 %v4969
        %v5098 = vunpack.c.l.b16 %v4970
        %v5099 = vunpack.c.l.b16 %v4971
        %v5100 = vunpack.c.l.b16 %v4972
        %v5101 = vunpack.c.l.b16 %v4973
        %v5102 = vunpack.c.l.b16 %v4974
        %v5103 = vunpack.c.l.b16 %v4975
        %v5104 = vunpack.c.l.b16 %v4976
        %v5105 = vunpack.c.l.b16 %v4977
        %v5106 = vunpack.c.l.b16 %v4978
        %v5107 = vunpack.c.l.b16 %v4979
        %v5108 = vunpack.c.l.b16 %v4980
        %v5109 = vunpack.c.l.b16 %v4981
        %v5110 = vunpack.c.l.b16 %v4982
        %v5111 = vunpack.c.l.b16 %v4983
        %v5112 = vunpack.c.l.b16 %v4984
        %v5113 = vunpack.c.l.b16 %v4985
        %v5114 = vpack.c.b16 %v5051, %v5050
        %v5115 = vpack.c.b16 %v5053, %v5052
        %v5116 = vpack.c.b16 %v5055, %v5054
        %v5117 = vpack.c.b16 %v5057, %v5056
        %v5118 = vpack.c.b16 %v5059, %v5058
        %v5119 = vpack.c.b16 %v5061, %v5060
        %v5120 = vpack.c.b16 %v5063, %v5062
        %v5121 = vpack.c.b16 %v5065, %v5064
        %v5122 = vpack.c.b16 %v5067, %v5066
        %v5123 = vpack.c.b16 %v5069, %v5068
        %v5124 = vpack.c.b16 %v5071, %v5070
        %v5125 = vpack.c.b16 %v5073, %v5072
        %v5126 = vpack.c.b16 %v5075, %v5074
        %v5127 = vpack.c.b16 %v5077, %v5076
        %v5128 = vpack.c.b16 %v5079, %v5078
        %v5129 = vpack.c.b16 %v5081, %v5080
        %v5130 = vpack.c.b16 %v5083, %v5082
        %v5131 = vpack.c.b16 %v5085, %v5084
        %v5132 = vpack.c.b16 %v5087, %v5086
        %v5133 = vpack.c.b16 %v5089, %v5088
        %v5134 = vpack.c.b16 %v5091, %v5090
        %v5135 = vpack.c.b16 %v5093, %v5092
        %v5136 = vpack.c.b16 %v5095, %v5094
        %v5137 = vpack.c.b16 %v5097, %v5096
        %v5138 = vpack.c.b16 %v5099, %v5098
        %v5139 = vpack.c.b16 %v5101, %v5100
        %v5140 = vpack.c.b16 %v5103, %v5102
        %v5141 = vpack.c.b16 %v5105, %v5104
        %v5142 = vpack.c.b16 %v5107, %v5106
        %v5143 = vpack.c.b16 %v5109, %v5108
        %v5144 = vpack.c.b16 %v5111, %v5110
        %v5145 = vpack.c.b16 %v5113, %v5112
        %5178 = vmatpush.bf16.msra.mxu0 %v5121
        %5179 = vmatpush.bf16.msra.mxu0 %v5120
        %5180 = vmatpush.bf16.msra.mxu0 %v5119
        %5181 = vmatpush.bf16.msra.mxu0 %v5118
        %5182 = vmatpush.bf16.msra.mxu0 %v5117
        %5183 = vmatpush.bf16.msra.mxu0 %v5116
        %5184 = vmatpush.bf16.msra.mxu0 %v5115
        %5185 = vmatpush.bf16.msra.mxu0 %v5114
        %5186 = vmatmul.bf16.gmra.mxu0 %v4914
        %v5187 = vpop.f32.mrf.mxu0
        %v5188 = vadd.f32 %v511, %v5187
        %v5189 = vpop.f32.mrf.mxu0
        %v5190 = vadd.f32 %v511, %v5189
        %5191 = vmatmul.bf16.gmra.mxu0 %v4918
        %v5192 = vpop.f32.mrf.mxu0
        %v5193 = vadd.f32 %v511, %v5192
        %v5194 = vpop.f32.mrf.mxu0
        %v5195 = vadd.f32 %v511, %v5194
        %5196 = vdwg.mxu0
        %5197 = vmatpush.bf16.msra.mxu0 %v5129
        %5198 = vmatpush.bf16.msra.mxu0 %v5128
        %5199 = vmatpush.bf16.msra.mxu0 %v5127
        %5200 = vmatpush.bf16.msra.mxu0 %v5126
        %5201 = vmatpush.bf16.msra.mxu0 %v5125
        %5202 = vmatpush.bf16.msra.mxu0 %v5124
        %5203 = vmatpush.bf16.msra.mxu0 %v5123
        %5204 = vmatpush.bf16.msra.mxu0 %v5122
        %5205 = vmatmul.bf16.gmra.mxu0 %v4915
        %v5206 = vpop.f32.mrf.mxu0
        %v5207 = vadd.f32 %v5188, %v5206
        %v5208 = vpop.f32.mrf.mxu0
        %v5209 = vadd.f32 %v5190, %v5208
        %5210 = vmatmul.bf16.gmra.mxu0 %v4919
        %v5211 = vpop.f32.mrf.mxu0
        %v5212 = vadd.f32 %v5193, %v5211
        %v5213 = vpop.f32.mrf.mxu0
        %v5214 = vadd.f32 %v5195, %v5213
        %5215 = vdwg.mxu0
        %5216 = vmatpush.bf16.msra.mxu0 %v5137
        %5217 = vmatpush.bf16.msra.mxu0 %v5136
        %5218 = vmatpush.bf16.msra.mxu0 %v5135
        %5219 = vmatpush.bf16.msra.mxu0 %v5134
        %5220 = vmatpush.bf16.msra.mxu0 %v5133
        %5221 = vmatpush.bf16.msra.mxu0 %v5132
        %5222 = vmatpush.bf16.msra.mxu0 %v5131
        %5223 = vmatpush.bf16.msra.mxu0 %v5130
        %5224 = vmatmul.bf16.gmra.mxu0 %v4916
        %v5225 = vpop.f32.mrf.mxu0
        %v5226 = vadd.f32 %v5207, %v5225
        %v5227 = vpop.f32.mrf.mxu0
        %v5228 = vadd.f32 %v5209, %v5227
        %5229 = vmatmul.bf16.gmra.mxu0 %v4920
        %v5230 = vpop.f32.mrf.mxu0
        %v5231 = vadd.f32 %v5212, %v5230
        %v5232 = vpop.f32.mrf.mxu0
        %v5233 = vadd.f32 %v5214, %v5232
        %5234 = vdwg.mxu0
        %5235 = vmatpush.bf16.msra.mxu0 %v5145
        %5236 = vmatpush.bf16.msra.mxu0 %v5144
        %5237 = vmatpush.bf16.msra.mxu0 %v5143
        %5238 = vmatpush.bf16.msra.mxu0 %v5142
        %5239 = vmatpush.bf16.msra.mxu0 %v5141
        %5240 = vmatpush.bf16.msra.mxu0 %v5140
        %5241 = vmatpush.bf16.msra.mxu0 %v5139
        %5242 = vmatpush.bf16.msra.mxu0 %v5138
        %5243 = vmatmul.bf16.gmra.mxu0 %v4917
        %v5244 = vpop.f32.mrf.mxu0
        %v5245 = vadd.f32 %v5226, %v5244
        %v5246 = vpop.f32.mrf.mxu0
        %v5247 = vadd.f32 %v5228, %v5246
        %5248 = vmatmul.bf16.gmra.mxu0 %v4921
        %v5249 = vpop.f32.mrf.mxu0
        %v5250 = vadd.f32 %v5231, %v5249
        %v5251 = vpop.f32.mrf.mxu0
        %v5252 = vadd.f32 %v5233, %v5251
        %5253 = vdwg.mxu0
        %vm5254 = vcmp.ge.f32.partialorder %v5245, 0.0
        %vm5255 = vcmp.ge.f32.partialorder %v5247, 0.0
        %vm5256 = vcmp.ge.f32.partialorder %v5250, 0.0
        %vm5257 = vcmp.ge.f32.partialorder %v5252, 0.0
        %v5258 = vmul.f32 %v5245, 0.2
        %v5259 = vmul.f32 %v5247, 0.2
        %v5260 = vmul.f32 %v5250, 0.2
        %v5261 = vmul.f32 %v5252, 0.2
        %v5262 = vsel %vm5254, %v5245, %v5258
        %v5263 = vsel %vm5255, %v5247, %v5259
        %v5264 = vsel %vm5256, %v5250, %v5260
        %v5265 = vsel %vm5257, %v5252, %v5261
        %v5266 = vpack.c.bf16 %v5263, %v5262
        %v5267 = vpack.c.bf16 %v5265, %v5264
        %v5268 = vld [vmem:[#allocation8] sm:$0xf]
        %v5269 = vld [vmem:[#allocation8 + $0x4] sm:$0xf]
        %v5270 = vld [vmem:[#allocation8 + $0x8] sm:$0xf]
        %v5271 = vld [vmem:[#allocation8 + $0xc] sm:$0xf]
        %v5272 = vld [vmem:[#allocation8 + $0x10] sm:$0xf]
        %v5273 = vld [vmem:[#allocation8 + $0x14] sm:$0xf]
        %v5274 = vld [vmem:[#allocation8 + $0x18] sm:$0xf]
        %v5275 = vld [vmem:[#allocation8 + $0x1c] sm:$0xf]
        %v5276 = vld [vmem:[#allocation8 + $0x20] sm:$0xf]
        %v5277 = vld [vmem:[#allocation8 + $0x24] sm:$0xf]
        %v5278 = vld [vmem:[#allocation8 + $0x28] sm:$0xf]
        %v5279 = vld [vmem:[#allocation8 + $0x2c] sm:$0xf]
        %v5280 = vld [vmem:[#allocation8 + $0x30] sm:$0xf]
        %v5281 = vld [vmem:[#allocation8 + $0x34] sm:$0xf]
        %v5282 = vld [vmem:[#allocation8 + $0x38] sm:$0xf]
        %v5283 = vld [vmem:[#allocation8 + $0x3c] sm:$0xf]
        %v5300 = vunpack.c.l.b16 %v5268
        %v5301 = vunpack.c.l.b16 %v5269
        %v5302 = vunpack.c.l.b16 %v5270
        %v5303 = vunpack.c.l.b16 %v5271
        %v5304 = vunpack.c.l.b16 %v5272
        %v5305 = vunpack.c.l.b16 %v5273
        %v5306 = vunpack.c.l.b16 %v5274
        %v5307 = vunpack.c.l.b16 %v5275
        %v5308 = vunpack.c.l.b16 %v5276
        %v5309 = vunpack.c.l.b16 %v5277
        %v5310 = vunpack.c.l.b16 %v5278
        %v5311 = vunpack.c.l.b16 %v5279
        %v5312 = vunpack.c.l.b16 %v5280
        %v5313 = vunpack.c.l.b16 %v5281
        %v5314 = vunpack.c.l.b16 %v5282
        %v5315 = vunpack.c.l.b16 %v5283
        %v5316 = vpack.c.b16 %v5301, %v5300
        %v5317 = vpack.c.b16 %v5303, %v5302
        %v5318 = vpack.c.b16 %v5305, %v5304
        %v5319 = vpack.c.b16 %v5307, %v5306
        %v5320 = vpack.c.b16 %v5309, %v5308
        %v5321 = vpack.c.b16 %v5311, %v5310
        %v5322 = vpack.c.b16 %v5313, %v5312
        %v5323 = vpack.c.b16 %v5315, %v5314
        %5332 = vmatpush.bf16.msra.mxu0 %v5323
        %5333 = vmatpush.bf16.msra.mxu0 %v5322
        %5334 = vmatpush.bf16.msra.mxu0 %v5321
        %5335 = vmatpush.bf16.msra.mxu0 %v5320
        %5336 = vmatpush.bf16.msra.mxu0 %v5319
        %5337 = vmatpush.bf16.msra.mxu0 %v5318
        %5338 = vmatpush.bf16.msra.mxu0 %v5317
        %5339 = vmatpush.bf16.msra.mxu0 %v5316
        %5340 = vmatmul.bf16.gmra.mxu0 %v5266
        %v5341 = vpop.f32.mrf.mxu0
        %v5342 = vadd.f32 %v512, %v5341
        %v5343 = vpop.f32.mrf.mxu0
        %v5344 = vadd.f32 %v512, %v5343
        %5345 = vmatmul.bf16.gmra.mxu0 %v5267
        %v5346 = vpop.f32.mrf.mxu0
        %v5347 = vadd.f32 %v512, %v5346
        %v5348 = vpop.f32.mrf.mxu0
        %v5349 = vadd.f32 %v512, %v5348
        %5350 = vdwg.mxu0
        %vm5351 = vcmp.ge.f32.partialorder %v5342, 0.0
        %vm5352 = vcmp.ge.f32.partialorder %v5344, 0.0
        %vm5353 = vcmp.ge.f32.partialorder %v5347, 0.0
        %vm5354 = vcmp.ge.f32.partialorder %v5349, 0.0
        %v5355 = vmul.f32 %v5342, 0.2
        %v5356 = vmul.f32 %v5344, 0.2
        %v5357 = vmul.f32 %v5347, 0.2
        %v5358 = vmul.f32 %v5349, 0.2
        %v5359 = vsel %vm5351, %v5342, %v5355
        %v5360 = vsel %vm5352, %v5344, %v5356
        %v5361 = vsel %vm5353, %v5347, %v5357
        %v5362 = vsel %vm5354, %v5349, %v5358
        %v5363 = vpack.c.bf16 %v5360, %v5359
        %v5364 = vpack.c.bf16 %v5362, %v5361
        %v5365 = vld [vmem:[#allocation10] sm:$0xf]
        %v5366 = vld [vmem:[#allocation10 + $0x4] sm:$0xf]
        %v5367 = vld [vmem:[#allocation10 + $0x8] sm:$0xf]
        %v5368 = vld [vmem:[#allocation10 + $0xc] sm:$0xf]
        %v5369 = vld [vmem:[#allocation10 + $0x10] sm:$0xf]
        %v5370 = vld [vmem:[#allocation10 + $0x14] sm:$0xf]
        %v5371 = vld [vmem:[#allocation10 + $0x18] sm:$0xf]
        %v5372 = vld [vmem:[#allocation10 + $0x1c] sm:$0xf]
        %v5373 = vld [vmem:[#allocation10 + $0x20] sm:$0xf]
        %v5374 = vld [vmem:[#allocation10 + $0x24] sm:$0xf]
        %v5375 = vld [vmem:[#allocation10 + $0x28] sm:$0xf]
        %v5376 = vld [vmem:[#allocation10 + $0x2c] sm:$0xf]
        %v5377 = vld [vmem:[#allocation10 + $0x30] sm:$0xf]
        %v5378 = vld [vmem:[#allocation10 + $0x34] sm:$0xf]
        %v5379 = vld [vmem:[#allocation10 + $0x38] sm:$0xf]
        %v5380 = vld [vmem:[#allocation10 + $0x3c] sm:$0xf]
        %v5397 = vunpack.c.l.b16 %v5365
        %v5398 = vunpack.c.l.b16 %v5366
        %v5399 = vunpack.c.l.b16 %v5367
        %v5400 = vunpack.c.l.b16 %v5368
        %v5401 = vunpack.c.l.b16 %v5369
        %v5402 = vunpack.c.l.b16 %v5370
        %v5403 = vunpack.c.l.b16 %v5371
        %v5404 = vunpack.c.l.b16 %v5372
        %v5405 = vunpack.c.l.b16 %v5373
        %v5406 = vunpack.c.l.b16 %v5374
        %v5407 = vunpack.c.l.b16 %v5375
        %v5408 = vunpack.c.l.b16 %v5376
        %v5409 = vunpack.c.l.b16 %v5377
        %v5410 = vunpack.c.l.b16 %v5378
        %v5411 = vunpack.c.l.b16 %v5379
        %v5412 = vunpack.c.l.b16 %v5380
        %v5413 = vpack.c.b16 %v5398, %v5397
        %v5414 = vpack.c.b16 %v5400, %v5399
        %v5415 = vpack.c.b16 %v5402, %v5401
        %v5416 = vpack.c.b16 %v5404, %v5403
        %v5417 = vpack.c.b16 %v5406, %v5405
        %v5418 = vpack.c.b16 %v5408, %v5407
        %v5419 = vpack.c.b16 %v5410, %v5409
        %v5420 = vpack.c.b16 %v5412, %v5411
        %5429 = vmatpush.bf16.msra.mxu0 %v5420
        %5430 = vmatpush.bf16.msra.mxu0 %v5419
        %5431 = vmatpush.bf16.msra.mxu0 %v5418
        %5432 = vmatpush.bf16.msra.mxu0 %v5417
        %5433 = vmatpush.bf16.msra.mxu0 %v5416
        %5434 = vmatpush.bf16.msra.mxu0 %v5415
        %5435 = vmatpush.bf16.msra.mxu0 %v5414
        %5436 = vmatpush.bf16.msra.mxu0 %v5413
        %5437 = vmatmul.bf16.gmra.mxu0 %v5363
        %v5438 = vpop.f32.mrf.mxu0
        %v5439 = vadd.f32 %v513, %v5438
        %v5440 = vpop.f32.mrf.mxu0
        %v5441 = vadd.f32 %v513, %v5440
        %5442 = vmatmul.bf16.gmra.mxu0 %v5364
        %v5443 = vpop.f32.mrf.mxu0
        %v5444 = vadd.f32 %v513, %v5443
        %v5445 = vpop.f32.mrf.mxu0
        %v5446 = vadd.f32 %v513, %v5445
        %5447 = vdwg.mxu0
        %vm5448 = vcmp.ge.f32.partialorder %v5439, 0.0
        %vm5449 = vcmp.ge.f32.partialorder %v5441, 0.0
        %vm5450 = vcmp.ge.f32.partialorder %v5444, 0.0
        %vm5451 = vcmp.ge.f32.partialorder %v5446, 0.0
        %v5452 = vmul.f32 %v5439, 0.2
        %v5453 = vmul.f32 %v5441, 0.2
        %v5454 = vmul.f32 %v5444, 0.2
        %v5455 = vmul.f32 %v5446, 0.2
        %v5456 = vsel %vm5448, %v5439, %v5452
        %v5457 = vsel %vm5449, %v5441, %v5453
        %v5458 = vsel %vm5450, %v5444, %v5454
        %v5459 = vsel %vm5451, %v5446, %v5455
        %vm5460 = vcmp.ge.f32.partialorder %v5456, 0.0
        %vm5461 = vcmp.ge.f32.partialorder %v5457, 0.0
        %vm5462 = vcmp.ge.f32.partialorder %v5458, 0.0
        %vm5463 = vcmp.ge.f32.partialorder %v5459, 0.0
        %v5464 = vmul.f32 %v5456, 0.2
        %v5465 = vmul.f32 %v5457, 0.2
        %v5466 = vmul.f32 %v5458, 0.2
        %v5467 = vmul.f32 %v5459, 0.2
        %v5468 = vsel %vm5460, %v5456, %v5464
        %v5469 = vsel %vm5461, %v5457, %v5465
        %v5470 = vsel %vm5462, %v5458, %v5466
        %v5471 = vsel %vm5463, %v5459, %v5467
        %v5472 = vmul.f32 %v5468, %v514
        %v5473 = vmul.f32 %v5469, %v514
        %v5474 = vmul.f32 %v5470, %v514
        %v5475 = vmul.f32 %v5471, %v514
        %5476 = vadd.xlane.f32.xlu0 %v5472
        %v5477 = vpop.xlane.xlu0 %5476
        %5478 = vadd.xlane.f32.xlu0 %v5473
        %v5479 = vpop.xlane.xlu0 %5478
        %5480 = vadd.xlane.f32.xlu0 %v5474
        %v5481 = vpop.xlane.xlu0 %5480
        %5482 = vadd.xlane.f32.xlu0 %v5475
        %v5483 = vpop.xlane.xlu0 %5482
        %v5484 = vadd.f32 %v5477, %v515
        %v5485 = vadd.f32 %v5479, %v515
        %v5486 = vadd.f32 %v5481, %v515
        %v5487 = vadd.f32 %v5483, %v515
        %v5488 = vlaneseq
        %v5489 = vand.u32 %v5488, 127
        %vm5490 = vcmp.eq.s32.totalorder %v5489, 100
        %5492 = vset.pattern.permute.xlu0 0
        %5493 = vperm.xlu0 %5492, %v5484
        %v5494 = vpop.permute.xlu0 %5493
        %5497 = vset.pattern.permute.xlu0 0
        %5498 = vperm.xlu0 %5497, %v5485
        %v5499 = vpop.permute.xlu0 %5498
        %5502 = vset.pattern.permute.xlu0 0
        %5503 = vperm.xlu0 %5502, %v5486
        %v5504 = vpop.permute.xlu0 %5503
        %5507 = vset.pattern.permute.xlu0 0
        %5508 = vperm.xlu0 %5507, %v5487
        %v5509 = vpop.permute.xlu0 %5508
        %v5511 = vsel %vm5490, %v5494, %v5456
        %v5512 = vsel %vm5490, %v5499, %v5457
        %v5513 = vsel %vm5490, %v5504, %v5458
        %v5514 = vsel %vm5490, %v5509, %v5459
        %5515 = vst [vmem:[%s396] sm:$0xff] %v5511
        %5516 = vst [vmem:[%s396 + $0x8] sm:$0xff] %v5512
        %5517 = vst [vmem:[%s396 + $0x10] sm:$0xff] %v5513
        %5518 = vst [vmem:[%s396 + $0x18] sm:$0xff] %v5514
        %s5519 = sand.u32 %s192, 1
        %s5520 = scalar_lea.sflag [#allocation4], %s5519
        %s5521 = sand.u32 %s192, 1
        %s5522 = smul.addr %s5521, 32
        %s5523 = scalar_lea.vmem [#allocation13], %s5522
        // Predicated region
        $region73: #{tpu_custom_call.1} parent=47 // pred_check
          %p5524 = pneg %p202
        $region74: #{tpu_custom_call.1} parent=47 // pred_check_branch
          %5526 = sbr.rel (%p5524) target = $region76
        $region75: #{tpu_custom_call.1} parent=47 // pred_region
          %s5527 = smul.u32 4, %s27
          %5529 = vsyncadd %s5520, 0
          %s5530 = smul.addr %s5527, 8
          %s5531 = scalar_lea.hbm %s7, %s5530
          %s5532 = sshll.u32 %s5523, 4
          %s5533 = int_to_ptr.vmem [resolvable:$true] %s5532
          %s5534 = sshll.u32 %s5531, 4
          %s5535 = int_to_ptr.hbm [resolvable:$true] %s5534
          %5540 = dma.vmem_to_hbm [thread:$0]  %s5533, 512, %s5535, %s5520, 128, 128, 8
        $region76: #{tpu_custom_call.1} parent=47 // pred_fallthru
          _
      $region48: #{tpu_custom_call.1} parent=5 // pred_fallthru
        _
      %p5541 = scmp.le.s32.totalorder 2, %s22
      // Predicated region
      $region77: #{tpu_custom_call.1} parent=5 // pred_check
        %p5542 = pneg %p5541
      $region78: #{tpu_custom_call.1} parent=5 // pred_check_branch
        %5544 = sbr.rel (%p5542) target = $region80
      $region79: #{tpu_custom_call.1} parent=5 // pred_region
        %s5545 = ssub.s32 %s22, 2
        // Predicated region
        $region81: #{tpu_custom_call.1} parent=79 // pred_check
          %p5546 = pneg %p208
        $region82: #{tpu_custom_call.1} parent=79 // pred_check_branch
          %5548 = sbr.rel (%p5546) target = $region84
        $region83: #{tpu_custom_call.1} parent=79 // pred_region
          %s5549 = sand.u32 %s193, 1
          %s5550 = scalar_lea.sflag [#allocation4], %s5549
          %s5551 = sand.u32 %s193, 1
          %s5552 = smul.addr %s5551, 32
          %s5553 = scalar_lea.vmem [#allocation13], %s5552
          %5555 = dma.done %s5550, 512
        $region84: #{tpu_custom_call.1} parent=79 // pred_fallthru
          _
      $region80: #{tpu_custom_call.1} parent=5 // pred_fallthru
        _
    $region6: #{tpu_custom_call.1} parent=1 // loop_footer
      %s26 = sadd.s32 1, %s22
    $region7: #{tpu_custom_call.1} parent=1 // loop_footer_branch
      %21 = sbr.rel target = $region3
    $region8: #{tpu_custom_call.1} parent=1 // loop_exit
      _
    %5556 = vsyncpa [#allocation3], 1
    %s5557 = scalar_lea.sflag [#allocation3], 1
    %5558 = vsyncpa %s5557, 1
    %5559 = vsyncpa [#allocation6], 1
    %5560 = vsyncpa [#allocation9], 1
    %5561 = vsyncpa [#allocation12], 1
    %5562 = vsyncpa [#allocation4], 1
    %s5563 = scalar_lea.sflag [#allocation4], 1
    %5564 = vsyncpa %s5563, 1

</llo_original>
